<compile_context>
chip_gen: v5e
topology: v5e:2x2
jax: 0.10.0
libtpu: 0.0.40
codegen_flags: <defaults>
</compile_context>

<pallas_src>
import functools
import math

import jax
import jax.numpy as jnp
from jax.experimental import pallas as pl
from jax.experimental.pallas import tpu as pltpu


def _round_up(x, m):
    return ((x + m - 1) // m) * m


def _vq_kernel(*refs, total_tokens, num_k_chunks, k_chunk, distance_in_bf16):
    if distance_in_bf16:
        (z_ref, emb_ref, e2h_ref, emb_bf_ref,
         quant_ref, idx_ref, psum_ref) = refs
    else:
        z_ref, emb_ref, e2h_ref, quant_ref, idx_ref, psum_ref = refs
        emb_bf_ref = None

    # z_ref:     (tm, D)                f32 token tile
    # emb_ref:   (num_chunks, Kc, D)    f32 resident codebook (Buffered(1))
    # e2h_ref:   (num_chunks, 1, Kc)    f32 resident 0.5*||e||^2 (Buffered(1))
    # emb_bf_ref:(num_chunks, Kc, D)    bf16 resident codebook (optional)
    # quant_ref: (tm, D)                f32 quantized tokens
    # idx_ref:   (1, 1, tm)             i32 lane-dense nearest-code indices
    # psum_ref:  (1, 1, 1)              f32 per-tile partial sum of (q - z)^2
    i = pl.program_id(0)
    z = z_ref[...]
    tm, D = z.shape
    zd = z.astype(jnp.bfloat16) if distance_in_bf16 else z
    kc = k_chunk
    k_iota = jax.lax.broadcasted_iota(jnp.int32, (1, kc), 1)    # (1, Kc)

    def scores(c):
        # Native transposed-RHS MXU matmul: contract the D (lane) axis of
        # both operands -- no in-kernel transpose of the resident codebook.
        rhs = emb_bf_ref[c] if distance_in_bf16 else emb_ref[c]  # (Kc, D)
        dot = jax.lax.dot_general(
            zd, rhs, (((1,), (1,)), ((), ())),
            preferred_element_type=jnp.float32)                  # (tm, Kc)
        # 0.5*||e||^2 - z.e ; ||z||^2 is constant per row -> dropped, and the
        # 0.5 scaling (pre-applied in the wrapper) preserves the argmin.
        return e2h_ref[c] - dot

    def gather(onehot, c):
        # Exact codebook-row gather: pin to full f32 precision so quantized
        # outputs are bit-exact codebook rows.
        return jax.lax.dot_general(
            onehot, emb_ref[c], (((1,), (0,)), ((), ())),
            preferred_element_type=jnp.float32,
            precision=jax.lax.Precision.HIGHEST)                 # (tm, D)

    if num_k_chunks == 1:
        d = scores(0)                                            # (tm, K)
        idx = jnp.argmin(d, axis=-1).astype(jnp.int32)           # (tm,)
        onehot = (k_iota == idx[:, None]).astype(jnp.float32)
        quant = gather(onehot, 0)
    else:
        # K-chunked running (min, argmin, quant): caps the (tm, K)
        # intermediates at (tm, Kc) so large codebooks fit v7x's 64 MiB VMEM.
        def body(c, carry):
            best_d, best_idx, best_q = carry
            d = scores(c)
            c_min = jnp.min(d, axis=-1, keepdims=True)           # (tm, 1)
            c_arg = jnp.argmin(d, axis=-1).astype(jnp.int32)     # (tm,)
            onehot = (k_iota == c_arg[:, None]).astype(jnp.float32)
            c_q = gather(onehot, c)
            improve = c_min < best_d        # strict < keeps first-min ties
            best_d = jnp.where(improve, c_min, best_d)
            best_idx = jnp.where(improve[:, 0], c_arg + c * kc, best_idx)
            best_q = jnp.where(improve, c_q, best_q)
            return best_d, best_idx, best_q

        init = (jnp.full((tm, 1), 1e38, jnp.float32),
                jnp.zeros((tm,), jnp.int32),
                jnp.zeros((tm, D), jnp.float32))
        _, idx, quant = jax.lax.fori_loop(0, num_k_chunks, body, init,
                                          unroll=True)

    quant_ref[...] = quant
    idx_ref[...] = idx[None, None, :]        # lane-dense index store

    # Per-tile partial sum of the squared error; mask padded rows of the
    # ragged last tile (total_tokens is None when no padding was needed).
    diff = quant - z
    if total_tokens is not None:
        row = jax.lax.broadcasted_iota(jnp.int32, (tm, D), 0) + i * tm
        diff = jnp.where(row < total_tokens, diff, 0.0)
    psum_ref[...] = jnp.sum(diff * diff, keepdims=True)[None]


def vq_forward(z, emb, *, beta=0.25, codebook_loss_weight=1.0,
               entropy_loss_weight=0.0, tm=256, k_chunk=1024,
               distance_in_bf16=False):
    """Forward of SimpleVectorQuantizer (non-stochastic, no l2-norm,
    entropy_loss_weight=0, same_index_shape=True)."""
    assert z.ndim == 3, "Input shape must be (batch, n_tokens, e_dim)"
    z = z.astype(jnp.float32)
    emb = emb.astype(jnp.float32)
    B, N, D = z.shape
    K, De = emb.shape
    assert De == D

    T = B * N
    # Token tile: multiple of 8 sublanes.  Sweep tm in {256, 512} on v5e/v6e
    # (128 MiB VMEM); keep 256 on v7x (64 MiB) unless K is small.
    tm_eff = min(_round_up(tm, 8), _round_up(T, 8))
    num_tiles = -(-T // tm_eff)
    T_pad = num_tiles * tm_eff

    z_flat = z.reshape(T, D)
    if T_pad != T:
        z_flat = jnp.pad(z_flat, ((0, T_pad - T), (0, 0)))

    # Codebook chunking along K.
    k_chunk = max(128, _round_up(k_chunk, 128))
    if K <= k_chunk:
        Kc = _round_up(K, 8)
        num_chunks = 1
    else:
        Kc = k_chunk
        num_chunks = -(-K // Kc)
    K_pad = num_chunks * Kc

    emb_p = emb if K_pad == K else jnp.pad(emb, ((0, K_pad - K), (0, 0)))
    # Hoisted, pre-halved codebook norms; padded codes get a huge value so
    # they can never win the argmin.
    e2_half = 0.5 * jnp.sum(emb_p * emb_p, axis=-1)
    if K_pad != K:
        e2_half = e2_half.at[K:].set(1e30)
    emb_chunks = emb_p.reshape(num_chunks, Kc, D)
    e2h_chunks = e2_half.reshape(num_chunks, 1, Kc)

    # Constant index_map => single-buffer the resident codebook / norms.
    resident = dict(pipeline_mode=pl.Buffered(1))
    inputs = [z_flat, emb_chunks, e2h_chunks]
    in_specs = [
        pl.BlockSpec((tm_eff, D), lambda i: (i, 0)),
        pl.BlockSpec((num_chunks, Kc, D), lambda i: (0, 0, 0), **resident),
        pl.BlockSpec((num_chunks, 1, Kc), lambda i: (0, 0, 0), **resident),
    ]
    if distance_in_bf16:
        # Pre-cast bf16 codebook for the distance matmul (cast hoisted out of
        # the kernel); the f32 codebook is still used for the exact gather.
        inputs.append(emb_chunks.astype(jnp.bfloat16))
        in_specs.append(
            pl.BlockSpec((num_chunks, Kc, D), lambda i: (0, 0, 0), **resident))

    # VMEM budget: double-buffered token tiles / outputs, single-buffered
    # residents, ~4x (tm, Kc) intermediates; clamp to the chip's capacity.
    f32 = 4
    vmem_est = (2 * tm_eff * D * f32            # z tile (double-buffered)
                + 2 * tm_eff * D * f32          # quant tile
                + 2 * tm_eff * 4                # lane-dense idx tile
                + K_pad * D * f32               # resident codebook (Buffered(1))
                + (K_pad * D * 2 if distance_in_bf16 else 0)
                + K_pad * f32                   # resident 0.5*||e||^2
                + 4 * tm_eff * Kc * f32         # d / compare / one-hot / argmin
                + 2 * tm_eff * D * f32          # gather / diff temporaries
                + (2 << 20))                    # slack
    try:
        vmem_cap = int(pltpu.get_tpu_info().vmem_capacity_bytes)
    except Exception:
        vmem_cap = 64 * 1024 * 1024             # conservative (v7x) floor
    vmem_limit_bytes = int(min(max(vmem_est, 32 << 20), vmem_cap - (8 << 20)))

    kernel = functools.partial(
        _vq_kernel,
        total_tokens=(T if T_pad != T else None),
        num_k_chunks=num_chunks,
        k_chunk=Kc,
        distance_in_bf16=distance_in_bf16)

    quant_flat, idx_out, psum = pl.pallas_call(
        kernel,
        out_shape=(
            jax.ShapeDtypeStruct((T_pad, D), jnp.float32),
            jax.ShapeDtypeStruct((num_tiles, 1, tm_eff), jnp.int32),
            jax.ShapeDtypeStruct((num_tiles, 1, 1), jnp.float32),
        ),
        grid_spec=pltpu.PrefetchScalarGridSpec(
            num_scalar_prefetch=0,
            grid=(num_tiles,),
            in_specs=in_specs,
            out_specs=[
                pl.BlockSpec((tm_eff, D), lambda i: (i, 0)),
                pl.BlockSpec((1, 1, tm_eff), lambda i: (i, 0, 0)),
                pl.BlockSpec((1, 1, 1), lambda i: (i, 0, 0)),
            ],
        ),
        compiler_params=pltpu.CompilerParams(
            dimension_semantics=("parallel",),   # no cross-tile carry
            vmem_limit_bytes=vmem_limit_bytes,
        ),
    )(*inputs)

    quantized = quant_flat[:T].reshape(B, N, D)
    q_indices = idx_out.reshape(T_pad)[:T].reshape(B, N)   # same_index_shape

    mean_sq = jnp.sum(psum) / jnp.float32(T * D)
    loss_commit = mean_sq                        # mean((quant.detach() - z)^2)
    loss_codebook = mean_sq                      # mean((quant - z.detach())^2)
    zero = jnp.zeros((), dtype=jnp.float32)
    loss_entropy = sample_entropy = avg_entropy = zero
    # TODO(synk): entropy-loss branch not implemented; only valid while
    # entropy_loss_weight == 0.0 (module default).
    loss = (beta * loss_commit
            + codebook_loss_weight * loss_codebook
            + entropy_loss_weight * loss_entropy)

    # TODO(synk): forward-only; wrap in jax.custom_vjp to reproduce the
    # straight-through / detach() gradient semantics of the PyTorch module.
    regularized_z = quantized

    return {
        "unregularized_z": z,
        "emb": emb,
        "regularized_z": regularized_z,
        "bottleneck_rep": q_indices,
        "loss_q": loss,
        "loss_commit": loss_commit,
        "loss_codebook": loss_codebook,
        "loss_entropy": loss_entropy,
        "per_sample_entropy": sample_entropy,
        "codebook_entropy": avg_entropy,
    }


def _reference(z, emb, beta=0.25, codebook_loss_weight=1.0):
    B, N, D = z.shape
    zf = z.reshape(-1, D)
    d = (jnp.sum(zf ** 2, axis=1, keepdims=True)
         + jnp.sum(emb ** 2, axis=1)[None, :]
         - 2.0 * zf @ emb.T)
    idx = jnp.argmin(d, axis=1)
    quant = emb[idx].reshape(z.shape)
    mean_sq = jnp.mean((quant - z) ** 2)
    loss = beta * mean_sq + codebook_loss_weight * mean_sq
    return quant, idx.reshape(B, N), loss


if __name__ == "__main__":
    # Small synthetic config: dim=32, codebook_size=128, 2x200 tokens.
    # T = 400 is NOT a multiple of the 256-row tile -> exercises the
    # padded/masked last tile path.
    dim = 32
    codebook_size = 128
    B, N = 2, 200

    key = jax.random.PRNGKey(0)
    k_z, k_emb, k_emb2 = jax.random.split(key, 3)

    # Deterministic synthetic params: kaiming_uniform_ on (codebook_size, dim),
    # fan_in = dim, gain = sqrt(2) -> bound = sqrt(6 / dim).
    bound = math.sqrt(6.0 / dim)
    emb = jax.random.uniform(k_emb, (codebook_size, dim), jnp.float32,
                             minval=-bound, maxval=bound)
    z = jax.random.normal(k_z, (B, N, dim), jnp.float32)
    ref_quant, ref_idx, ref_loss = _reference(z, emb)

    # 1) Default path: f32 distances, single resident codebook chunk.
    fwd = jax.jit(functools.partial(vq_forward, tm=256))
    out = fwd(z, emb)
    jax.block_until_ready(out)
    assert jnp.allclose(out["regularized_z"], ref_quant, atol=1e-5, rtol=1e-5)
    assert jnp.array_equal(out["bottleneck_rep"], ref_idx.astype(jnp.int32))
    assert jnp.allclose(out["loss_q"], ref_loss, atol=1e-5, rtol=1e-4)

    # 2) K-chunked running-argmin path: K=300 with 128-wide chunks (3 chunks,
    #    exercises codebook padding/masking as well).
    emb2 = jax.random.uniform(k_emb2, (300, dim), jnp.float32,
                              minval=-bound, maxval=bound)
    ref_q2, ref_i2, ref_l2 = _reference(z, emb2)
    fwd_chunked = jax.jit(functools.partial(vq_forward, tm=256, k_chunk=128))
    out2 = fwd_chunked(z, emb2)
    jax.block_until_ready(out2)
    assert jnp.allclose(out2["regularized_z"], ref_q2, atol=1e-5, rtol=1e-5)
    assert jnp.array_equal(out2["bottleneck_rep"], ref_i2.astype(jnp.int32))
    assert jnp.allclose(out2["loss_q"], ref_l2, atol=1e-5, rtol=1e-4)

    # 3) bf16 distance path (pre-cast codebook, f32 gather): tolerance-aware
    #    check only, since near-tied codes may legitimately flip the argmin.
    fwd_bf16 = jax.jit(functools.partial(vq_forward, tm=256,
                                         distance_in_bf16=True))
    out3 = fwd_bf16(z, emb)
    jax.block_until_ready(out3)
    assert jnp.allclose(out3["loss_q"], ref_loss, rtol=5e-2)

    print("KERNEL_OK")
</pallas_src>

<mosaic_0001>
module attributes {stable_mosaic.version = 11 : i64} {
  func.func @_vq_kernel(%arg0: i32, %arg1: memref<256x32xf32, #tpu.memory_space<vmem>>, %arg2: memref<1x128x32xf32, #tpu.memory_space<vmem>>, %arg3: memref<1x1x128xf32, #tpu.memory_space<vmem>>, %arg4: memref<256x32xf32, #tpu.memory_space<vmem>>, %arg5: memref<1x1x256xi32, #tpu.memory_space<vmem>>, %arg6: memref<1x1x1xf32, #tpu.memory_space<vmem>>) attributes {dimension_semantics = [#tpu.dimension_semantics<parallel>], iteration_bounds = array<i64: 2>, scalar_prefetch = 0 : i64, scratch_operands = 0 : i64, tpu.core_type = #tpu.core_type<tc>, window_params = [{transform_indices = @transform_0, window_bounds = array<i64: 256, 32>}, {pipeline_mode = #tpu.pipeline_mode<synchronous>, transform_indices = @transform_1, window_bounds = array<i64: 1, 128, 32>}, {pipeline_mode = #tpu.pipeline_mode<synchronous>, transform_indices = @transform_2, window_bounds = array<i64: 1, 1, 128>}, {transform_indices = @transform_3, window_bounds = array<i64: 256, 32>}, {transform_indices = @transform_4, window_bounds = array<i64: 1, 1, 256>}, {transform_indices = @transform_5, window_bounds = array<i64: 1, 1, 1>}]} {
    %c0 = arith.constant 0 : index
    %c0_0 = arith.constant 0 : index
    %0 = vector.load %arg1[%c0, %c0_0] : memref<256x32xf32, #tpu.memory_space<vmem>>, vector<256x32xf32>
    %1 = tpu.iota {dimensions = array<i32: 1>} : vector<1x128xi32>
    %c0_1 = arith.constant 0 : index
    %c0_2 = arith.constant 0 : index
    %c0_3 = arith.constant 0 : index
    %2 = vector.load %arg2[%c0_1, %c0_2, %c0_3] : memref<1x128x32xf32, #tpu.memory_space<vmem>>, vector<1x128x32xf32>
    %3 = vector.shape_cast %2 : vector<1x128x32xf32> to vector<128x32xf32>
    %cst = arith.constant dense<0.000000e+00> : vector<256x128xf32>
    %4 = tpu.matmul %0, %3, %cst {dimension_numbers = #tpu.dot_dimension_numbers<[1], [1], [0], [0], [0, 0, 1, 0], [], []>} : vector<256x32xf32>, vector<128x32xf32>, vector<256x128xf32> -> vector<256x128xf32>
    %c0_4 = arith.constant 0 : index
    %c0_5 = arith.constant 0 : index
    %c0_6 = arith.constant 0 : index
    %5 = vector.load %arg3[%c0_4, %c0_5, %c0_6] : memref<1x1x128xf32, #tpu.memory_space<vmem>>, vector<1x1x128xf32>
    %6 = vector.shape_cast %5 : vector<1x1x128xf32> to vector<1x128xf32>
    %7 = vector.broadcast %6 : vector<1x128xf32> to vector<256x128xf32>
    %8 = arith.subf %7, %4 : vector<256x128xf32>
    %9 = tpu.reduce_index %8 {axis = 1 : i32, kind = #tpu.reduction_kind<arg_min>} : vector<256x128xf32> -> vector<256xi32>
    %10 = vector.shape_cast %9 : vector<256xi32> to vector<256x1xi32>
    %11 = vector.broadcast %1 : vector<1x128xi32> to vector<256x128xi32>
    %12 = vector.broadcast %10 : vector<256x1xi32> to vector<256x128xi32>
    %13 = arith.cmpi eq, %11, %12 : vector<256x128xi32>
    %14 = arith.extui %13 : vector<256x128xi1> to vector<256x128xi32>
    %15 = arith.sitofp %14 : vector<256x128xi32> to vector<256x128xf32>
    %c0_7 = arith.constant 0 : index
    %c0_8 = arith.constant 0 : index
    %c0_9 = arith.constant 0 : index
    %16 = vector.load %arg2[%c0_7, %c0_8, %c0_9] : memref<1x128x32xf32, #tpu.memory_space<vmem>>, vector<1x128x32xf32>
    %17 = vector.shape_cast %16 : vector<1x128x32xf32> to vector<128x32xf32>
    %cst_10 = arith.constant dense<0.000000e+00> : vector<256x32xf32>
    %18 = tpu.matmul %15, %17, %cst_10 {dimension_numbers = #tpu.dot_dimension_numbers<[1], [0], [0], [1], [0, 0, 1, 1], [], []>, precision = #tpu.contract_precision<fp32>} : vector<256x128xf32>, vector<128x32xf32>, vector<256x32xf32> -> vector<256x32xf32>
    %c0_11 = arith.constant 0 : index
    %c0_12 = arith.constant 0 : index
    %19 = vector.load %arg4[%c0_11, %c0_12] : memref<256x32xf32, #tpu.memory_space<vmem>>, vector<256x32xf32>
    tpu.vector_store %arg4[%c0_11, %c0_12], %18 {strides = array<i32>} : memref<256x32xf32, #tpu.memory_space<vmem>>, vector<256x32xf32>,
    %20 = vector.shape_cast %9 : vector<256xi32> to vector<1x1x256xi32>
    %c0_13 = arith.constant 0 : index
    %c0_14 = arith.constant 0 : index
    %c0_15 = arith.constant 0 : index
    %21 = vector.load %arg5[%c0_13, %c0_14, %c0_15] : memref<1x1x256xi32, #tpu.memory_space<vmem>>, vector<1x1x256xi32>
    tpu.vector_store %arg5[%c0_13, %c0_14, %c0_15], %20 {strides = array<i32>} : memref<1x1x256xi32, #tpu.memory_space<vmem>>, vector<1x1x256xi32>,
    %22 = arith.subf %18, %0 : vector<256x32xf32>
    %23 = tpu.iota {dimensions = array<i32: 0>} : vector<256x32xi32>
    %c256_i32 = arith.constant 256 : i32
    %24 = arith.muli %arg0, %c256_i32 : i32
    %25 = vector.broadcast %24 : i32 to vector<256x32xi32>
    %26 = arith.addi %23, %25 : vector<256x32xi32>
    %c400_i32 = arith.constant 400 : i32
    %27 = vector.broadcast %c400_i32 : i32 to vector<256x32xi32>
    %28 = arith.cmpi slt, %26, %27 : vector<256x32xi32>
    %cst_16 = arith.constant 0.000000e+00 : f32
    %29 = vector.broadcast %cst_16 : f32 to vector<256x32xf32>
    %30 = arith.select %28, %22, %29 : vector<256x32xi1>, vector<256x32xf32>
    %31 = arith.mulf %30, %30 : vector<256x32xf32>
    %32 = vector.shape_cast %31 : vector<256x32xf32> to vector<1x256x32xf32>
    %cst_17 = arith.constant dense<0.000000e+00> : vector<1xf32>
    %33 = vector.multi_reduction <add>, %32, %cst_17 [1, 2] : vector<1x256x32xf32> to vector<1xf32>
    %34 = vector.shape_cast %33 : vector<1xf32> to vector<1x1x1xf32>
    %35 = vector.extract %34[0, 0, 0] : f32 from vector<1x1x1xf32>
    %36 = vector.broadcast %35 : f32 to vector<1x1xf32>
    %37 = vector.shape_cast %36 : vector<1x1xf32> to vector<1x1x1xf32>
    %c0_18 = arith.constant 0 : index
    %c0_19 = arith.constant 0 : index
    %c0_20 = arith.constant 0 : index
    %38 = vector.load %arg6[%c0_18, %c0_19, %c0_20] : memref<1x1x1xf32, #tpu.memory_space<vmem>>, vector<1x1x1xf32>
    tpu.vector_store %arg6[%c0_18, %c0_19, %c0_20], %37 {strides = array<i32>} : memref<1x1x1xf32, #tpu.memory_space<vmem>>, vector<1x1x1xf32>,
    return
  }
  func.func @transform_0(%arg0: i32) -> (i32, i32) {
    %c0_i32 = arith.constant 0 : i32
    %c0_i32_0 = arith.constant 0 : i32
    return %arg0, %c0_i32 : i32, i32
  }
  func.func @transform_1(%arg0: i32) -> (i32, i32, i32) {
    %c0_i32 = arith.constant 0 : i32
    %c0_i32_0 = arith.constant 0 : i32
    %c0_i32_1 = arith.constant 0 : i32
    %c0_i32_2 = arith.constant 0 : i32
    return %c0_i32, %c0_i32_0, %c0_i32_1 : i32, i32, i32
  }
  func.func @transform_2(%arg0: i32) -> (i32, i32, i32) {
    %c0_i32 = arith.constant 0 : i32
    %c0_i32_0 = arith.constant 0 : i32
    %c0_i32_1 = arith.constant 0 : i32
    %c0_i32_2 = arith.constant 0 : i32
    return %c0_i32, %c0_i32_0, %c0_i32_1 : i32, i32, i32
  }
  func.func @transform_3(%arg0: i32) -> (i32, i32) {
    %c0_i32 = arith.constant 0 : i32
    %c0_i32_0 = arith.constant 0 : i32
    return %arg0, %c0_i32 : i32, i32
  }
  func.func @transform_4(%arg0: i32) -> (i32, i32, i32) {
    %c0_i32 = arith.constant 0 : i32
    %c0_i32_0 = arith.constant 0 : i32
    %c0_i32_1 = arith.constant 0 : i32
    return %arg0, %c0_i32, %c0_i32_0 : i32, i32, i32
  }
  func.func @transform_5(%arg0: i32) -> (i32, i32, i32) {
    %c0_i32 = arith.constant 0 : i32
    %c0_i32_0 = arith.constant 0 : i32
    %c0_i32_1 = arith.constant 0 : i32
    return %arg0, %c0_i32, %c0_i32_0 : i32, i32, i32
  }
}

</mosaic_0001>

<llo_original>
// kernel: vq_forward.1
$region0: #{vq_forward.1}
  #allocation0 [shape = 'u32[]', space=smem, size = 0x4, offset = 0x4, fixed_abs, tag = 'smem constant byte address 0x4 - core index']
  #allocation1 [shape = 'u32[72,128]{1,0:T(1,128)}', space=vmem, size = 0x9000, scoped, tag = 'internal scratch']
  %s0 = inlined_call_operand.vmem [shape: f32[512,32], index: 0, kind: input, shape index: {}]
  %s1 = inlined_call_operand.vmem [shape: f32[1,128,32], index: 1, kind: input, shape index: {}]
  %s2 = inlined_call_operand.vmem [shape: f32[1,1,128], index: 2, kind: input, shape index: {}]
  %s3 = inlined_call_operand.vmem [shape: f32[512,32], index: 3, kind: output, shape index: {0}]
  %s4 = inlined_call_operand.vmem [shape: s32[2,1,256], index: 4, kind: output, shape index: {1}]
  %s5 = inlined_call_operand.vmem [shape: f32[2,1,1], index: 5, kind: output, shape index: {2}]
  %6 = xla_tuple %s3, %s4, %s5
  %s7 = sld [smem:[#allocation0]]
  $region61: #{vq_forward.1} parent=0
    _
  %s9 = ssub.s32 1, %s7
  %s10 = scalar_select 0, %s9, %s7
  loop: start=0, step=1, limit=4
  $region2: #{vq_forward.1} parent=0 // loop_pre_header
    _
  $region3: #{vq_forward.1} parent=0 // loop_header
    %s12 = sphi 0, %s16
    %p13 = scmp.ge.s32.totalorder %s12, 4
    %s22 = sphi 0, %s24
    %s25 = sphi 0, %s22
    %s26 = sphi 0, %s25
    %s42 = sphi 0, %s26
    %s46 = sphi 0, %s46
    %s48 = sphi 0, %s46
    %s49 = sphi 0, %s48
    %s63 = sphi 0, %s49
    %s67 = sphi 0, %s67
    %s69 = sphi 0, %s67
    %s70 = sphi 0, %s69
    %s84 = sphi 0, %s70
    %s90 = sphi 0, %s92
    %s93 = sphi 0, %s90
    %s94 = sphi 0, %s93
    %s110 = sphi 0, %s94
    %s116 = sphi 0, %s118
    %s119 = sphi 0, %s116
    %s120 = sphi 0, %s119
    %s136 = sphi 0, %s120
    %s142 = sphi 0, %s144
    %s145 = sphi 0, %s142
    %s146 = sphi 0, %s145
    %s162 = sphi 0, %s146
  $region4: #{vq_forward.1} parent=0 // loop_header_branch
    %15 = sbr.rel (%p13) target = $region8
  $region5: #{vq_forward.1} parent=0 // loop_body
    %s17 = ssub.s32 %s12, 1
    %s18 = ssub.s32 %s12, 2
    %s19 = sadd.s32 %s12, 1
    %s20 = ssub.s32 %s12, %s19
    %p21 = scmp.eq.s32.totalorder %s20, 0
    %s23 = sadd.s32 %s22, 1
    %s24 = scalar_select %p21, %s22, %s23
    %p27 = pneg %p21
    %p28 = scmp.eq.s32.totalorder %s12, 1
    %p29 = por %p27, %p28
    %p30 = scmp.ne.s32.totalorder %s22, %s25
    %p31 = scmp.eq.s32.totalorder %s12, 0
    %p32 = por %p30, %p31
    %p33 = scmp.ne.s32.totalorder %s22, %s25
    %p34 = scmp.eq.s32.totalorder %s17, 1
    %p35 = por %p33, %p34
    %p36 = scmp.ne.s32.totalorder %s25, %s26
    %p37 = scmp.eq.s32.totalorder %s17, 0
    %p38 = por %p36, %p37
    %p39 = scmp.ne.s32.totalorder %s25, %s26
    %p40 = scmp.eq.s32.totalorder %s18, 1
    %p41 = por %p39, %p40
    %p43 = scmp.ne.s32.totalorder %s26, %s42
    %p44 = scmp.eq.s32.totalorder %s18, 0
    %p45 = por %p43, %p44
    %s47 = sadd.s32 %s46, 1
    %p50 = scmp.eq.s32.totalorder %s12, 1
    %p51 = scmp.ne.s32.totalorder %s46, %s48
    %p52 = scmp.eq.s32.totalorder %s12, 0
    %p53 = por %p51, %p52
    %p54 = scmp.ne.s32.totalorder %s46, %s48
    %p55 = scmp.eq.s32.totalorder %s17, 1
    %p56 = por %p54, %p55
    %p57 = scmp.ne.s32.totalorder %s48, %s49
    %p58 = scmp.eq.s32.totalorder %s17, 0
    %p59 = por %p57, %p58
    %p60 = scmp.ne.s32.totalorder %s48, %s49
    %p61 = scmp.eq.s32.totalorder %s18, 1
    %p62 = por %p60, %p61
    %p64 = scmp.ne.s32.totalorder %s49, %s63
    %p65 = scmp.eq.s32.totalorder %s18, 0
    %p66 = por %p64, %p65
    %s68 = sadd.s32 %s67, 1
    %p71 = scmp.eq.s32.totalorder %s12, 1
    %p72 = scmp.ne.s32.totalorder %s67, %s69
    %p73 = scmp.eq.s32.totalorder %s12, 0
    %p74 = por %p72, %p73
    %p75 = scmp.ne.s32.totalorder %s67, %s69
    %p76 = scmp.eq.s32.totalorder %s17, 1
    %p77 = por %p75, %p76
    %p78 = scmp.ne.s32.totalorder %s69, %s70
    %p79 = scmp.eq.s32.totalorder %s17, 0
    %p80 = por %p78, %p79
    %p81 = scmp.ne.s32.totalorder %s69, %s70
    %p82 = scmp.eq.s32.totalorder %s18, 1
    %p83 = por %p81, %p82
    %p85 = scmp.ne.s32.totalorder %s70, %s84
    %p86 = scmp.eq.s32.totalorder %s18, 0
    %p87 = por %p85, %p86
    %s88 = ssub.s32 %s12, %s19
    %p89 = scmp.eq.s32.totalorder %s88, 0
    %s91 = sadd.s32 %s90, 1
    %s92 = scalar_select %p89, %s90, %s91
    %p95 = pneg %p89
    %p96 = scmp.eq.s32.totalorder %s12, 1
    %p97 = por %p95, %p96
    %p98 = scmp.ne.s32.totalorder %s90, %s93
    %p99 = scmp.eq.s32.totalorder %s12, 0
    %p100 = por %p98, %p99
    %p101 = scmp.ne.s32.totalorder %s90, %s93
    %p102 = scmp.eq.s32.totalorder %s17, 1
    %p103 = por %p101, %p102
    %p104 = scmp.ne.s32.totalorder %s93, %s94
    %p105 = scmp.eq.s32.totalorder %s17, 0
    %p106 = por %p104, %p105
    %p107 = scmp.ne.s32.totalorder %s93, %s94
    %p108 = scmp.eq.s32.totalorder %s18, 1
    %p109 = por %p107, %p108
    %p111 = scmp.ne.s32.totalorder %s94, %s110
    %p112 = scmp.eq.s32.totalorder %s18, 0
    %p113 = por %p111, %p112
    %s114 = ssub.s32 %s12, %s19
    %p115 = scmp.eq.s32.totalorder %s114, 0
    %s117 = sadd.s32 %s116, 1
    %s118 = scalar_select %p115, %s116, %s117
    %p121 = pneg %p115
    %p122 = scmp.eq.s32.totalorder %s12, 1
    %p123 = por %p121, %p122
    %p124 = scmp.ne.s32.totalorder %s116, %s119
    %p125 = scmp.eq.s32.totalorder %s12, 0
    %p126 = por %p124, %p125
    %p127 = scmp.ne.s32.totalorder %s116, %s119
    %p128 = scmp.eq.s32.totalorder %s17, 1
    %p129 = por %p127, %p128
    %p130 = scmp.ne.s32.totalorder %s119, %s120
    %p131 = scmp.eq.s32.totalorder %s17, 0
    %p132 = por %p130, %p131
    %p133 = scmp.ne.s32.totalorder %s119, %s120
    %p134 = scmp.eq.s32.totalorder %s18, 1
    %p135 = por %p133, %p134
    %p137 = scmp.ne.s32.totalorder %s120, %s136
    %p138 = scmp.eq.s32.totalorder %s18, 0
    %p139 = por %p137, %p138
    %s140 = ssub.s32 %s12, %s19
    %p141 = scmp.eq.s32.totalorder %s140, 0
    %s143 = sadd.s32 %s142, 1
    %s144 = scalar_select %p141, %s142, %s143
    %p147 = pneg %p141
    %p148 = scmp.eq.s32.totalorder %s12, 1
    %p149 = por %p147, %p148
    %p150 = scmp.ne.s32.totalorder %s142, %s145
    %p151 = scmp.eq.s32.totalorder %s12, 0
    %p152 = por %p150, %p151
    %p153 = scmp.ne.s32.totalorder %s142, %s145
    %p154 = scmp.eq.s32.totalorder %s17, 1
    %p155 = por %p153, %p154
    %p156 = scmp.ne.s32.totalorder %s145, %s146
    %p157 = scmp.eq.s32.totalorder %s17, 0
    %p158 = por %p156, %p157
    %p159 = scmp.ne.s32.totalorder %s145, %s146
    %p160 = scmp.eq.s32.totalorder %s18, 1
    %p161 = por %p159, %p160
    %p163 = scmp.ne.s32.totalorder %s146, %s162
    %p164 = scmp.eq.s32.totalorder %s18, 0
    %p165 = por %p163, %p164
    %p166 = scmp.le.s32.totalorder 1, %s12
    %p167 = scmp.lt.s32.totalorder %s12, 3
    %p168 = pnand %p166, %p167
    %p169 = pneg %p168
    // Predicated region
    $region9: #{vq_forward.1} parent=5 // pred_check
      _
    $region10: #{vq_forward.1} parent=5 // pred_check_branch
      %171 = sbr.rel (%p168) target = $region12
    $region11: #{vq_forward.1} parent=5 // pred_region
      %s172 = ssub.s32 %s12, 1
      // Predicated region
      $region13: #{vq_forward.1} parent=11 // pred_check
        %p173 = pneg %p59
      $region14: #{vq_forward.1} parent=11 // pred_check_branch
        %175 = sbr.rel (%p173) target = $region16
      $region15: #{vq_forward.1} parent=11 // pred_region
        _
      $region16: #{vq_forward.1} parent=11 // pred_fallthru
        _
      // Predicated region
      $region17: #{vq_forward.1} parent=11 // pred_check
        %p176 = pneg %p80
      $region18: #{vq_forward.1} parent=11 // pred_check_branch
        %178 = sbr.rel (%p176) target = $region20
      $region19: #{vq_forward.1} parent=11 // pred_region
        _
      $region20: #{vq_forward.1} parent=11 // pred_fallthru
        _
    $region12: #{vq_forward.1} parent=5 // pred_fallthru
      _
    %p179 = scmp.lt.s32.totalorder %s12, 2
    // Predicated region
    $region21: #{vq_forward.1} parent=5 // pred_check
      %p180 = pneg %p179
    $region22: #{vq_forward.1} parent=5 // pred_check_branch
      %182 = sbr.rel (%p180) target = $region24
    $region23: #{vq_forward.1} parent=5 // pred_region
      // Predicated region
      $region25: #{vq_forward.1} parent=23 // pred_check
        %p183 = pneg %p32
      $region26: #{vq_forward.1} parent=23 // pred_check_branch
        %185 = sbr.rel (%p183) target = $region28
      $region27: #{vq_forward.1} parent=23 // pred_region
        %s186 = smul.u32 32, %s12
        %p187 = scmp.lt.s32.totalorder %s186, 63
        %s188 = scalar_select %p187, %s186, 63
        %s189 = smul.addr %s188, 8
        %s190 = scalar_lea.vmem %s0, %s189
        %s191 = smul.u32 32, %s12
      $region28: #{vq_forward.1} parent=23 // pred_fallthru
        _
    $region24: #{vq_forward.1} parent=5 // pred_fallthru
      _
    %p192 = scmp.le.s32.totalorder 1, %s12
    %p193 = scmp.lt.s32.totalorder %s12, 3
    %p194 = pnand %p192, %p193
    %p195 = pneg %p194
    // Predicated region
    $region29: #{vq_forward.1} parent=5 // pred_check
      _
    $region30: #{vq_forward.1} parent=5 // pred_check_branch
      %197 = sbr.rel (%p194) target = $region32
    $region31: #{vq_forward.1} parent=5 // pred_region
      %s198 = ssub.s32 %s12, 1
      %s199 = smul.u32 32, %s17
      %p200 = scmp.lt.s32.totalorder %s199, 63
      %s201 = scalar_select %p200, %s199, 63
      %s202 = smul.addr %s201, 8
      %s203 = scalar_lea.vmem %s0, %s202
      %p204 = pneg %p38
      %p205 = pneg %p35
      %p206 = pneg %p59
      %p207 = pneg %p56
      %p208 = pneg %p80
      %p209 = pneg %p77
      %p210 = pneg %p106
      %p211 = pneg %p103
      %s212 = smul.u32 32, %s17
      %p213 = scmp.lt.s32.totalorder %s212, 63
      %s214 = scalar_select %p213, %s212, 63
      %s215 = smul.addr %s214, 8
      %s216 = scalar_lea.vmem %s3, %s215
      %p217 = pneg %p132
      %p218 = pneg %p129
      %p219 = scmp.lt.s32.totalorder %s17, 1
      %s220 = scalar_select %p219, %s17, 1
      %s221 = smul.addr %s220, 2
      %s222 = scalar_lea.vmem %s4, %s221
      %p223 = pneg %p158
      %p224 = pneg %p155
      %p225 = scmp.lt.s32.totalorder %s17, 1
      %s226 = scalar_select %p225, %s17, 1
      %s227 = scalar_lea.vmem %s5, %s226
      %s228 = smul.u32 32, %s17
      %p229 = scmp.lt.s32.totalorder %s228, 63
      %s230 = scalar_select %p229, %s228, 63
      %s231 = smul.addr %s230, 8
      %s232 = scalar_lea.vmem %s0, %s231
      %s233 = smul.u32 32, %s17
      %s234 = smul.u32 32, %s17
      %p235 = scmp.lt.s32.totalorder %s234, 63
      %s236 = scalar_select %p235, %s234, 63
      %s237 = smul.addr %s236, 8
      %s238 = scalar_lea.vmem %s3, %s237
      %s239 = smul.u32 32, %s17
      %p240 = scmp.lt.s32.totalorder %s17, 1
      %s241 = scalar_select %p240, %s17, 1
      %s242 = smul.addr %s241, 2
      %s243 = scalar_lea.vmem %s4, %s242
      %p244 = scmp.lt.s32.totalorder %s17, 1
      %s245 = scalar_select %p244, %s17, 1
      %s246 = scalar_lea.vmem %s5, %s245
      %v247 = vld [vmem:[%s232] sm:$0xff]
      %v248 = vld [vmem:[%s232 + $0x8] sm:$0xff]
      %v249 = vld [vmem:[%s232 + $0x10] sm:$0xff]
      %v250 = vld [vmem:[%s232 + $0x18] sm:$0xff]
      %v251 = vld [vmem:[%s232 + $0x20] sm:$0xff]
      %v252 = vld [vmem:[%s232 + $0x28] sm:$0xff]
      %v253 = vld [vmem:[%s232 + $0x30] sm:$0xff]
      %v254 = vld [vmem:[%s232 + $0x38] sm:$0xff]
      %v255 = vld [vmem:[%s232 + $0x40] sm:$0xff]
      %v256 = vld [vmem:[%s232 + $0x48] sm:$0xff]
      %v257 = vld [vmem:[%s232 + $0x50] sm:$0xff]
      %v258 = vld [vmem:[%s232 + $0x58] sm:$0xff]
      %v259 = vld [vmem:[%s232 + $0x60] sm:$0xff]
      %v260 = vld [vmem:[%s232 + $0x68] sm:$0xff]
      %v261 = vld [vmem:[%s232 + $0x70] sm:$0xff]
      %v262 = vld [vmem:[%s232 + $0x78] sm:$0xff]
      %v263 = vld [vmem:[%s232 + $0x80] sm:$0xff]
      %v264 = vld [vmem:[%s232 + $0x88] sm:$0xff]
      %v265 = vld [vmem:[%s232 + $0x90] sm:$0xff]
      %v266 = vld [vmem:[%s232 + $0x98] sm:$0xff]
      %v267 = vld [vmem:[%s232 + $0xa0] sm:$0xff]
      %v268 = vld [vmem:[%s232 + $0xa8] sm:$0xff]
      %v269 = vld [vmem:[%s232 + $0xb0] sm:$0xff]
      %v270 = vld [vmem:[%s232 + $0xb8] sm:$0xff]
      %v271 = vld [vmem:[%s232 + $0xc0] sm:$0xff]
      %v272 = vld [vmem:[%s232 + $0xc8] sm:$0xff]
      %v273 = vld [vmem:[%s232 + $0xd0] sm:$0xff]
      %v274 = vld [vmem:[%s232 + $0xd8] sm:$0xff]
      %v275 = vld [vmem:[%s232 + $0xe0] sm:$0xff]
      %v276 = vld [vmem:[%s232 + $0xe8] sm:$0xff]
      %v277 = vld [vmem:[%s232 + $0xf0] sm:$0xff]
      %v278 = vld [vmem:[%s232 + $0xf8] sm:$0xff]
      %v279 = vlaneseq
      %v280 = vand.u32 %v279, 127
      %v281 = vld [vmem:[%s1] sm:$0xff]
      %v282 = vld [vmem:[%s1 + $0x8] sm:$0xff]
      %v283 = vld [vmem:[%s1 + $0x10] sm:$0xff]
      %v284 = vld [vmem:[%s1 + $0x18] sm:$0xff]
      %v285 = vld [vmem:[%s1 + $0x20] sm:$0xff]
      %v286 = vld [vmem:[%s1 + $0x28] sm:$0xff]
      %v287 = vld [vmem:[%s1 + $0x30] sm:$0xff]
      %v288 = vld [vmem:[%s1 + $0x38] sm:$0xff]
      %v289 = vld [vmem:[%s1 + $0x40] sm:$0xff]
      %v290 = vld [vmem:[%s1 + $0x48] sm:$0xff]
      %v291 = vld [vmem:[%s1 + $0x50] sm:$0xff]
      %v292 = vld [vmem:[%s1 + $0x58] sm:$0xff]
      %v293 = vld [vmem:[%s1 + $0x60] sm:$0xff]
      %v294 = vld [vmem:[%s1 + $0x68] sm:$0xff]
      %v295 = vld [vmem:[%s1 + $0x70] sm:$0xff]
      %v296 = vld [vmem:[%s1 + $0x78] sm:$0xff]
      %vm297 = vcmask 261120
      %v299 = vsel %vm297, %v247, 0
      %v302 = vsel %vm297, %v248, 0
      %v305 = vsel %vm297, %v249, 0
      %v308 = vsel %vm297, %v250, 0
      %v311 = vsel %vm297, %v251, 0
      %v314 = vsel %vm297, %v252, 0
      %v317 = vsel %vm297, %v253, 0
      %v320 = vsel %vm297, %v254, 0
      %v323 = vsel %vm297, %v255, 0
      %v326 = vsel %vm297, %v256, 0
      %v329 = vsel %vm297, %v257, 0
      %v332 = vsel %vm297, %v258, 0
      %v335 = vsel %vm297, %v259, 0
      %v338 = vsel %vm297, %v260, 0
      %v341 = vsel %vm297, %v261, 0
      %v344 = vsel %vm297, %v262, 0
      %v347 = vsel %vm297, %v263, 0
      %v350 = vsel %vm297, %v264, 0
      %v353 = vsel %vm297, %v265, 0
      %v356 = vsel %vm297, %v266, 0
      %v359 = vsel %vm297, %v267, 0
      %v362 = vsel %vm297, %v268, 0
      %v365 = vsel %vm297, %v269, 0
      %v368 = vsel %vm297, %v270, 0
      %v371 = vsel %vm297, %v271, 0
      %v374 = vsel %vm297, %v272, 0
      %v377 = vsel %vm297, %v273, 0
      %v380 = vsel %vm297, %v274, 0
      %v383 = vsel %vm297, %v275, 0
      %v386 = vsel %vm297, %v276, 0
      %v389 = vsel %vm297, %v277, 0
      %v392 = vsel %vm297, %v278, 0
      %v395 = vsel %vm297, %v281, 0
      %v398 = vsel %vm297, %v282, 0
      %v401 = vsel %vm297, %v283, 0
      %v404 = vsel %vm297, %v284, 0
      %v407 = vsel %vm297, %v285, 0
      %v410 = vsel %vm297, %v286, 0
      %v413 = vsel %vm297, %v287, 0
      %v416 = vsel %vm297, %v288, 0
      %v419 = vsel %vm297, %v289, 0
      %v422 = vsel %vm297, %v290, 0
      %v425 = vsel %vm297, %v291, 0
      %v428 = vsel %vm297, %v292, 0
      %v431 = vsel %vm297, %v293, 0
      %v434 = vsel %vm297, %v294, 0
      %v437 = vsel %vm297, %v295, 0
      %v440 = vsel %vm297, %v296, 0
      %442 = vmatpush.xpose.msra.mxu0 %v440
      %443 = vmatpush.xpose.msra.mxu0 %v437
      %444 = vmatpush.xpose.msra.mxu0 %v434
      %445 = vmatpush.xpose.msra.mxu0 %v431
      %446 = vmatpush.xpose.msra.mxu0 %v428
      %447 = vmatpush.xpose.msra.mxu0 %v425
      %448 = vmatpush.xpose.msra.mxu0 %v422
      %449 = vmatpush.xpose.msra.mxu0 %v419
      %450 = vmatpush.xpose.msra.mxu0 %v416
      %451 = vmatpush.xpose.msra.mxu0 %v413
      %452 = vmatpush.xpose.msra.mxu0 %v410
      %453 = vmatpush.xpose.msra.mxu0 %v407
      %454 = vmatpush.xpose.msra.mxu0 %v404
      %455 = vmatpush.xpose.msra.mxu0 %v401
      %456 = vmatpush.xpose.msra.mxu0 %v398
      %457 = vmatpush.xpose.msra.mxu0 %v395
      %458 = vmatmul.f32.gmra.mxu0 %v299
      %v459 = vpop.f32.mrf.mxu0
      %v460 = vadd.f32 0.0, %v459
      %461 = vmatmul.f32.gmra.mxu0 %v302
      %v462 = vpop.f32.mrf.mxu0
      %v463 = vadd.f32 0.0, %v462
      %464 = vmatmul.f32.gmra.mxu0 %v305
      %v465 = vpop.f32.mrf.mxu0
      %v466 = vadd.f32 0.0, %v465
      %467 = vmatmul.f32.gmra.mxu0 %v308
      %v468 = vpop.f32.mrf.mxu0
      %v469 = vadd.f32 0.0, %v468
      %470 = vmatmul.f32.gmra.mxu0 %v311
      %v471 = vpop.f32.mrf.mxu0
      %v472 = vadd.f32 0.0, %v471
      %473 = vmatmul.f32.gmra.mxu0 %v314
      %v474 = vpop.f32.mrf.mxu0
      %v475 = vadd.f32 0.0, %v474
      %476 = vmatmul.f32.gmra.mxu0 %v317
      %v477 = vpop.f32.mrf.mxu0
      %v478 = vadd.f32 0.0, %v477
      %479 = vmatmul.f32.gmra.mxu0 %v320
      %v480 = vpop.f32.mrf.mxu0
      %v481 = vadd.f32 0.0, %v480
      %482 = vmatmul.f32.gmra.mxu0 %v323
      %v483 = vpop.f32.mrf.mxu0
      %v484 = vadd.f32 0.0, %v483
      %485 = vmatmul.f32.gmra.mxu0 %v326
      %v486 = vpop.f32.mrf.mxu0
      %v487 = vadd.f32 0.0, %v486
      %488 = vmatmul.f32.gmra.mxu0 %v329
      %v489 = vpop.f32.mrf.mxu0
      %v490 = vadd.f32 0.0, %v489
      %491 = vmatmul.f32.gmra.mxu0 %v332
      %v492 = vpop.f32.mrf.mxu0
      %v493 = vadd.f32 0.0, %v492
      %494 = vmatmul.f32.gmra.mxu0 %v335
      %v495 = vpop.f32.mrf.mxu0
      %v496 = vadd.f32 0.0, %v495
      %497 = vmatmul.f32.gmra.mxu0 %v338
      %v498 = vpop.f32.mrf.mxu0
      %v499 = vadd.f32 0.0, %v498
      %500 = vmatmul.f32.gmra.mxu0 %v341
      %v501 = vpop.f32.mrf.mxu0
      %v502 = vadd.f32 0.0, %v501
      %503 = vmatmul.f32.gmra.mxu0 %v344
      %v504 = vpop.f32.mrf.mxu0
      %v505 = vadd.f32 0.0, %v504
      %506 = vmatmul.f32.gmra.mxu0 %v347
      %v507 = vpop.f32.mrf.mxu0
      %v508 = vadd.f32 0.0, %v507
      %509 = vmatmul.f32.gmra.mxu0 %v350
      %v510 = vpop.f32.mrf.mxu0
      %v511 = vadd.f32 0.0, %v510
      %512 = vmatmul.f32.gmra.mxu0 %v353
      %v513 = vpop.f32.mrf.mxu0
      %v514 = vadd.f32 0.0, %v513
      %515 = vmatmul.f32.gmra.mxu0 %v356
      %v516 = vpop.f32.mrf.mxu0
      %v517 = vadd.f32 0.0, %v516
      %518 = vmatmul.f32.gmra.mxu0 %v359
      %v519 = vpop.f32.mrf.mxu0
      %v520 = vadd.f32 0.0, %v519
      %521 = vmatmul.f32.gmra.mxu0 %v362
      %v522 = vpop.f32.mrf.mxu0
      %v523 = vadd.f32 0.0, %v522
      %524 = vmatmul.f32.gmra.mxu0 %v365
      %v525 = vpop.f32.mrf.mxu0
      %v526 = vadd.f32 0.0, %v525
      %527 = vmatmul.f32.gmra.mxu0 %v368
      %v528 = vpop.f32.mrf.mxu0
      %v529 = vadd.f32 0.0, %v528
      %530 = vmatmul.f32.gmra.mxu0 %v371
      %v531 = vpop.f32.mrf.mxu0
      %v532 = vadd.f32 0.0, %v531
      %533 = vmatmul.f32.gmra.mxu0 %v374
      %v534 = vpop.f32.mrf.mxu0
      %v535 = vadd.f32 0.0, %v534
      %536 = vmatmul.f32.gmra.mxu0 %v377
      %v537 = vpop.f32.mrf.mxu0
      %v538 = vadd.f32 0.0, %v537
      %539 = vmatmul.f32.gmra.mxu0 %v380
      %v540 = vpop.f32.mrf.mxu0
      %v541 = vadd.f32 0.0, %v540
      %542 = vmatmul.f32.gmra.mxu0 %v383
      %v543 = vpop.f32.mrf.mxu0
      %v544 = vadd.f32 0.0, %v543
      %545 = vmatmul.f32.gmra.mxu0 %v386
      %v546 = vpop.f32.mrf.mxu0
      %v547 = vadd.f32 0.0, %v546
      %548 = vmatmul.f32.gmra.mxu0 %v389
      %v549 = vpop.f32.mrf.mxu0
      %v550 = vadd.f32 0.0, %v549
      %551 = vmatmul.f32.gmra.mxu0 %v392
      %v552 = vpop.f32.mrf.mxu0
      %v553 = vadd.f32 0.0, %v552
      %554 = vdwg.mxu0
      %v555 = vld [vmem:[%s2] sm:$0x1]
      %v557 = vperm.slane %v555, 0
      %v559 = vsub.f32 %v557, %v460
      %v560 = vsub.f32 %v557, %v463
      %v561 = vsub.f32 %v557, %v466
      %v562 = vsub.f32 %v557, %v469
      %v563 = vsub.f32 %v557, %v472
      %v564 = vsub.f32 %v557, %v475
      %v565 = vsub.f32 %v557, %v478
      %v566 = vsub.f32 %v557, %v481
      %v567 = vsub.f32 %v557, %v484
      %v568 = vsub.f32 %v557, %v487
      %v569 = vsub.f32 %v557, %v490
      %v570 = vsub.f32 %v557, %v493
      %v571 = vsub.f32 %v557, %v496
      %v572 = vsub.f32 %v557, %v499
      %v573 = vsub.f32 %v557, %v502
      %v574 = vsub.f32 %v557, %v505
      %v575 = vsub.f32 %v557, %v508
      %v576 = vsub.f32 %v557, %v511
      %v577 = vsub.f32 %v557, %v514
      %v578 = vsub.f32 %v557, %v517
      %v579 = vsub.f32 %v557, %v520
      %v580 = vsub.f32 %v557, %v523
      %v581 = vsub.f32 %v557, %v526
      %v582 = vsub.f32 %v557, %v529
      %v583 = vsub.f32 %v557, %v532
      %v584 = vsub.f32 %v557, %v535
      %v585 = vsub.f32 %v557, %v538
      %v586 = vsub.f32 %v557, %v541
      %v587 = vsub.f32 %v557, %v544
      %v588 = vsub.f32 %v557, %v547
      %v589 = vsub.f32 %v557, %v550
      %v590 = vsub.f32 %v557, %v553
      %591 = vmin.index.xlane.f32.xlu0 %v559
      %v592 = vpop.xlane.xlu0 %591
      %593 = vmin.index.xlane.f32.xlu0 %v560
      %v594 = vpop.xlane.xlu0 %593
      %595 = vmin.index.xlane.f32.xlu0 %v561
      %v596 = vpop.xlane.xlu0 %595
      %597 = vmin.index.xlane.f32.xlu0 %v562
      %v598 = vpop.xlane.xlu0 %597
      %599 = vmin.index.xlane.f32.xlu0 %v563
      %v600 = vpop.xlane.xlu0 %599
      %601 = vmin.index.xlane.f32.xlu0 %v564
      %v602 = vpop.xlane.xlu0 %601
      %603 = vmin.index.xlane.f32.xlu0 %v565
      %v604 = vpop.xlane.xlu0 %603
      %605 = vmin.index.xlane.f32.xlu0 %v566
      %v606 = vpop.xlane.xlu0 %605
      %607 = vmin.index.xlane.f32.xlu0 %v567
      %v608 = vpop.xlane.xlu0 %607
      %609 = vmin.index.xlane.f32.xlu0 %v568
      %v610 = vpop.xlane.xlu0 %609
      %611 = vmin.index.xlane.f32.xlu0 %v569
      %v612 = vpop.xlane.xlu0 %611
      %613 = vmin.index.xlane.f32.xlu0 %v570
      %v614 = vpop.xlane.xlu0 %613
      %615 = vmin.index.xlane.f32.xlu0 %v571
      %v616 = vpop.xlane.xlu0 %615
      %617 = vmin.index.xlane.f32.xlu0 %v572
      %v618 = vpop.xlane.xlu0 %617
      %619 = vmin.index.xlane.f32.xlu0 %v573
      %v620 = vpop.xlane.xlu0 %619
      %621 = vmin.index.xlane.f32.xlu0 %v574
      %v622 = vpop.xlane.xlu0 %621
      %623 = vmin.index.xlane.f32.xlu0 %v575
      %v624 = vpop.xlane.xlu0 %623
      %625 = vmin.index.xlane.f32.xlu0 %v576
      %v626 = vpop.xlane.xlu0 %625
      %627 = vmin.index.xlane.f32.xlu0 %v577
      %v628 = vpop.xlane.xlu0 %627
      %629 = vmin.index.xlane.f32.xlu0 %v578
      %v630 = vpop.xlane.xlu0 %629
      %631 = vmin.index.xlane.f32.xlu0 %v579
      %v632 = vpop.xlane.xlu0 %631
      %633 = vmin.index.xlane.f32.xlu0 %v580
      %v634 = vpop.xlane.xlu0 %633
      %635 = vmin.index.xlane.f32.xlu0 %v581
      %v636 = vpop.xlane.xlu0 %635
      %637 = vmin.index.xlane.f32.xlu0 %v582
      %v638 = vpop.xlane.xlu0 %637
      %639 = vmin.index.xlane.f32.xlu0 %v583
      %v640 = vpop.xlane.xlu0 %639
      %641 = vmin.index.xlane.f32.xlu0 %v584
      %v642 = vpop.xlane.xlu0 %641
      %643 = vmin.index.xlane.f32.xlu0 %v585
      %v644 = vpop.xlane.xlu0 %643
      %645 = vmin.index.xlane.f32.xlu0 %v586
      %v646 = vpop.xlane.xlu0 %645
      %647 = vmin.index.xlane.f32.xlu0 %v587
      %v648 = vpop.xlane.xlu0 %647
      %649 = vmin.index.xlane.f32.xlu0 %v588
      %v650 = vpop.xlane.xlu0 %649
      %651 = vmin.index.xlane.f32.xlu0 %v589
      %v652 = vpop.xlane.xlu0 %651
      %653 = vmin.index.xlane.f32.xlu0 %v590
      %v654 = vpop.xlane.xlu0 %653
      %vm655 = vcmp.eq.s32.totalorder %v280, %v592
      %vm656 = vcmp.eq.s32.totalorder %v280, %v594
      %vm657 = vcmp.eq.s32.totalorder %v280, %v596
      %vm658 = vcmp.eq.s32.totalorder %v280, %v598
      %vm659 = vcmp.eq.s32.totalorder %v280, %v600
      %vm660 = vcmp.eq.s32.totalorder %v280, %v602
      %vm661 = vcmp.eq.s32.totalorder %v280, %v604
      %vm662 = vcmp.eq.s32.totalorder %v280, %v606
      %vm663 = vcmp.eq.s32.totalorder %v280, %v608
      %vm664 = vcmp.eq.s32.totalorder %v280, %v610
      %vm665 = vcmp.eq.s32.totalorder %v280, %v612
      %vm666 = vcmp.eq.s32.totalorder %v280, %v614
      %vm667 = vcmp.eq.s32.totalorder %v280, %v616
      %vm668 = vcmp.eq.s32.totalorder %v280, %v618
      %vm669 = vcmp.eq.s32.totalorder %v280, %v620
      %vm670 = vcmp.eq.s32.totalorder %v280, %v622
      %vm671 = vcmp.eq.s32.totalorder %v280, %v624
      %vm672 = vcmp.eq.s32.totalorder %v280, %v626
      %vm673 = vcmp.eq.s32.totalorder %v280, %v628
      %vm674 = vcmp.eq.s32.totalorder %v280, %v630
      %vm675 = vcmp.eq.s32.totalorder %v280, %v632
      %vm676 = vcmp.eq.s32.totalorder %v280, %v634
      %vm677 = vcmp.eq.s32.totalorder %v280, %v636
      %vm678 = vcmp.eq.s32.totalorder %v280, %v638
      %vm679 = vcmp.eq.s32.totalorder %v280, %v640
      %vm680 = vcmp.eq.s32.totalorder %v280, %v642
      %vm681 = vcmp.eq.s32.totalorder %v280, %v644
      %vm682 = vcmp.eq.s32.totalorder %v280, %v646
      %vm683 = vcmp.eq.s32.totalorder %v280, %v648
      %vm684 = vcmp.eq.s32.totalorder %v280, %v650
      %vm685 = vcmp.eq.s32.totalorder %v280, %v652
      %vm686 = vcmp.eq.s32.totalorder %v280, %v654
      %v687 = vsel %vm655, 1, 0
      %v688 = vsel %vm656, 1, 0
      %v689 = vsel %vm657, 1, 0
      %v690 = vsel %vm658, 1, 0
      %v691 = vsel %vm659, 1, 0
      %v692 = vsel %vm660, 1, 0
      %v693 = vsel %vm661, 1, 0
      %v694 = vsel %vm662, 1, 0
      %v695 = vsel %vm663, 1, 0
      %v696 = vsel %vm664, 1, 0
      %v697 = vsel %vm665, 1, 0
      %v698 = vsel %vm666, 1, 0
      %v699 = vsel %vm667, 1, 0
      %v700 = vsel %vm668, 1, 0
      %v701 = vsel %vm669, 1, 0
      %v702 = vsel %vm670, 1, 0
      %v703 = vsel %vm671, 1, 0
      %v704 = vsel %vm672, 1, 0
      %v705 = vsel %vm673, 1, 0
      %v706 = vsel %vm674, 1, 0
      %v707 = vsel %vm675, 1, 0
      %v708 = vsel %vm676, 1, 0
      %v709 = vsel %vm677, 1, 0
      %v710 = vsel %vm678, 1, 0
      %v711 = vsel %vm679, 1, 0
      %v712 = vsel %vm680, 1, 0
      %v713 = vsel %vm681, 1, 0
      %v714 = vsel %vm682, 1, 0
      %v715 = vsel %vm683, 1, 0
      %v716 = vsel %vm684, 1, 0
      %v717 = vsel %vm685, 1, 0
      %v718 = vsel %vm686, 1, 0
      %v719 = vcvt.s32.f32 %v687
      %v720 = vcvt.s32.f32 %v688
      %v721 = vcvt.s32.f32 %v689
      %v722 = vcvt.s32.f32 %v690
      %v723 = vcvt.s32.f32 %v691
      %v724 = vcvt.s32.f32 %v692
      %v725 = vcvt.s32.f32 %v693
      %v726 = vcvt.s32.f32 %v694
      %v727 = vcvt.s32.f32 %v695
      %v728 = vcvt.s32.f32 %v696
      %v729 = vcvt.s32.f32 %v697
      %v730 = vcvt.s32.f32 %v698
      %v731 = vcvt.s32.f32 %v699
      %v732 = vcvt.s32.f32 %v700
      %v733 = vcvt.s32.f32 %v701
      %v734 = vcvt.s32.f32 %v702
      %v735 = vcvt.s32.f32 %v703
      %v736 = vcvt.s32.f32 %v704
      %v737 = vcvt.s32.f32 %v705
      %v738 = vcvt.s32.f32 %v706
      %v739 = vcvt.s32.f32 %v707
      %v740 = vcvt.s32.f32 %v708
      %v741 = vcvt.s32.f32 %v709
      %v742 = vcvt.s32.f32 %v710
      %v743 = vcvt.s32.f32 %v711
      %v744 = vcvt.s32.f32 %v712
      %v745 = vcvt.s32.f32 %v713
      %v746 = vcvt.s32.f32 %v714
      %v747 = vcvt.s32.f32 %v715
      %v748 = vcvt.s32.f32 %v716
      %v749 = vcvt.s32.f32 %v717
      %v750 = vcvt.s32.f32 %v718
      %v751 = vand.u32 %v296, 4294901760
      %752 = vmatpush.msra.mxu0 %v751
      %v753 = vand.u32 %v295, 4294901760
      %754 = vmatpush.msra.mxu0 %v753
      %v755 = vand.u32 %v294, 4294901760
      %756 = vmatpush.msra.mxu0 %v755
      %v757 = vand.u32 %v293, 4294901760
      %758 = vmatpush.msra.mxu0 %v757
      %v759 = vand.u32 %v292, 4294901760
      %760 = vmatpush.msra.mxu0 %v759
      %v761 = vand.u32 %v291, 4294901760
      %762 = vmatpush.msra.mxu0 %v761
      %v763 = vand.u32 %v290, 4294901760
      %764 = vmatpush.msra.mxu0 %v763
      %v765 = vand.u32 %v289, 4294901760
      %766 = vmatpush.msra.mxu0 %v765
      %v767 = vand.u32 %v288, 4294901760
      %768 = vmatpush.msra.mxu0 %v767
      %v769 = vand.u32 %v287, 4294901760
      %770 = vmatpush.msra.mxu0 %v769
      %v771 = vand.u32 %v286, 4294901760
      %772 = vmatpush.msra.mxu0 %v771
      %v773 = vand.u32 %v285, 4294901760
      %774 = vmatpush.msra.mxu0 %v773
      %v775 = vand.u32 %v284, 4294901760
      %776 = vmatpush.msra.mxu0 %v775
      %v777 = vand.u32 %v283, 4294901760
      %778 = vmatpush.msra.mxu0 %v777
      %v779 = vand.u32 %v282, 4294901760
      %780 = vmatpush.msra.mxu0 %v779
      %v781 = vand.u32 %v281, 4294901760
      %782 = vmatpush.msra.mxu0 %v781
      %v783 = vand.u32 %v719, 4294901760
      %v784 = vsub.f32 %v719, %v783
      %v785 = vand.u32 %v784, 4294901760
      %v786 = vsub.f32 %v784, %v785
      %v787 = vand.u32 %v786, 4294901760
      %788 = vmatmul.f32.gmra.mxu0 %v787
      %v789 = vpop.f32.mrf.mxu0
      %v790 = vadd.f32 0.0, %v789
      %v791 = vand.u32 %v720, 4294901760
      %v792 = vsub.f32 %v720, %v791
      %v793 = vand.u32 %v792, 4294901760
      %v794 = vsub.f32 %v792, %v793
      %v795 = vand.u32 %v794, 4294901760
      %796 = vmatmul.f32.gmra.mxu0 %v795
      %v797 = vpop.f32.mrf.mxu0
      %v798 = vadd.f32 0.0, %v797
      %v799 = vand.u32 %v721, 4294901760
      %v800 = vsub.f32 %v721, %v799
      %v801 = vand.u32 %v800, 4294901760
      %v802 = vsub.f32 %v800, %v801
      %v803 = vand.u32 %v802, 4294901760
      %804 = vmatmul.f32.gmra.mxu0 %v803
      %v805 = vpop.f32.mrf.mxu0
      %v806 = vadd.f32 0.0, %v805
      %v807 = vand.u32 %v722, 4294901760
      %v808 = vsub.f32 %v722, %v807
      %v809 = vand.u32 %v808, 4294901760
      %v810 = vsub.f32 %v808, %v809
      %v811 = vand.u32 %v810, 4294901760
      %812 = vmatmul.f32.gmra.mxu0 %v811
      %v813 = vpop.f32.mrf.mxu0
      %v814 = vadd.f32 0.0, %v813
      %v815 = vand.u32 %v723, 4294901760
      %v816 = vsub.f32 %v723, %v815
      %v817 = vand.u32 %v816, 4294901760
      %v818 = vsub.f32 %v816, %v817
      %v819 = vand.u32 %v818, 4294901760
      %820 = vmatmul.f32.gmra.mxu0 %v819
      %v821 = vpop.f32.mrf.mxu0
      %v822 = vadd.f32 0.0, %v821
      %v823 = vand.u32 %v724, 4294901760
      %v824 = vsub.f32 %v724, %v823
      %v825 = vand.u32 %v824, 4294901760
      %v826 = vsub.f32 %v824, %v825
      %v827 = vand.u32 %v826, 4294901760
      %828 = vmatmul.f32.gmra.mxu0 %v827
      %v829 = vpop.f32.mrf.mxu0
      %v830 = vadd.f32 0.0, %v829
      %v831 = vand.u32 %v725, 4294901760
      %v832 = vsub.f32 %v725, %v831
      %v833 = vand.u32 %v832, 4294901760
      %v834 = vsub.f32 %v832, %v833
      %v835 = vand.u32 %v834, 4294901760
      %836 = vmatmul.f32.gmra.mxu0 %v835
      %v837 = vpop.f32.mrf.mxu0
      %v838 = vadd.f32 0.0, %v837
      %v839 = vand.u32 %v726, 4294901760
      %v840 = vsub.f32 %v726, %v839
      %v841 = vand.u32 %v840, 4294901760
      %v842 = vsub.f32 %v840, %v841
      %v843 = vand.u32 %v842, 4294901760
      %844 = vmatmul.f32.gmra.mxu0 %v843
      %v845 = vpop.f32.mrf.mxu0
      %v846 = vadd.f32 0.0, %v845
      %v847 = vand.u32 %v727, 4294901760
      %v848 = vsub.f32 %v727, %v847
      %v849 = vand.u32 %v848, 4294901760
      %v850 = vsub.f32 %v848, %v849
      %v851 = vand.u32 %v850, 4294901760
      %852 = vmatmul.f32.gmra.mxu0 %v851
      %v853 = vpop.f32.mrf.mxu0
      %v854 = vadd.f32 0.0, %v853
      %v855 = vand.u32 %v728, 4294901760
      %v856 = vsub.f32 %v728, %v855
      %v857 = vand.u32 %v856, 4294901760
      %v858 = vsub.f32 %v856, %v857
      %v859 = vand.u32 %v858, 4294901760
      %860 = vmatmul.f32.gmra.mxu0 %v859
      %v861 = vpop.f32.mrf.mxu0
      %v862 = vadd.f32 0.0, %v861
      %v863 = vand.u32 %v729, 4294901760
      %v864 = vsub.f32 %v729, %v863
      %v865 = vand.u32 %v864, 4294901760
      %v866 = vsub.f32 %v864, %v865
      %v867 = vand.u32 %v866, 4294901760
      %868 = vmatmul.f32.gmra.mxu0 %v867
      %v869 = vpop.f32.mrf.mxu0
      %v870 = vadd.f32 0.0, %v869
      %v871 = vand.u32 %v730, 4294901760
      %v872 = vsub.f32 %v730, %v871
      %v873 = vand.u32 %v872, 4294901760
      %v874 = vsub.f32 %v872, %v873
      %v875 = vand.u32 %v874, 4294901760
      %876 = vmatmul.f32.gmra.mxu0 %v875
      %v877 = vpop.f32.mrf.mxu0
      %v878 = vadd.f32 0.0, %v877
      %v879 = vand.u32 %v731, 4294901760
      %v880 = vsub.f32 %v731, %v879
      %v881 = vand.u32 %v880, 4294901760
      %v882 = vsub.f32 %v880, %v881
      %v883 = vand.u32 %v882, 4294901760
      %884 = vmatmul.f32.gmra.mxu0 %v883
      %v885 = vpop.f32.mrf.mxu0
      %v886 = vadd.f32 0.0, %v885
      %v887 = vand.u32 %v732, 4294901760
      %v888 = vsub.f32 %v732, %v887
      %v889 = vand.u32 %v888, 4294901760
      %v890 = vsub.f32 %v888, %v889
      %v891 = vand.u32 %v890, 4294901760
      %892 = vmatmul.f32.gmra.mxu0 %v891
      %v893 = vpop.f32.mrf.mxu0
      %v894 = vadd.f32 0.0, %v893
      %v895 = vand.u32 %v733, 4294901760
      %v896 = vsub.f32 %v733, %v895
      %v897 = vand.u32 %v896, 4294901760
      %v898 = vsub.f32 %v896, %v897
      %v899 = vand.u32 %v898, 4294901760
      %900 = vmatmul.f32.gmra.mxu0 %v899
      %v901 = vpop.f32.mrf.mxu0
      %v902 = vadd.f32 0.0, %v901
      %v903 = vand.u32 %v734, 4294901760
      %v904 = vsub.f32 %v734, %v903
      %v905 = vand.u32 %v904, 4294901760
      %v906 = vsub.f32 %v904, %v905
      %v907 = vand.u32 %v906, 4294901760
      %908 = vmatmul.f32.gmra.mxu0 %v907
      %v909 = vpop.f32.mrf.mxu0
      %v910 = vadd.f32 0.0, %v909
      %v911 = vand.u32 %v735, 4294901760
      %v912 = vsub.f32 %v735, %v911
      %v913 = vand.u32 %v912, 4294901760
      %v914 = vsub.f32 %v912, %v913
      %v915 = vand.u32 %v914, 4294901760
      %916 = vmatmul.f32.gmra.mxu0 %v915
      %v917 = vpop.f32.mrf.mxu0
      %v918 = vadd.f32 0.0, %v917
      %v919 = vand.u32 %v736, 4294901760
      %v920 = vsub.f32 %v736, %v919
      %v921 = vand.u32 %v920, 4294901760
      %v922 = vsub.f32 %v920, %v921
      %v923 = vand.u32 %v922, 4294901760
      %924 = vmatmul.f32.gmra.mxu0 %v923
      %v925 = vpop.f32.mrf.mxu0
      %v926 = vadd.f32 0.0, %v925
      %v927 = vand.u32 %v737, 4294901760
      %v928 = vsub.f32 %v737, %v927
      %v929 = vand.u32 %v928, 4294901760
      %v930 = vsub.f32 %v928, %v929
      %v931 = vand.u32 %v930, 4294901760
      %932 = vmatmul.f32.gmra.mxu0 %v931
      %v933 = vpop.f32.mrf.mxu0
      %v934 = vadd.f32 0.0, %v933
      %v935 = vand.u32 %v738, 4294901760
      %v936 = vsub.f32 %v738, %v935
      %v937 = vand.u32 %v936, 4294901760
      %v938 = vsub.f32 %v936, %v937
      %v939 = vand.u32 %v938, 4294901760
      %940 = vmatmul.f32.gmra.mxu0 %v939
      %v941 = vpop.f32.mrf.mxu0
      %v942 = vadd.f32 0.0, %v941
      %v943 = vand.u32 %v739, 4294901760
      %v944 = vsub.f32 %v739, %v943
      %v945 = vand.u32 %v944, 4294901760
      %v946 = vsub.f32 %v944, %v945
      %v947 = vand.u32 %v946, 4294901760
      %948 = vmatmul.f32.gmra.mxu0 %v947
      %v949 = vpop.f32.mrf.mxu0
      %v950 = vadd.f32 0.0, %v949
      %v951 = vand.u32 %v740, 4294901760
      %v952 = vsub.f32 %v740, %v951
      %v953 = vand.u32 %v952, 4294901760
      %v954 = vsub.f32 %v952, %v953
      %v955 = vand.u32 %v954, 4294901760
      %956 = vmatmul.f32.gmra.mxu0 %v955
      %v957 = vpop.f32.mrf.mxu0
      %v958 = vadd.f32 0.0, %v957
      %v959 = vand.u32 %v741, 4294901760
      %v960 = vsub.f32 %v741, %v959
      %v961 = vand.u32 %v960, 4294901760
      %v962 = vsub.f32 %v960, %v961
      %v963 = vand.u32 %v962, 4294901760
      %964 = vmatmul.f32.gmra.mxu0 %v963
      %v965 = vpop.f32.mrf.mxu0
      %v966 = vadd.f32 0.0, %v965
      %v967 = vand.u32 %v742, 4294901760
      %v968 = vsub.f32 %v742, %v967
      %v969 = vand.u32 %v968, 4294901760
      %v970 = vsub.f32 %v968, %v969
      %v971 = vand.u32 %v970, 4294901760
      %972 = vmatmul.f32.gmra.mxu0 %v971
      %v973 = vpop.f32.mrf.mxu0
      %v974 = vadd.f32 0.0, %v973
      %v975 = vand.u32 %v743, 4294901760
      %v976 = vsub.f32 %v743, %v975
      %v977 = vand.u32 %v976, 4294901760
      %v978 = vsub.f32 %v976, %v977
      %v979 = vand.u32 %v978, 4294901760
      %980 = vmatmul.f32.gmra.mxu0 %v979
      %v981 = vpop.f32.mrf.mxu0
      %v982 = vadd.f32 0.0, %v981
      %v983 = vand.u32 %v744, 4294901760
      %v984 = vsub.f32 %v744, %v983
      %v985 = vand.u32 %v984, 4294901760
      %v986 = vsub.f32 %v984, %v985
      %v987 = vand.u32 %v986, 4294901760
      %988 = vmatmul.f32.gmra.mxu0 %v987
      %v989 = vpop.f32.mrf.mxu0
      %v990 = vadd.f32 0.0, %v989
      %v991 = vand.u32 %v745, 4294901760
      %v992 = vsub.f32 %v745, %v991
      %v993 = vand.u32 %v992, 4294901760
      %v994 = vsub.f32 %v992, %v993
      %v995 = vand.u32 %v994, 4294901760
      %996 = vmatmul.f32.gmra.mxu0 %v995
      %v997 = vpop.f32.mrf.mxu0
      %v998 = vadd.f32 0.0, %v997
      %v999 = vand.u32 %v746, 4294901760
      %v1000 = vsub.f32 %v746, %v999
      %v1001 = vand.u32 %v1000, 4294901760
      %v1002 = vsub.f32 %v1000, %v1001
      %v1003 = vand.u32 %v1002, 4294901760
      %1004 = vmatmul.f32.gmra.mxu0 %v1003
      %v1005 = vpop.f32.mrf.mxu0
      %v1006 = vadd.f32 0.0, %v1005
      %v1007 = vand.u32 %v747, 4294901760
      %v1008 = vsub.f32 %v747, %v1007
      %v1009 = vand.u32 %v1008, 4294901760
      %v1010 = vsub.f32 %v1008, %v1009
      %v1011 = vand.u32 %v1010, 4294901760
      %1012 = vmatmul.f32.gmra.mxu0 %v1011
      %v1013 = vpop.f32.mrf.mxu0
      %v1014 = vadd.f32 0.0, %v1013
      %v1015 = vand.u32 %v748, 4294901760
      %v1016 = vsub.f32 %v748, %v1015
      %v1017 = vand.u32 %v1016, 4294901760
      %v1018 = vsub.f32 %v1016, %v1017
      %v1019 = vand.u32 %v1018, 4294901760
      %1020 = vmatmul.f32.gmra.mxu0 %v1019
      %v1021 = vpop.f32.mrf.mxu0
      %v1022 = vadd.f32 0.0, %v1021
      %v1023 = vand.u32 %v749, 4294901760
      %v1024 = vsub.f32 %v749, %v1023
      %v1025 = vand.u32 %v1024, 4294901760
      %v1026 = vsub.f32 %v1024, %v1025
      %v1027 = vand.u32 %v1026, 4294901760
      %1028 = vmatmul.f32.gmra.mxu0 %v1027
      %v1029 = vpop.f32.mrf.mxu0
      %v1030 = vadd.f32 0.0, %v1029
      %v1031 = vand.u32 %v750, 4294901760
      %v1032 = vsub.f32 %v750, %v1031
      %v1033 = vand.u32 %v1032, 4294901760
      %v1034 = vsub.f32 %v1032, %v1033
      %v1035 = vand.u32 %v1034, 4294901760
      %1036 = vmatmul.f32.gmra.mxu0 %v1035
      %v1037 = vpop.f32.mrf.mxu0
      %v1038 = vadd.f32 0.0, %v1037
      %1039 = vdwg.mxu0
      %v1040 = vand.u32 %v296, 4294901760
      %v1041 = vsub.f32 %v296, %v1040
      %v1042 = vand.u32 %v1041, 4294901760
      %v1043 = vsub.f32 %v1041, %v1042
      %v1044 = vand.u32 %v1043, 4294901760
      %1045 = vmatpush.msra.mxu0 %v1044
      %v1046 = vand.u32 %v295, 4294901760
      %v1047 = vsub.f32 %v295, %v1046
      %v1048 = vand.u32 %v1047, 4294901760
      %v1049 = vsub.f32 %v1047, %v1048
      %v1050 = vand.u32 %v1049, 4294901760
      %1051 = vmatpush.msra.mxu0 %v1050
      %v1052 = vand.u32 %v294, 4294901760
      %v1053 = vsub.f32 %v294, %v1052
      %v1054 = vand.u32 %v1053, 4294901760
      %v1055 = vsub.f32 %v1053, %v1054
      %v1056 = vand.u32 %v1055, 4294901760
      %1057 = vmatpush.msra.mxu0 %v1056
      %v1058 = vand.u32 %v293, 4294901760
      %v1059 = vsub.f32 %v293, %v1058
      %v1060 = vand.u32 %v1059, 4294901760
      %v1061 = vsub.f32 %v1059, %v1060
      %v1062 = vand.u32 %v1061, 4294901760
      %1063 = vmatpush.msra.mxu0 %v1062
      %v1064 = vand.u32 %v292, 4294901760
      %v1065 = vsub.f32 %v292, %v1064
      %v1066 = vand.u32 %v1065, 4294901760
      %v1067 = vsub.f32 %v1065, %v1066
      %v1068 = vand.u32 %v1067, 4294901760
      %1069 = vmatpush.msra.mxu0 %v1068
      %v1070 = vand.u32 %v291, 4294901760
      %v1071 = vsub.f32 %v291, %v1070
      %v1072 = vand.u32 %v1071, 4294901760
      %v1073 = vsub.f32 %v1071, %v1072
      %v1074 = vand.u32 %v1073, 4294901760
      %1075 = vmatpush.msra.mxu0 %v1074
      %v1076 = vand.u32 %v290, 4294901760
      %v1077 = vsub.f32 %v290, %v1076
      %v1078 = vand.u32 %v1077, 4294901760
      %v1079 = vsub.f32 %v1077, %v1078
      %v1080 = vand.u32 %v1079, 4294901760
      %1081 = vmatpush.msra.mxu0 %v1080
      %v1082 = vand.u32 %v289, 4294901760
      %v1083 = vsub.f32 %v289, %v1082
      %v1084 = vand.u32 %v1083, 4294901760
      %v1085 = vsub.f32 %v1083, %v1084
      %v1086 = vand.u32 %v1085, 4294901760
      %1087 = vmatpush.msra.mxu0 %v1086
      %v1088 = vand.u32 %v288, 4294901760
      %v1089 = vsub.f32 %v288, %v1088
      %v1090 = vand.u32 %v1089, 4294901760
      %v1091 = vsub.f32 %v1089, %v1090
      %v1092 = vand.u32 %v1091, 4294901760
      %1093 = vmatpush.msra.mxu0 %v1092
      %v1094 = vand.u32 %v287, 4294901760
      %v1095 = vsub.f32 %v287, %v1094
      %v1096 = vand.u32 %v1095, 4294901760
      %v1097 = vsub.f32 %v1095, %v1096
      %v1098 = vand.u32 %v1097, 4294901760
      %1099 = vmatpush.msra.mxu0 %v1098
      %v1100 = vand.u32 %v286, 4294901760
      %v1101 = vsub.f32 %v286, %v1100
      %v1102 = vand.u32 %v1101, 4294901760
      %v1103 = vsub.f32 %v1101, %v1102
      %v1104 = vand.u32 %v1103, 4294901760
      %1105 = vmatpush.msra.mxu0 %v1104
      %v1106 = vand.u32 %v285, 4294901760
      %v1107 = vsub.f32 %v285, %v1106
      %v1108 = vand.u32 %v1107, 4294901760
      %v1109 = vsub.f32 %v1107, %v1108
      %v1110 = vand.u32 %v1109, 4294901760
      %1111 = vmatpush.msra.mxu0 %v1110
      %v1112 = vand.u32 %v284, 4294901760
      %v1113 = vsub.f32 %v284, %v1112
      %v1114 = vand.u32 %v1113, 4294901760
      %v1115 = vsub.f32 %v1113, %v1114
      %v1116 = vand.u32 %v1115, 4294901760
      %1117 = vmatpush.msra.mxu0 %v1116
      %v1118 = vand.u32 %v283, 4294901760
      %v1119 = vsub.f32 %v283, %v1118
      %v1120 = vand.u32 %v1119, 4294901760
      %v1121 = vsub.f32 %v1119, %v1120
      %v1122 = vand.u32 %v1121, 4294901760
      %1123 = vmatpush.msra.mxu0 %v1122
      %v1124 = vand.u32 %v282, 4294901760
      %v1125 = vsub.f32 %v282, %v1124
      %v1126 = vand.u32 %v1125, 4294901760
      %v1127 = vsub.f32 %v1125, %v1126
      %v1128 = vand.u32 %v1127, 4294901760
      %1129 = vmatpush.msra.mxu0 %v1128
      %v1130 = vand.u32 %v281, 4294901760
      %v1131 = vsub.f32 %v281, %v1130
      %v1132 = vand.u32 %v1131, 4294901760
      %v1133 = vsub.f32 %v1131, %v1132
      %v1134 = vand.u32 %v1133, 4294901760
      %1135 = vmatpush.msra.mxu0 %v1134
      %v1136 = vand.u32 %v719, 4294901760
      %1137 = vmatmul.f32.gmra.mxu0 %v1136
      %v1138 = vpop.f32.mrf.mxu0
      %v1139 = vadd.f32 %v790, %v1138
      %v1140 = vand.u32 %v720, 4294901760
      %1141 = vmatmul.f32.gmra.mxu0 %v1140
      %v1142 = vpop.f32.mrf.mxu0
      %v1143 = vadd.f32 %v798, %v1142
      %v1144 = vand.u32 %v721, 4294901760
      %1145 = vmatmul.f32.gmra.mxu0 %v1144
      %v1146 = vpop.f32.mrf.mxu0
      %v1147 = vadd.f32 %v806, %v1146
      %v1148 = vand.u32 %v722, 4294901760
      %1149 = vmatmul.f32.gmra.mxu0 %v1148
      %v1150 = vpop.f32.mrf.mxu0
      %v1151 = vadd.f32 %v814, %v1150
      %v1152 = vand.u32 %v723, 4294901760
      %1153 = vmatmul.f32.gmra.mxu0 %v1152
      %v1154 = vpop.f32.mrf.mxu0
      %v1155 = vadd.f32 %v822, %v1154
      %v1156 = vand.u32 %v724, 4294901760
      %1157 = vmatmul.f32.gmra.mxu0 %v1156
      %v1158 = vpop.f32.mrf.mxu0
      %v1159 = vadd.f32 %v830, %v1158
      %v1160 = vand.u32 %v725, 4294901760
      %1161 = vmatmul.f32.gmra.mxu0 %v1160
      %v1162 = vpop.f32.mrf.mxu0
      %v1163 = vadd.f32 %v838, %v1162
      %v1164 = vand.u32 %v726, 4294901760
      %1165 = vmatmul.f32.gmra.mxu0 %v1164
      %v1166 = vpop.f32.mrf.mxu0
      %v1167 = vadd.f32 %v846, %v1166
      %v1168 = vand.u32 %v727, 4294901760
      %1169 = vmatmul.f32.gmra.mxu0 %v1168
      %v1170 = vpop.f32.mrf.mxu0
      %v1171 = vadd.f32 %v854, %v1170
      %v1172 = vand.u32 %v728, 4294901760
      %1173 = vmatmul.f32.gmra.mxu0 %v1172
      %v1174 = vpop.f32.mrf.mxu0
      %v1175 = vadd.f32 %v862, %v1174
      %v1176 = vand.u32 %v729, 4294901760
      %1177 = vmatmul.f32.gmra.mxu0 %v1176
      %v1178 = vpop.f32.mrf.mxu0
      %v1179 = vadd.f32 %v870, %v1178
      %v1180 = vand.u32 %v730, 4294901760
      %1181 = vmatmul.f32.gmra.mxu0 %v1180
      %v1182 = vpop.f32.mrf.mxu0
      %v1183 = vadd.f32 %v878, %v1182
      %v1184 = vand.u32 %v731, 4294901760
      %1185 = vmatmul.f32.gmra.mxu0 %v1184
      %v1186 = vpop.f32.mrf.mxu0
      %v1187 = vadd.f32 %v886, %v1186
      %v1188 = vand.u32 %v732, 4294901760
      %1189 = vmatmul.f32.gmra.mxu0 %v1188
      %v1190 = vpop.f32.mrf.mxu0
      %v1191 = vadd.f32 %v894, %v1190
      %v1192 = vand.u32 %v733, 4294901760
      %1193 = vmatmul.f32.gmra.mxu0 %v1192
      %v1194 = vpop.f32.mrf.mxu0
      %v1195 = vadd.f32 %v902, %v1194
      %v1196 = vand.u32 %v734, 4294901760
      %1197 = vmatmul.f32.gmra.mxu0 %v1196
      %v1198 = vpop.f32.mrf.mxu0
      %v1199 = vadd.f32 %v910, %v1198
      %v1200 = vand.u32 %v735, 4294901760
      %1201 = vmatmul.f32.gmra.mxu0 %v1200
      %v1202 = vpop.f32.mrf.mxu0
      %v1203 = vadd.f32 %v918, %v1202
      %v1204 = vand.u32 %v736, 4294901760
      %1205 = vmatmul.f32.gmra.mxu0 %v1204
      %v1206 = vpop.f32.mrf.mxu0
      %v1207 = vadd.f32 %v926, %v1206
      %v1208 = vand.u32 %v737, 4294901760
      %1209 = vmatmul.f32.gmra.mxu0 %v1208
      %v1210 = vpop.f32.mrf.mxu0
      %v1211 = vadd.f32 %v934, %v1210
      %v1212 = vand.u32 %v738, 4294901760
      %1213 = vmatmul.f32.gmra.mxu0 %v1212
      %v1214 = vpop.f32.mrf.mxu0
      %v1215 = vadd.f32 %v942, %v1214
      %v1216 = vand.u32 %v739, 4294901760
      %1217 = vmatmul.f32.gmra.mxu0 %v1216
      %v1218 = vpop.f32.mrf.mxu0
      %v1219 = vadd.f32 %v950, %v1218
      %v1220 = vand.u32 %v740, 4294901760
      %1221 = vmatmul.f32.gmra.mxu0 %v1220
      %v1222 = vpop.f32.mrf.mxu0
      %v1223 = vadd.f32 %v958, %v1222
      %v1224 = vand.u32 %v741, 4294901760
      %1225 = vmatmul.f32.gmra.mxu0 %v1224
      %v1226 = vpop.f32.mrf.mxu0
      %v1227 = vadd.f32 %v966, %v1226
      %v1228 = vand.u32 %v742, 4294901760
      %1229 = vmatmul.f32.gmra.mxu0 %v1228
      %v1230 = vpop.f32.mrf.mxu0
      %v1231 = vadd.f32 %v974, %v1230
      %v1232 = vand.u32 %v743, 4294901760
      %1233 = vmatmul.f32.gmra.mxu0 %v1232
      %v1234 = vpop.f32.mrf.mxu0
      %v1235 = vadd.f32 %v982, %v1234
      %v1236 = vand.u32 %v744, 4294901760
      %1237 = vmatmul.f32.gmra.mxu0 %v1236
      %v1238 = vpop.f32.mrf.mxu0
      %v1239 = vadd.f32 %v990, %v1238
      %v1240 = vand.u32 %v745, 4294901760
      %1241 = vmatmul.f32.gmra.mxu0 %v1240
      %v1242 = vpop.f32.mrf.mxu0
      %v1243 = vadd.f32 %v998, %v1242
      %v1244 = vand.u32 %v746, 4294901760
      %1245 = vmatmul.f32.gmra.mxu0 %v1244
      %v1246 = vpop.f32.mrf.mxu0
      %v1247 = vadd.f32 %v1006, %v1246
      %v1248 = vand.u32 %v747, 4294901760
      %1249 = vmatmul.f32.gmra.mxu0 %v1248
      %v1250 = vpop.f32.mrf.mxu0
      %v1251 = vadd.f32 %v1014, %v1250
      %v1252 = vand.u32 %v748, 4294901760
      %1253 = vmatmul.f32.gmra.mxu0 %v1252
      %v1254 = vpop.f32.mrf.mxu0
      %v1255 = vadd.f32 %v1022, %v1254
      %v1256 = vand.u32 %v749, 4294901760
      %1257 = vmatmul.f32.gmra.mxu0 %v1256
      %v1258 = vpop.f32.mrf.mxu0
      %v1259 = vadd.f32 %v1030, %v1258
      %v1260 = vand.u32 %v750, 4294901760
      %1261 = vmatmul.f32.gmra.mxu0 %v1260
      %v1262 = vpop.f32.mrf.mxu0
      %v1263 = vadd.f32 %v1038, %v1262
      %1264 = vdwg.mxu0
      %v1265 = vand.u32 %v296, 4294901760
      %v1266 = vsub.f32 %v296, %v1265
      %1267 = vmatpush.msra.mxu0 %v1266
      %v1268 = vand.u32 %v295, 4294901760
      %v1269 = vsub.f32 %v295, %v1268
      %1270 = vmatpush.msra.mxu0 %v1269
      %v1271 = vand.u32 %v294, 4294901760
      %v1272 = vsub.f32 %v294, %v1271
      %1273 = vmatpush.msra.mxu0 %v1272
      %v1274 = vand.u32 %v293, 4294901760
      %v1275 = vsub.f32 %v293, %v1274
      %1276 = vmatpush.msra.mxu0 %v1275
      %v1277 = vand.u32 %v292, 4294901760
      %v1278 = vsub.f32 %v292, %v1277
      %1279 = vmatpush.msra.mxu0 %v1278
      %v1280 = vand.u32 %v291, 4294901760
      %v1281 = vsub.f32 %v291, %v1280
      %1282 = vmatpush.msra.mxu0 %v1281
      %v1283 = vand.u32 %v290, 4294901760
      %v1284 = vsub.f32 %v290, %v1283
      %1285 = vmatpush.msra.mxu0 %v1284
      %v1286 = vand.u32 %v289, 4294901760
      %v1287 = vsub.f32 %v289, %v1286
      %1288 = vmatpush.msra.mxu0 %v1287
      %v1289 = vand.u32 %v288, 4294901760
      %v1290 = vsub.f32 %v288, %v1289
      %1291 = vmatpush.msra.mxu0 %v1290
      %v1292 = vand.u32 %v287, 4294901760
      %v1293 = vsub.f32 %v287, %v1292
      %1294 = vmatpush.msra.mxu0 %v1293
      %v1295 = vand.u32 %v286, 4294901760
      %v1296 = vsub.f32 %v286, %v1295
      %1297 = vmatpush.msra.mxu0 %v1296
      %v1298 = vand.u32 %v285, 4294901760
      %v1299 = vsub.f32 %v285, %v1298
      %1300 = vmatpush.msra.mxu0 %v1299
      %v1301 = vand.u32 %v284, 4294901760
      %v1302 = vsub.f32 %v284, %v1301
      %1303 = vmatpush.msra.mxu0 %v1302
      %v1304 = vand.u32 %v283, 4294901760
      %v1305 = vsub.f32 %v283, %v1304
      %1306 = vmatpush.msra.mxu0 %v1305
      %v1307 = vand.u32 %v282, 4294901760
      %v1308 = vsub.f32 %v282, %v1307
      %1309 = vmatpush.msra.mxu0 %v1308
      %v1310 = vand.u32 %v281, 4294901760
      %v1311 = vsub.f32 %v281, %v1310
      %1312 = vmatpush.msra.mxu0 %v1311
      %v1313 = vand.u32 %v719, 4294901760
      %v1314 = vsub.f32 %v719, %v1313
      %1315 = vmatmul.f32.gmra.mxu0 %v1314
      %v1316 = vpop.f32.mrf.mxu0
      %v1317 = vadd.f32 %v1139, %v1316
      %v1318 = vand.u32 %v720, 4294901760
      %v1319 = vsub.f32 %v720, %v1318
      %1320 = vmatmul.f32.gmra.mxu0 %v1319
      %v1321 = vpop.f32.mrf.mxu0
      %v1322 = vadd.f32 %v1143, %v1321
      %v1323 = vand.u32 %v721, 4294901760
      %v1324 = vsub.f32 %v721, %v1323
      %1325 = vmatmul.f32.gmra.mxu0 %v1324
      %v1326 = vpop.f32.mrf.mxu0
      %v1327 = vadd.f32 %v1147, %v1326
      %v1328 = vand.u32 %v722, 4294901760
      %v1329 = vsub.f32 %v722, %v1328
      %1330 = vmatmul.f32.gmra.mxu0 %v1329
      %v1331 = vpop.f32.mrf.mxu0
      %v1332 = vadd.f32 %v1151, %v1331
      %v1333 = vand.u32 %v723, 4294901760
      %v1334 = vsub.f32 %v723, %v1333
      %1335 = vmatmul.f32.gmra.mxu0 %v1334
      %v1336 = vpop.f32.mrf.mxu0
      %v1337 = vadd.f32 %v1155, %v1336
      %v1338 = vand.u32 %v724, 4294901760
      %v1339 = vsub.f32 %v724, %v1338
      %1340 = vmatmul.f32.gmra.mxu0 %v1339
      %v1341 = vpop.f32.mrf.mxu0
      %v1342 = vadd.f32 %v1159, %v1341
      %v1343 = vand.u32 %v725, 4294901760
      %v1344 = vsub.f32 %v725, %v1343
      %1345 = vmatmul.f32.gmra.mxu0 %v1344
      %v1346 = vpop.f32.mrf.mxu0
      %v1347 = vadd.f32 %v1163, %v1346
      %v1348 = vand.u32 %v726, 4294901760
      %v1349 = vsub.f32 %v726, %v1348
      %1350 = vmatmul.f32.gmra.mxu0 %v1349
      %v1351 = vpop.f32.mrf.mxu0
      %v1352 = vadd.f32 %v1167, %v1351
      %v1353 = vand.u32 %v727, 4294901760
      %v1354 = vsub.f32 %v727, %v1353
      %1355 = vmatmul.f32.gmra.mxu0 %v1354
      %v1356 = vpop.f32.mrf.mxu0
      %v1357 = vadd.f32 %v1171, %v1356
      %v1358 = vand.u32 %v728, 4294901760
      %v1359 = vsub.f32 %v728, %v1358
      %1360 = vmatmul.f32.gmra.mxu0 %v1359
      %v1361 = vpop.f32.mrf.mxu0
      %v1362 = vadd.f32 %v1175, %v1361
      %v1363 = vand.u32 %v729, 4294901760
      %v1364 = vsub.f32 %v729, %v1363
      %1365 = vmatmul.f32.gmra.mxu0 %v1364
      %v1366 = vpop.f32.mrf.mxu0
      %v1367 = vadd.f32 %v1179, %v1366
      %v1368 = vand.u32 %v730, 4294901760
      %v1369 = vsub.f32 %v730, %v1368
      %1370 = vmatmul.f32.gmra.mxu0 %v1369
      %v1371 = vpop.f32.mrf.mxu0
      %v1372 = vadd.f32 %v1183, %v1371
      %v1373 = vand.u32 %v731, 4294901760
      %v1374 = vsub.f32 %v731, %v1373
      %1375 = vmatmul.f32.gmra.mxu0 %v1374
      %v1376 = vpop.f32.mrf.mxu0
      %v1377 = vadd.f32 %v1187, %v1376
      %v1378 = vand.u32 %v732, 4294901760
      %v1379 = vsub.f32 %v732, %v1378
      %1380 = vmatmul.f32.gmra.mxu0 %v1379
      %v1381 = vpop.f32.mrf.mxu0
      %v1382 = vadd.f32 %v1191, %v1381
      %v1383 = vand.u32 %v733, 4294901760
      %v1384 = vsub.f32 %v733, %v1383
      %1385 = vmatmul.f32.gmra.mxu0 %v1384
      %v1386 = vpop.f32.mrf.mxu0
      %v1387 = vadd.f32 %v1195, %v1386
      %v1388 = vand.u32 %v734, 4294901760
      %v1389 = vsub.f32 %v734, %v1388
      %1390 = vmatmul.f32.gmra.mxu0 %v1389
      %v1391 = vpop.f32.mrf.mxu0
      %v1392 = vadd.f32 %v1199, %v1391
      %v1393 = vand.u32 %v735, 4294901760
      %v1394 = vsub.f32 %v735, %v1393
      %1395 = vmatmul.f32.gmra.mxu0 %v1394
      %v1396 = vpop.f32.mrf.mxu0
      %v1397 = vadd.f32 %v1203, %v1396
      %v1398 = vand.u32 %v736, 4294901760
      %v1399 = vsub.f32 %v736, %v1398
      %1400 = vmatmul.f32.gmra.mxu0 %v1399
      %v1401 = vpop.f32.mrf.mxu0
      %v1402 = vadd.f32 %v1207, %v1401
      %v1403 = vand.u32 %v737, 4294901760
      %v1404 = vsub.f32 %v737, %v1403
      %1405 = vmatmul.f32.gmra.mxu0 %v1404
      %v1406 = vpop.f32.mrf.mxu0
      %v1407 = vadd.f32 %v1211, %v1406
      %v1408 = vand.u32 %v738, 4294901760
      %v1409 = vsub.f32 %v738, %v1408
      %1410 = vmatmul.f32.gmra.mxu0 %v1409
      %v1411 = vpop.f32.mrf.mxu0
      %v1412 = vadd.f32 %v1215, %v1411
      %v1413 = vand.u32 %v739, 4294901760
      %v1414 = vsub.f32 %v739, %v1413
      %1415 = vmatmul.f32.gmra.mxu0 %v1414
      %v1416 = vpop.f32.mrf.mxu0
      %v1417 = vadd.f32 %v1219, %v1416
      %v1418 = vand.u32 %v740, 4294901760
      %v1419 = vsub.f32 %v740, %v1418
      %1420 = vmatmul.f32.gmra.mxu0 %v1419
      %v1421 = vpop.f32.mrf.mxu0
      %v1422 = vadd.f32 %v1223, %v1421
      %v1423 = vand.u32 %v741, 4294901760
      %v1424 = vsub.f32 %v741, %v1423
      %1425 = vmatmul.f32.gmra.mxu0 %v1424
      %v1426 = vpop.f32.mrf.mxu0
      %v1427 = vadd.f32 %v1227, %v1426
      %v1428 = vand.u32 %v742, 4294901760
      %v1429 = vsub.f32 %v742, %v1428
      %1430 = vmatmul.f32.gmra.mxu0 %v1429
      %v1431 = vpop.f32.mrf.mxu0
      %v1432 = vadd.f32 %v1231, %v1431
      %v1433 = vand.u32 %v743, 4294901760
      %v1434 = vsub.f32 %v743, %v1433
      %1435 = vmatmul.f32.gmra.mxu0 %v1434
      %v1436 = vpop.f32.mrf.mxu0
      %v1437 = vadd.f32 %v1235, %v1436
      %v1438 = vand.u32 %v744, 4294901760
      %v1439 = vsub.f32 %v744, %v1438
      %1440 = vmatmul.f32.gmra.mxu0 %v1439
      %v1441 = vpop.f32.mrf.mxu0
      %v1442 = vadd.f32 %v1239, %v1441
      %v1443 = vand.u32 %v745, 4294901760
      %v1444 = vsub.f32 %v745, %v1443
      %1445 = vmatmul.f32.gmra.mxu0 %v1444
      %v1446 = vpop.f32.mrf.mxu0
      %v1447 = vadd.f32 %v1243, %v1446
      %v1448 = vand.u32 %v746, 4294901760
      %v1449 = vsub.f32 %v746, %v1448
      %1450 = vmatmul.f32.gmra.mxu0 %v1449
      %v1451 = vpop.f32.mrf.mxu0
      %v1452 = vadd.f32 %v1247, %v1451
      %v1453 = vand.u32 %v747, 4294901760
      %v1454 = vsub.f32 %v747, %v1453
      %1455 = vmatmul.f32.gmra.mxu0 %v1454
      %v1456 = vpop.f32.mrf.mxu0
      %v1457 = vadd.f32 %v1251, %v1456
      %v1458 = vand.u32 %v748, 4294901760
      %v1459 = vsub.f32 %v748, %v1458
      %1460 = vmatmul.f32.gmra.mxu0 %v1459
      %v1461 = vpop.f32.mrf.mxu0
      %v1462 = vadd.f32 %v1255, %v1461
      %v1463 = vand.u32 %v749, 4294901760
      %v1464 = vsub.f32 %v749, %v1463
      %1465 = vmatmul.f32.gmra.mxu0 %v1464
      %v1466 = vpop.f32.mrf.mxu0
      %v1467 = vadd.f32 %v1259, %v1466
      %v1468 = vand.u32 %v750, 4294901760
      %v1469 = vsub.f32 %v750, %v1468
      %1470 = vmatmul.f32.gmra.mxu0 %v1469
      %v1471 = vpop.f32.mrf.mxu0
      %v1472 = vadd.f32 %v1263, %v1471
      %1473 = vdwg.mxu0
      %v1474 = vand.u32 %v296, 4294901760
      %1475 = vmatpush.msra.mxu0 %v1474
      %v1476 = vand.u32 %v295, 4294901760
      %1477 = vmatpush.msra.mxu0 %v1476
      %v1478 = vand.u32 %v294, 4294901760
      %1479 = vmatpush.msra.mxu0 %v1478
      %v1480 = vand.u32 %v293, 4294901760
      %1481 = vmatpush.msra.mxu0 %v1480
      %v1482 = vand.u32 %v292, 4294901760
      %1483 = vmatpush.msra.mxu0 %v1482
      %v1484 = vand.u32 %v291, 4294901760
      %1485 = vmatpush.msra.mxu0 %v1484
      %v1486 = vand.u32 %v290, 4294901760
      %1487 = vmatpush.msra.mxu0 %v1486
      %v1488 = vand.u32 %v289, 4294901760
      %1489 = vmatpush.msra.mxu0 %v1488
      %v1490 = vand.u32 %v288, 4294901760
      %1491 = vmatpush.msra.mxu0 %v1490
      %v1492 = vand.u32 %v287, 4294901760
      %1493 = vmatpush.msra.mxu0 %v1492
      %v1494 = vand.u32 %v286, 4294901760
      %1495 = vmatpush.msra.mxu0 %v1494
      %v1496 = vand.u32 %v285, 4294901760
      %1497 = vmatpush.msra.mxu0 %v1496
      %v1498 = vand.u32 %v284, 4294901760
      %1499 = vmatpush.msra.mxu0 %v1498
      %v1500 = vand.u32 %v283, 4294901760
      %1501 = vmatpush.msra.mxu0 %v1500
      %v1502 = vand.u32 %v282, 4294901760
      %1503 = vmatpush.msra.mxu0 %v1502
      %v1504 = vand.u32 %v281, 4294901760
      %1505 = vmatpush.msra.mxu0 %v1504
      %v1506 = vand.u32 %v719, 4294901760
      %v1507 = vsub.f32 %v719, %v1506
      %v1508 = vand.u32 %v1507, 4294901760
      %1509 = vmatmul.f32.gmra.mxu0 %v1508
      %v1510 = vpop.f32.mrf.mxu0
      %v1511 = vadd.f32 %v1317, %v1510
      %v1512 = vand.u32 %v720, 4294901760
      %v1513 = vsub.f32 %v720, %v1512
      %v1514 = vand.u32 %v1513, 4294901760
      %1515 = vmatmul.f32.gmra.mxu0 %v1514
      %v1516 = vpop.f32.mrf.mxu0
      %v1517 = vadd.f32 %v1322, %v1516
      %v1518 = vand.u32 %v721, 4294901760
      %v1519 = vsub.f32 %v721, %v1518
      %v1520 = vand.u32 %v1519, 4294901760
      %1521 = vmatmul.f32.gmra.mxu0 %v1520
      %v1522 = vpop.f32.mrf.mxu0
      %v1523 = vadd.f32 %v1327, %v1522
      %v1524 = vand.u32 %v722, 4294901760
      %v1525 = vsub.f32 %v722, %v1524
      %v1526 = vand.u32 %v1525, 4294901760
      %1527 = vmatmul.f32.gmra.mxu0 %v1526
      %v1528 = vpop.f32.mrf.mxu0
      %v1529 = vadd.f32 %v1332, %v1528
      %v1530 = vand.u32 %v723, 4294901760
      %v1531 = vsub.f32 %v723, %v1530
      %v1532 = vand.u32 %v1531, 4294901760
      %1533 = vmatmul.f32.gmra.mxu0 %v1532
      %v1534 = vpop.f32.mrf.mxu0
      %v1535 = vadd.f32 %v1337, %v1534
      %v1536 = vand.u32 %v724, 4294901760
      %v1537 = vsub.f32 %v724, %v1536
      %v1538 = vand.u32 %v1537, 4294901760
      %1539 = vmatmul.f32.gmra.mxu0 %v1538
      %v1540 = vpop.f32.mrf.mxu0
      %v1541 = vadd.f32 %v1342, %v1540
      %v1542 = vand.u32 %v725, 4294901760
      %v1543 = vsub.f32 %v725, %v1542
      %v1544 = vand.u32 %v1543, 4294901760
      %1545 = vmatmul.f32.gmra.mxu0 %v1544
      %v1546 = vpop.f32.mrf.mxu0
      %v1547 = vadd.f32 %v1347, %v1546
      %v1548 = vand.u32 %v726, 4294901760
      %v1549 = vsub.f32 %v726, %v1548
      %v1550 = vand.u32 %v1549, 4294901760
      %1551 = vmatmul.f32.gmra.mxu0 %v1550
      %v1552 = vpop.f32.mrf.mxu0
      %v1553 = vadd.f32 %v1352, %v1552
      %v1554 = vand.u32 %v727, 4294901760
      %v1555 = vsub.f32 %v727, %v1554
      %v1556 = vand.u32 %v1555, 4294901760
      %1557 = vmatmul.f32.gmra.mxu0 %v1556
      %v1558 = vpop.f32.mrf.mxu0
      %v1559 = vadd.f32 %v1357, %v1558
      %v1560 = vand.u32 %v728, 4294901760
      %v1561 = vsub.f32 %v728, %v1560
      %v1562 = vand.u32 %v1561, 4294901760
      %1563 = vmatmul.f32.gmra.mxu0 %v1562
      %v1564 = vpop.f32.mrf.mxu0
      %v1565 = vadd.f32 %v1362, %v1564
      %v1566 = vand.u32 %v729, 4294901760
      %v1567 = vsub.f32 %v729, %v1566
      %v1568 = vand.u32 %v1567, 4294901760
      %1569 = vmatmul.f32.gmra.mxu0 %v1568
      %v1570 = vpop.f32.mrf.mxu0
      %v1571 = vadd.f32 %v1367, %v1570
      %v1572 = vand.u32 %v730, 4294901760
      %v1573 = vsub.f32 %v730, %v1572
      %v1574 = vand.u32 %v1573, 4294901760
      %1575 = vmatmul.f32.gmra.mxu0 %v1574
      %v1576 = vpop.f32.mrf.mxu0
      %v1577 = vadd.f32 %v1372, %v1576
      %v1578 = vand.u32 %v731, 4294901760
      %v1579 = vsub.f32 %v731, %v1578
      %v1580 = vand.u32 %v1579, 4294901760
      %1581 = vmatmul.f32.gmra.mxu0 %v1580
      %v1582 = vpop.f32.mrf.mxu0
      %v1583 = vadd.f32 %v1377, %v1582
      %v1584 = vand.u32 %v732, 4294901760
      %v1585 = vsub.f32 %v732, %v1584
      %v1586 = vand.u32 %v1585, 4294901760
      %1587 = vmatmul.f32.gmra.mxu0 %v1586
      %v1588 = vpop.f32.mrf.mxu0
      %v1589 = vadd.f32 %v1382, %v1588
      %v1590 = vand.u32 %v733, 4294901760
      %v1591 = vsub.f32 %v733, %v1590
      %v1592 = vand.u32 %v1591, 4294901760
      %1593 = vmatmul.f32.gmra.mxu0 %v1592
      %v1594 = vpop.f32.mrf.mxu0
      %v1595 = vadd.f32 %v1387, %v1594
      %v1596 = vand.u32 %v734, 4294901760
      %v1597 = vsub.f32 %v734, %v1596
      %v1598 = vand.u32 %v1597, 4294901760
      %1599 = vmatmul.f32.gmra.mxu0 %v1598
      %v1600 = vpop.f32.mrf.mxu0
      %v1601 = vadd.f32 %v1392, %v1600
      %v1602 = vand.u32 %v735, 4294901760
      %v1603 = vsub.f32 %v735, %v1602
      %v1604 = vand.u32 %v1603, 4294901760
      %1605 = vmatmul.f32.gmra.mxu0 %v1604
      %v1606 = vpop.f32.mrf.mxu0
      %v1607 = vadd.f32 %v1397, %v1606
      %v1608 = vand.u32 %v736, 4294901760
      %v1609 = vsub.f32 %v736, %v1608
      %v1610 = vand.u32 %v1609, 4294901760
      %1611 = vmatmul.f32.gmra.mxu0 %v1610
      %v1612 = vpop.f32.mrf.mxu0
      %v1613 = vadd.f32 %v1402, %v1612
      %v1614 = vand.u32 %v737, 4294901760
      %v1615 = vsub.f32 %v737, %v1614
      %v1616 = vand.u32 %v1615, 4294901760
      %1617 = vmatmul.f32.gmra.mxu0 %v1616
      %v1618 = vpop.f32.mrf.mxu0
      %v1619 = vadd.f32 %v1407, %v1618
      %v1620 = vand.u32 %v738, 4294901760
      %v1621 = vsub.f32 %v738, %v1620
      %v1622 = vand.u32 %v1621, 4294901760
      %1623 = vmatmul.f32.gmra.mxu0 %v1622
      %v1624 = vpop.f32.mrf.mxu0
      %v1625 = vadd.f32 %v1412, %v1624
      %v1626 = vand.u32 %v739, 4294901760
      %v1627 = vsub.f32 %v739, %v1626
      %v1628 = vand.u32 %v1627, 4294901760
      %1629 = vmatmul.f32.gmra.mxu0 %v1628
      %v1630 = vpop.f32.mrf.mxu0
      %v1631 = vadd.f32 %v1417, %v1630
      %v1632 = vand.u32 %v740, 4294901760
      %v1633 = vsub.f32 %v740, %v1632
      %v1634 = vand.u32 %v1633, 4294901760
      %1635 = vmatmul.f32.gmra.mxu0 %v1634
      %v1636 = vpop.f32.mrf.mxu0
      %v1637 = vadd.f32 %v1422, %v1636
      %v1638 = vand.u32 %v741, 4294901760
      %v1639 = vsub.f32 %v741, %v1638
      %v1640 = vand.u32 %v1639, 4294901760
      %1641 = vmatmul.f32.gmra.mxu0 %v1640
      %v1642 = vpop.f32.mrf.mxu0
      %v1643 = vadd.f32 %v1427, %v1642
      %v1644 = vand.u32 %v742, 4294901760
      %v1645 = vsub.f32 %v742, %v1644
      %v1646 = vand.u32 %v1645, 4294901760
      %1647 = vmatmul.f32.gmra.mxu0 %v1646
      %v1648 = vpop.f32.mrf.mxu0
      %v1649 = vadd.f32 %v1432, %v1648
      %v1650 = vand.u32 %v743, 4294901760
      %v1651 = vsub.f32 %v743, %v1650
      %v1652 = vand.u32 %v1651, 4294901760
      %1653 = vmatmul.f32.gmra.mxu0 %v1652
      %v1654 = vpop.f32.mrf.mxu0
      %v1655 = vadd.f32 %v1437, %v1654
      %v1656 = vand.u32 %v744, 4294901760
      %v1657 = vsub.f32 %v744, %v1656
      %v1658 = vand.u32 %v1657, 4294901760
      %1659 = vmatmul.f32.gmra.mxu0 %v1658
      %v1660 = vpop.f32.mrf.mxu0
      %v1661 = vadd.f32 %v1442, %v1660
      %v1662 = vand.u32 %v745, 4294901760
      %v1663 = vsub.f32 %v745, %v1662
      %v1664 = vand.u32 %v1663, 4294901760
      %1665 = vmatmul.f32.gmra.mxu0 %v1664
      %v1666 = vpop.f32.mrf.mxu0
      %v1667 = vadd.f32 %v1447, %v1666
      %v1668 = vand.u32 %v746, 4294901760
      %v1669 = vsub.f32 %v746, %v1668
      %v1670 = vand.u32 %v1669, 4294901760
      %1671 = vmatmul.f32.gmra.mxu0 %v1670
      %v1672 = vpop.f32.mrf.mxu0
      %v1673 = vadd.f32 %v1452, %v1672
      %v1674 = vand.u32 %v747, 4294901760
      %v1675 = vsub.f32 %v747, %v1674
      %v1676 = vand.u32 %v1675, 4294901760
      %1677 = vmatmul.f32.gmra.mxu0 %v1676
      %v1678 = vpop.f32.mrf.mxu0
      %v1679 = vadd.f32 %v1457, %v1678
      %v1680 = vand.u32 %v748, 4294901760
      %v1681 = vsub.f32 %v748, %v1680
      %v1682 = vand.u32 %v1681, 4294901760
      %1683 = vmatmul.f32.gmra.mxu0 %v1682
      %v1684 = vpop.f32.mrf.mxu0
      %v1685 = vadd.f32 %v1462, %v1684
      %v1686 = vand.u32 %v749, 4294901760
      %v1687 = vsub.f32 %v749, %v1686
      %v1688 = vand.u32 %v1687, 4294901760
      %1689 = vmatmul.f32.gmra.mxu0 %v1688
      %v1690 = vpop.f32.mrf.mxu0
      %v1691 = vadd.f32 %v1467, %v1690
      %v1692 = vand.u32 %v750, 4294901760
      %v1693 = vsub.f32 %v750, %v1692
      %v1694 = vand.u32 %v1693, 4294901760
      %1695 = vmatmul.f32.gmra.mxu0 %v1694
      %v1696 = vpop.f32.mrf.mxu0
      %v1697 = vadd.f32 %v1472, %v1696
      %1698 = vdwg.mxu0
      %v1699 = vand.u32 %v296, 4294901760
      %v1700 = vsub.f32 %v296, %v1699
      %v1701 = vand.u32 %v1700, 4294901760
      %1702 = vmatpush.msra.mxu0 %v1701
      %v1703 = vand.u32 %v295, 4294901760
      %v1704 = vsub.f32 %v295, %v1703
      %v1705 = vand.u32 %v1704, 4294901760
      %1706 = vmatpush.msra.mxu0 %v1705
      %v1707 = vand.u32 %v294, 4294901760
      %v1708 = vsub.f32 %v294, %v1707
      %v1709 = vand.u32 %v1708, 4294901760
      %1710 = vmatpush.msra.mxu0 %v1709
      %v1711 = vand.u32 %v293, 4294901760
      %v1712 = vsub.f32 %v293, %v1711
      %v1713 = vand.u32 %v1712, 4294901760
      %1714 = vmatpush.msra.mxu0 %v1713
      %v1715 = vand.u32 %v292, 4294901760
      %v1716 = vsub.f32 %v292, %v1715
      %v1717 = vand.u32 %v1716, 4294901760
      %1718 = vmatpush.msra.mxu0 %v1717
      %v1719 = vand.u32 %v291, 4294901760
      %v1720 = vsub.f32 %v291, %v1719
      %v1721 = vand.u32 %v1720, 4294901760
      %1722 = vmatpush.msra.mxu0 %v1721
      %v1723 = vand.u32 %v290, 4294901760
      %v1724 = vsub.f32 %v290, %v1723
      %v1725 = vand.u32 %v1724, 4294901760
      %1726 = vmatpush.msra.mxu0 %v1725
      %v1727 = vand.u32 %v289, 4294901760
      %v1728 = vsub.f32 %v289, %v1727
      %v1729 = vand.u32 %v1728, 4294901760
      %1730 = vmatpush.msra.mxu0 %v1729
      %v1731 = vand.u32 %v288, 4294901760
      %v1732 = vsub.f32 %v288, %v1731
      %v1733 = vand.u32 %v1732, 4294901760
      %1734 = vmatpush.msra.mxu0 %v1733
      %v1735 = vand.u32 %v287, 4294901760
      %v1736 = vsub.f32 %v287, %v1735
      %v1737 = vand.u32 %v1736, 4294901760
      %1738 = vmatpush.msra.mxu0 %v1737
      %v1739 = vand.u32 %v286, 4294901760
      %v1740 = vsub.f32 %v286, %v1739
      %v1741 = vand.u32 %v1740, 4294901760
      %1742 = vmatpush.msra.mxu0 %v1741
      %v1743 = vand.u32 %v285, 4294901760
      %v1744 = vsub.f32 %v285, %v1743
      %v1745 = vand.u32 %v1744, 4294901760
      %1746 = vmatpush.msra.mxu0 %v1745
      %v1747 = vand.u32 %v284, 4294901760
      %v1748 = vsub.f32 %v284, %v1747
      %v1749 = vand.u32 %v1748, 4294901760
      %1750 = vmatpush.msra.mxu0 %v1749
      %v1751 = vand.u32 %v283, 4294901760
      %v1752 = vsub.f32 %v283, %v1751
      %v1753 = vand.u32 %v1752, 4294901760
      %1754 = vmatpush.msra.mxu0 %v1753
      %v1755 = vand.u32 %v282, 4294901760
      %v1756 = vsub.f32 %v282, %v1755
      %v1757 = vand.u32 %v1756, 4294901760
      %1758 = vmatpush.msra.mxu0 %v1757
      %v1759 = vand.u32 %v281, 4294901760
      %v1760 = vsub.f32 %v281, %v1759
      %v1761 = vand.u32 %v1760, 4294901760
      %1762 = vmatpush.msra.mxu0 %v1761
      %v1763 = vand.u32 %v719, 4294901760
      %1764 = vmatmul.f32.gmra.mxu0 %v1763
      %v1765 = vpop.f32.mrf.mxu0
      %v1766 = vadd.f32 %v1511, %v1765
      %v1767 = vand.u32 %v720, 4294901760
      %1768 = vmatmul.f32.gmra.mxu0 %v1767
      %v1769 = vpop.f32.mrf.mxu0
      %v1770 = vadd.f32 %v1517, %v1769
      %v1771 = vand.u32 %v721, 4294901760
      %1772 = vmatmul.f32.gmra.mxu0 %v1771
      %v1773 = vpop.f32.mrf.mxu0
      %v1774 = vadd.f32 %v1523, %v1773
      %v1775 = vand.u32 %v722, 4294901760
      %1776 = vmatmul.f32.gmra.mxu0 %v1775
      %v1777 = vpop.f32.mrf.mxu0
      %v1778 = vadd.f32 %v1529, %v1777
      %v1779 = vand.u32 %v723, 4294901760
      %1780 = vmatmul.f32.gmra.mxu0 %v1779
      %v1781 = vpop.f32.mrf.mxu0
      %v1782 = vadd.f32 %v1535, %v1781
      %v1783 = vand.u32 %v724, 4294901760
      %1784 = vmatmul.f32.gmra.mxu0 %v1783
      %v1785 = vpop.f32.mrf.mxu0
      %v1786 = vadd.f32 %v1541, %v1785
      %v1787 = vand.u32 %v725, 4294901760
      %1788 = vmatmul.f32.gmra.mxu0 %v1787
      %v1789 = vpop.f32.mrf.mxu0
      %v1790 = vadd.f32 %v1547, %v1789
      %v1791 = vand.u32 %v726, 4294901760
      %1792 = vmatmul.f32.gmra.mxu0 %v1791
      %v1793 = vpop.f32.mrf.mxu0
      %v1794 = vadd.f32 %v1553, %v1793
      %v1795 = vand.u32 %v727, 4294901760
      %1796 = vmatmul.f32.gmra.mxu0 %v1795
      %v1797 = vpop.f32.mrf.mxu0
      %v1798 = vadd.f32 %v1559, %v1797
      %v1799 = vand.u32 %v728, 4294901760
      %1800 = vmatmul.f32.gmra.mxu0 %v1799
      %v1801 = vpop.f32.mrf.mxu0
      %v1802 = vadd.f32 %v1565, %v1801
      %v1803 = vand.u32 %v729, 4294901760
      %1804 = vmatmul.f32.gmra.mxu0 %v1803
      %v1805 = vpop.f32.mrf.mxu0
      %v1806 = vadd.f32 %v1571, %v1805
      %v1807 = vand.u32 %v730, 4294901760
      %1808 = vmatmul.f32.gmra.mxu0 %v1807
      %v1809 = vpop.f32.mrf.mxu0
      %v1810 = vadd.f32 %v1577, %v1809
      %v1811 = vand.u32 %v731, 4294901760
      %1812 = vmatmul.f32.gmra.mxu0 %v1811
      %v1813 = vpop.f32.mrf.mxu0
      %v1814 = vadd.f32 %v1583, %v1813
      %v1815 = vand.u32 %v732, 4294901760
      %1816 = vmatmul.f32.gmra.mxu0 %v1815
      %v1817 = vpop.f32.mrf.mxu0
      %v1818 = vadd.f32 %v1589, %v1817
      %v1819 = vand.u32 %v733, 4294901760
      %1820 = vmatmul.f32.gmra.mxu0 %v1819
      %v1821 = vpop.f32.mrf.mxu0
      %v1822 = vadd.f32 %v1595, %v1821
      %v1823 = vand.u32 %v734, 4294901760
      %1824 = vmatmul.f32.gmra.mxu0 %v1823
      %v1825 = vpop.f32.mrf.mxu0
      %v1826 = vadd.f32 %v1601, %v1825
      %v1827 = vand.u32 %v735, 4294901760
      %1828 = vmatmul.f32.gmra.mxu0 %v1827
      %v1829 = vpop.f32.mrf.mxu0
      %v1830 = vadd.f32 %v1607, %v1829
      %v1831 = vand.u32 %v736, 4294901760
      %1832 = vmatmul.f32.gmra.mxu0 %v1831
      %v1833 = vpop.f32.mrf.mxu0
      %v1834 = vadd.f32 %v1613, %v1833
      %v1835 = vand.u32 %v737, 4294901760
      %1836 = vmatmul.f32.gmra.mxu0 %v1835
      %v1837 = vpop.f32.mrf.mxu0
      %v1838 = vadd.f32 %v1619, %v1837
      %v1839 = vand.u32 %v738, 4294901760
      %1840 = vmatmul.f32.gmra.mxu0 %v1839
      %v1841 = vpop.f32.mrf.mxu0
      %v1842 = vadd.f32 %v1625, %v1841
      %v1843 = vand.u32 %v739, 4294901760
      %1844 = vmatmul.f32.gmra.mxu0 %v1843
      %v1845 = vpop.f32.mrf.mxu0
      %v1846 = vadd.f32 %v1631, %v1845
      %v1847 = vand.u32 %v740, 4294901760
      %1848 = vmatmul.f32.gmra.mxu0 %v1847
      %v1849 = vpop.f32.mrf.mxu0
      %v1850 = vadd.f32 %v1637, %v1849
      %v1851 = vand.u32 %v741, 4294901760
      %1852 = vmatmul.f32.gmra.mxu0 %v1851
      %v1853 = vpop.f32.mrf.mxu0
      %v1854 = vadd.f32 %v1643, %v1853
      %v1855 = vand.u32 %v742, 4294901760
      %1856 = vmatmul.f32.gmra.mxu0 %v1855
      %v1857 = vpop.f32.mrf.mxu0
      %v1858 = vadd.f32 %v1649, %v1857
      %v1859 = vand.u32 %v743, 4294901760
      %1860 = vmatmul.f32.gmra.mxu0 %v1859
      %v1861 = vpop.f32.mrf.mxu0
      %v1862 = vadd.f32 %v1655, %v1861
      %v1863 = vand.u32 %v744, 4294901760
      %1864 = vmatmul.f32.gmra.mxu0 %v1863
      %v1865 = vpop.f32.mrf.mxu0
      %v1866 = vadd.f32 %v1661, %v1865
      %v1867 = vand.u32 %v745, 4294901760
      %1868 = vmatmul.f32.gmra.mxu0 %v1867
      %v1869 = vpop.f32.mrf.mxu0
      %v1870 = vadd.f32 %v1667, %v1869
      %v1871 = vand.u32 %v746, 4294901760
      %1872 = vmatmul.f32.gmra.mxu0 %v1871
      %v1873 = vpop.f32.mrf.mxu0
      %v1874 = vadd.f32 %v1673, %v1873
      %v1875 = vand.u32 %v747, 4294901760
      %1876 = vmatmul.f32.gmra.mxu0 %v1875
      %v1877 = vpop.f32.mrf.mxu0
      %v1878 = vadd.f32 %v1679, %v1877
      %v1879 = vand.u32 %v748, 4294901760
      %1880 = vmatmul.f32.gmra.mxu0 %v1879
      %v1881 = vpop.f32.mrf.mxu0
      %v1882 = vadd.f32 %v1685, %v1881
      %v1883 = vand.u32 %v749, 4294901760
      %1884 = vmatmul.f32.gmra.mxu0 %v1883
      %v1885 = vpop.f32.mrf.mxu0
      %v1886 = vadd.f32 %v1691, %v1885
      %v1887 = vand.u32 %v750, 4294901760
      %1888 = vmatmul.f32.gmra.mxu0 %v1887
      %v1889 = vpop.f32.mrf.mxu0
      %v1890 = vadd.f32 %v1697, %v1889
      %1891 = vdwg.mxu0
      %v1892 = vand.u32 %v296, 4294901760
      %1893 = vmatpush.msra.mxu0 %v1892
      %v1894 = vand.u32 %v295, 4294901760
      %1895 = vmatpush.msra.mxu0 %v1894
      %v1896 = vand.u32 %v294, 4294901760
      %1897 = vmatpush.msra.mxu0 %v1896
      %v1898 = vand.u32 %v293, 4294901760
      %1899 = vmatpush.msra.mxu0 %v1898
      %v1900 = vand.u32 %v292, 4294901760
      %1901 = vmatpush.msra.mxu0 %v1900
      %v1902 = vand.u32 %v291, 4294901760
      %1903 = vmatpush.msra.mxu0 %v1902
      %v1904 = vand.u32 %v290, 4294901760
      %1905 = vmatpush.msra.mxu0 %v1904
      %v1906 = vand.u32 %v289, 4294901760
      %1907 = vmatpush.msra.mxu0 %v1906
      %v1908 = vand.u32 %v288, 4294901760
      %1909 = vmatpush.msra.mxu0 %v1908
      %v1910 = vand.u32 %v287, 4294901760
      %1911 = vmatpush.msra.mxu0 %v1910
      %v1912 = vand.u32 %v286, 4294901760
      %1913 = vmatpush.msra.mxu0 %v1912
      %v1914 = vand.u32 %v285, 4294901760
      %1915 = vmatpush.msra.mxu0 %v1914
      %v1916 = vand.u32 %v284, 4294901760
      %1917 = vmatpush.msra.mxu0 %v1916
      %v1918 = vand.u32 %v283, 4294901760
      %1919 = vmatpush.msra.mxu0 %v1918
      %v1920 = vand.u32 %v282, 4294901760
      %1921 = vmatpush.msra.mxu0 %v1920
      %v1922 = vand.u32 %v281, 4294901760
      %1923 = vmatpush.msra.mxu0 %v1922
      %v1924 = vand.u32 %v719, 4294901760
      %1925 = vmatmul.f32.gmra.mxu0 %v1924
      %v1926 = vpop.f32.mrf.mxu0
      %v1927 = vadd.f32 %v1766, %v1926
      %v1928 = vand.u32 %v720, 4294901760
      %1929 = vmatmul.f32.gmra.mxu0 %v1928
      %v1930 = vpop.f32.mrf.mxu0
      %v1931 = vadd.f32 %v1770, %v1930
      %v1932 = vand.u32 %v721, 4294901760
      %1933 = vmatmul.f32.gmra.mxu0 %v1932
      %v1934 = vpop.f32.mrf.mxu0
      %v1935 = vadd.f32 %v1774, %v1934
      %v1936 = vand.u32 %v722, 4294901760
      %1937 = vmatmul.f32.gmra.mxu0 %v1936
      %v1938 = vpop.f32.mrf.mxu0
      %v1939 = vadd.f32 %v1778, %v1938
      %v1940 = vand.u32 %v723, 4294901760
      %1941 = vmatmul.f32.gmra.mxu0 %v1940
      %v1942 = vpop.f32.mrf.mxu0
      %v1943 = vadd.f32 %v1782, %v1942
      %v1944 = vand.u32 %v724, 4294901760
      %1945 = vmatmul.f32.gmra.mxu0 %v1944
      %v1946 = vpop.f32.mrf.mxu0
      %v1947 = vadd.f32 %v1786, %v1946
      %v1948 = vand.u32 %v725, 4294901760
      %1949 = vmatmul.f32.gmra.mxu0 %v1948
      %v1950 = vpop.f32.mrf.mxu0
      %v1951 = vadd.f32 %v1790, %v1950
      %v1952 = vand.u32 %v726, 4294901760
      %1953 = vmatmul.f32.gmra.mxu0 %v1952
      %v1954 = vpop.f32.mrf.mxu0
      %v1955 = vadd.f32 %v1794, %v1954
      %v1956 = vand.u32 %v727, 4294901760
      %1957 = vmatmul.f32.gmra.mxu0 %v1956
      %v1958 = vpop.f32.mrf.mxu0
      %v1959 = vadd.f32 %v1798, %v1958
      %v1960 = vand.u32 %v728, 4294901760
      %1961 = vmatmul.f32.gmra.mxu0 %v1960
      %v1962 = vpop.f32.mrf.mxu0
      %v1963 = vadd.f32 %v1802, %v1962
      %v1964 = vand.u32 %v729, 4294901760
      %1965 = vmatmul.f32.gmra.mxu0 %v1964
      %v1966 = vpop.f32.mrf.mxu0
      %v1967 = vadd.f32 %v1806, %v1966
      %v1968 = vand.u32 %v730, 4294901760
      %1969 = vmatmul.f32.gmra.mxu0 %v1968
      %v1970 = vpop.f32.mrf.mxu0
      %v1971 = vadd.f32 %v1810, %v1970
      %v1972 = vand.u32 %v731, 4294901760
      %1973 = vmatmul.f32.gmra.mxu0 %v1972
      %v1974 = vpop.f32.mrf.mxu0
      %v1975 = vadd.f32 %v1814, %v1974
      %v1976 = vand.u32 %v732, 4294901760
      %1977 = vmatmul.f32.gmra.mxu0 %v1976
      %v1978 = vpop.f32.mrf.mxu0
      %v1979 = vadd.f32 %v1818, %v1978
      %v1980 = vand.u32 %v733, 4294901760
      %1981 = vmatmul.f32.gmra.mxu0 %v1980
      %v1982 = vpop.f32.mrf.mxu0
      %v1983 = vadd.f32 %v1822, %v1982
      %v1984 = vand.u32 %v734, 4294901760
      %1985 = vmatmul.f32.gmra.mxu0 %v1984
      %v1986 = vpop.f32.mrf.mxu0
      %v1987 = vadd.f32 %v1826, %v1986
      %v1988 = vand.u32 %v735, 4294901760
      %1989 = vmatmul.f32.gmra.mxu0 %v1988
      %v1990 = vpop.f32.mrf.mxu0
      %v1991 = vadd.f32 %v1830, %v1990
      %v1992 = vand.u32 %v736, 4294901760
      %1993 = vmatmul.f32.gmra.mxu0 %v1992
      %v1994 = vpop.f32.mrf.mxu0
      %v1995 = vadd.f32 %v1834, %v1994
      %v1996 = vand.u32 %v737, 4294901760
      %1997 = vmatmul.f32.gmra.mxu0 %v1996
      %v1998 = vpop.f32.mrf.mxu0
      %v1999 = vadd.f32 %v1838, %v1998
      %v2000 = vand.u32 %v738, 4294901760
      %2001 = vmatmul.f32.gmra.mxu0 %v2000
      %v2002 = vpop.f32.mrf.mxu0
      %v2003 = vadd.f32 %v1842, %v2002
      %v2004 = vand.u32 %v739, 4294901760
      %2005 = vmatmul.f32.gmra.mxu0 %v2004
      %v2006 = vpop.f32.mrf.mxu0
      %v2007 = vadd.f32 %v1846, %v2006
      %v2008 = vand.u32 %v740, 4294901760
      %2009 = vmatmul.f32.gmra.mxu0 %v2008
      %v2010 = vpop.f32.mrf.mxu0
      %v2011 = vadd.f32 %v1850, %v2010
      %v2012 = vand.u32 %v741, 4294901760
      %2013 = vmatmul.f32.gmra.mxu0 %v2012
      %v2014 = vpop.f32.mrf.mxu0
      %v2015 = vadd.f32 %v1854, %v2014
      %v2016 = vand.u32 %v742, 4294901760
      %2017 = vmatmul.f32.gmra.mxu0 %v2016
      %v2018 = vpop.f32.mrf.mxu0
      %v2019 = vadd.f32 %v1858, %v2018
      %v2020 = vand.u32 %v743, 4294901760
      %2021 = vmatmul.f32.gmra.mxu0 %v2020
      %v2022 = vpop.f32.mrf.mxu0
      %v2023 = vadd.f32 %v1862, %v2022
      %v2024 = vand.u32 %v744, 4294901760
      %2025 = vmatmul.f32.gmra.mxu0 %v2024
      %v2026 = vpop.f32.mrf.mxu0
      %v2027 = vadd.f32 %v1866, %v2026
      %v2028 = vand.u32 %v745, 4294901760
      %2029 = vmatmul.f32.gmra.mxu0 %v2028
      %v2030 = vpop.f32.mrf.mxu0
      %v2031 = vadd.f32 %v1870, %v2030
      %v2032 = vand.u32 %v746, 4294901760
      %2033 = vmatmul.f32.gmra.mxu0 %v2032
      %v2034 = vpop.f32.mrf.mxu0
      %v2035 = vadd.f32 %v1874, %v2034
      %v2036 = vand.u32 %v747, 4294901760
      %2037 = vmatmul.f32.gmra.mxu0 %v2036
      %v2038 = vpop.f32.mrf.mxu0
      %v2039 = vadd.f32 %v1878, %v2038
      %v2040 = vand.u32 %v748, 4294901760
      %2041 = vmatmul.f32.gmra.mxu0 %v2040
      %v2042 = vpop.f32.mrf.mxu0
      %v2043 = vadd.f32 %v1882, %v2042
      %v2044 = vand.u32 %v749, 4294901760
      %2045 = vmatmul.f32.gmra.mxu0 %v2044
      %v2046 = vpop.f32.mrf.mxu0
      %v2047 = vadd.f32 %v1886, %v2046
      %v2048 = vand.u32 %v750, 4294901760
      %2049 = vmatmul.f32.gmra.mxu0 %v2048
      %v2050 = vpop.f32.mrf.mxu0
      %v2051 = vadd.f32 %v1890, %v2050
      %2052 = vdwg.mxu0
      %2053 = vst.msk [vmem:[%s238] sm:$0xff] %vm297, %v1927
      %2054 = vst.msk [vmem:[%s238 + $0x8] sm:$0xff] %vm297, %v1931
      %2055 = vst.msk [vmem:[%s238 + $0x10] sm:$0xff] %vm297, %v1935
      %2056 = vst.msk [vmem:[%s238 + $0x18] sm:$0xff] %vm297, %v1939
      %2057 = vst.msk [vmem:[%s238 + $0x20] sm:$0xff] %vm297, %v1943
      %2058 = vst.msk [vmem:[%s238 + $0x28] sm:$0xff] %vm297, %v1947
      %2059 = vst.msk [vmem:[%s238 + $0x30] sm:$0xff] %vm297, %v1951
      %2060 = vst.msk [vmem:[%s238 + $0x38] sm:$0xff] %vm297, %v1955
      %2061 = vst.msk [vmem:[%s238 + $0x40] sm:$0xff] %vm297, %v1959
      %2062 = vst.msk [vmem:[%s238 + $0x48] sm:$0xff] %vm297, %v1963
      %2063 = vst.msk [vmem:[%s238 + $0x50] sm:$0xff] %vm297, %v1967
      %2064 = vst.msk [vmem:[%s238 + $0x58] sm:$0xff] %vm297, %v1971
      %2065 = vst.msk [vmem:[%s238 + $0x60] sm:$0xff] %vm297, %v1975
      %2066 = vst.msk [vmem:[%s238 + $0x68] sm:$0xff] %vm297, %v1979
      %2067 = vst.msk [vmem:[%s238 + $0x70] sm:$0xff] %vm297, %v1983
      %2068 = vst.msk [vmem:[%s238 + $0x78] sm:$0xff] %vm297, %v1987
      %2069 = vst.msk [vmem:[%s238 + $0x80] sm:$0xff] %vm297, %v1991
      %2070 = vst.msk [vmem:[%s238 + $0x88] sm:$0xff] %vm297, %v1995
      %2071 = vst.msk [vmem:[%s238 + $0x90] sm:$0xff] %vm297, %v1999
      %2072 = vst.msk [vmem:[%s238 + $0x98] sm:$0xff] %vm297, %v2003
      %2073 = vst.msk [vmem:[%s238 + $0xa0] sm:$0xff] %vm297, %v2007
      %2074 = vst.msk [vmem:[%s238 + $0xa8] sm:$0xff] %vm297, %v2011
      %2075 = vst.msk [vmem:[%s238 + $0xb0] sm:$0xff] %vm297, %v2015
      %2076 = vst.msk [vmem:[%s238 + $0xb8] sm:$0xff] %vm297, %v2019
      %2077 = vst.msk [vmem:[%s238 + $0xc0] sm:$0xff] %vm297, %v2023
      %2078 = vst.msk [vmem:[%s238 + $0xc8] sm:$0xff] %vm297, %v2027
      %2079 = vst.msk [vmem:[%s238 + $0xd0] sm:$0xff] %vm297, %v2031
      %2080 = vst.msk [vmem:[%s238 + $0xd8] sm:$0xff] %vm297, %v2035
      %2081 = vst.msk [vmem:[%s238 + $0xe0] sm:$0xff] %vm297, %v2039
      %2082 = vst.msk [vmem:[%s238 + $0xe8] sm:$0xff] %vm297, %v2043
      %2083 = vst.msk [vmem:[%s238 + $0xf0] sm:$0xff] %vm297, %v2047
      %2084 = vst.msk [vmem:[%s238 + $0xf8] sm:$0xff] %vm297, %v2051
      %v2085 = vperm.slane %v592, 0
      %v2086 = vperm.slane %v592, 1
      %v2087 = vperm.slane %v592, 2
      %v2088 = vperm.slane %v592, 3
      %v2089 = vperm.slane %v592, 4
      %v2090 = vperm.slane %v592, 5
      %v2091 = vperm.slane %v592, 6
      %v2092 = vperm.slane %v592, 7
      %v2093 = vperm.slane %v594, 0
      %v2094 = vperm.slane %v594, 1
      %v2095 = vperm.slane %v594, 2
      %v2096 = vperm.slane %v594, 3
      %v2097 = vperm.slane %v594, 4
      %v2098 = vperm.slane %v594, 5
      %v2099 = vperm.slane %v594, 6
      %v2100 = vperm.slane %v594, 7
      %v2101 = vperm.slane %v596, 0
      %v2102 = vperm.slane %v596, 1
      %v2103 = vperm.slane %v596, 2
      %v2104 = vperm.slane %v596, 3
      %v2105 = vperm.slane %v596, 4
      %v2106 = vperm.slane %v596, 5
      %v2107 = vperm.slane %v596, 6
      %v2108 = vperm.slane %v596, 7
      %v2109 = vperm.slane %v598, 0
      %v2110 = vperm.slane %v598, 1
      %v2111 = vperm.slane %v598, 2
      %v2112 = vperm.slane %v598, 3
      %v2113 = vperm.slane %v598, 4
      %v2114 = vperm.slane %v598, 5
      %v2115 = vperm.slane %v598, 6
      %v2116 = vperm.slane %v598, 7
      %v2117 = vperm.slane %v600, 0
      %v2118 = vperm.slane %v600, 1
      %v2119 = vperm.slane %v600, 2
      %v2120 = vperm.slane %v600, 3
      %v2121 = vperm.slane %v600, 4
      %v2122 = vperm.slane %v600, 5
      %v2123 = vperm.slane %v600, 6
      %v2124 = vperm.slane %v600, 7
      %v2125 = vperm.slane %v602, 0
      %v2126 = vperm.slane %v602, 1
      %v2127 = vperm.slane %v602, 2
      %v2128 = vperm.slane %v602, 3
      %v2129 = vperm.slane %v602, 4
      %v2130 = vperm.slane %v602, 5
      %v2131 = vperm.slane %v602, 6
      %v2132 = vperm.slane %v602, 7
      %v2133 = vperm.slane %v604, 0
      %v2134 = vperm.slane %v604, 1
      %v2135 = vperm.slane %v604, 2
      %v2136 = vperm.slane %v604, 3
      %v2137 = vperm.slane %v604, 4
      %v2138 = vperm.slane %v604, 5
      %v2139 = vperm.slane %v604, 6
      %v2140 = vperm.slane %v604, 7
      %v2141 = vperm.slane %v606, 0
      %v2142 = vperm.slane %v606, 1
      %v2143 = vperm.slane %v606, 2
      %v2144 = vperm.slane %v606, 3
      %v2145 = vperm.slane %v606, 4
      %v2146 = vperm.slane %v606, 5
      %v2147 = vperm.slane %v606, 6
      %v2148 = vperm.slane %v606, 7
      %v2149 = vperm.slane %v608, 0
      %v2150 = vperm.slane %v608, 1
      %v2151 = vperm.slane %v608, 2
      %v2152 = vperm.slane %v608, 3
      %v2153 = vperm.slane %v608, 4
      %v2154 = vperm.slane %v608, 5
      %v2155 = vperm.slane %v608, 6
      %v2156 = vperm.slane %v608, 7
      %v2157 = vperm.slane %v610, 0
      %v2158 = vperm.slane %v610, 1
      %v2159 = vperm.slane %v610, 2
      %v2160 = vperm.slane %v610, 3
      %v2161 = vperm.slane %v610, 4
      %v2162 = vperm.slane %v610, 5
      %v2163 = vperm.slane %v610, 6
      %v2164 = vperm.slane %v610, 7
      %v2165 = vperm.slane %v612, 0
      %v2166 = vperm.slane %v612, 1
      %v2167 = vperm.slane %v612, 2
      %v2168 = vperm.slane %v612, 3
      %v2169 = vperm.slane %v612, 4
      %v2170 = vperm.slane %v612, 5
      %v2171 = vperm.slane %v612, 6
      %v2172 = vperm.slane %v612, 7
      %v2173 = vperm.slane %v614, 0
      %v2174 = vperm.slane %v614, 1
      %v2175 = vperm.slane %v614, 2
      %v2176 = vperm.slane %v614, 3
      %v2177 = vperm.slane %v614, 4
      %v2178 = vperm.slane %v614, 5
      %v2179 = vperm.slane %v614, 6
      %v2180 = vperm.slane %v614, 7
      %v2181 = vperm.slane %v616, 0
      %v2182 = vperm.slane %v616, 1
      %v2183 = vperm.slane %v616, 2
      %v2184 = vperm.slane %v616, 3
      %v2185 = vperm.slane %v616, 4
      %v2186 = vperm.slane %v616, 5
      %v2187 = vperm.slane %v616, 6
      %v2188 = vperm.slane %v616, 7
      %v2189 = vperm.slane %v618, 0
      %v2190 = vperm.slane %v618, 1
      %v2191 = vperm.slane %v618, 2
      %v2192 = vperm.slane %v618, 3
      %v2193 = vperm.slane %v618, 4
      %v2194 = vperm.slane %v618, 5
      %v2195 = vperm.slane %v618, 6
      %v2196 = vperm.slane %v618, 7
      %v2197 = vperm.slane %v620, 0
      %v2198 = vperm.slane %v620, 1
      %v2199 = vperm.slane %v620, 2
      %v2200 = vperm.slane %v620, 3
      %v2201 = vperm.slane %v620, 4
      %v2202 = vperm.slane %v620, 5
      %v2203 = vperm.slane %v620, 6
      %v2204 = vperm.slane %v620, 7
      %v2205 = vperm.slane %v622, 0
      %v2206 = vperm.slane %v622, 1
      %v2207 = vperm.slane %v622, 2
      %v2208 = vperm.slane %v622, 3
      %v2209 = vperm.slane %v622, 4
      %v2210 = vperm.slane %v622, 5
      %v2211 = vperm.slane %v622, 6
      %v2212 = vperm.slane %v622, 7
      %v2213 = vperm.slane %v624, 0
      %v2214 = vperm.slane %v624, 1
      %v2215 = vperm.slane %v624, 2
      %v2216 = vperm.slane %v624, 3
      %v2217 = vperm.slane %v624, 4
      %v2218 = vperm.slane %v624, 5
      %v2219 = vperm.slane %v624, 6
      %v2220 = vperm.slane %v624, 7
      %v2221 = vperm.slane %v626, 0
      %v2222 = vperm.slane %v626, 1
      %v2223 = vperm.slane %v626, 2
      %v2224 = vperm.slane %v626, 3
      %v2225 = vperm.slane %v626, 4
      %v2226 = vperm.slane %v626, 5
      %v2227 = vperm.slane %v626, 6
      %v2228 = vperm.slane %v626, 7
      %v2229 = vperm.slane %v628, 0
      %v2230 = vperm.slane %v628, 1
      %v2231 = vperm.slane %v628, 2
      %v2232 = vperm.slane %v628, 3
      %v2233 = vperm.slane %v628, 4
      %v2234 = vperm.slane %v628, 5
      %v2235 = vperm.slane %v628, 6
      %v2236 = vperm.slane %v628, 7
      %v2237 = vperm.slane %v630, 0
      %v2238 = vperm.slane %v630, 1
      %v2239 = vperm.slane %v630, 2
      %v2240 = vperm.slane %v630, 3
      %v2241 = vperm.slane %v630, 4
      %v2242 = vperm.slane %v630, 5
      %v2243 = vperm.slane %v630, 6
      %v2244 = vperm.slane %v630, 7
      %v2245 = vperm.slane %v632, 0
      %v2246 = vperm.slane %v632, 1
      %v2247 = vperm.slane %v632, 2
      %v2248 = vperm.slane %v632, 3
      %v2249 = vperm.slane %v632, 4
      %v2250 = vperm.slane %v632, 5
      %v2251 = vperm.slane %v632, 6
      %v2252 = vperm.slane %v632, 7
      %v2253 = vperm.slane %v634, 0
      %v2254 = vperm.slane %v634, 1
      %v2255 = vperm.slane %v634, 2
      %v2256 = vperm.slane %v634, 3
      %v2257 = vperm.slane %v634, 4
      %v2258 = vperm.slane %v634, 5
      %v2259 = vperm.slane %v634, 6
      %v2260 = vperm.slane %v634, 7
      %v2261 = vperm.slane %v636, 0
      %v2262 = vperm.slane %v636, 1
      %v2263 = vperm.slane %v636, 2
      %v2264 = vperm.slane %v636, 3
      %v2265 = vperm.slane %v636, 4
      %v2266 = vperm.slane %v636, 5
      %v2267 = vperm.slane %v636, 6
      %v2268 = vperm.slane %v636, 7
      %v2269 = vperm.slane %v638, 0
      %v2270 = vperm.slane %v638, 1
      %v2271 = vperm.slane %v638, 2
      %v2272 = vperm.slane %v638, 3
      %v2273 = vperm.slane %v638, 4
      %v2274 = vperm.slane %v638, 5
      %v2275 = vperm.slane %v638, 6
      %v2276 = vperm.slane %v638, 7
      %v2277 = vperm.slane %v640, 0
      %v2278 = vperm.slane %v640, 1
      %v2279 = vperm.slane %v640, 2
      %v2280 = vperm.slane %v640, 3
      %v2281 = vperm.slane %v640, 4
      %v2282 = vperm.slane %v640, 5
      %v2283 = vperm.slane %v640, 6
      %v2284 = vperm.slane %v640, 7
      %v2285 = vperm.slane %v642, 0
      %v2286 = vperm.slane %v642, 1
      %v2287 = vperm.slane %v642, 2
      %v2288 = vperm.slane %v642, 3
      %v2289 = vperm.slane %v642, 4
      %v2290 = vperm.slane %v642, 5
      %v2291 = vperm.slane %v642, 6
      %v2292 = vperm.slane %v642, 7
      %v2293 = vperm.slane %v644, 0
      %v2294 = vperm.slane %v644, 1
      %v2295 = vperm.slane %v644, 2
      %v2296 = vperm.slane %v644, 3
      %v2297 = vperm.slane %v644, 4
      %v2298 = vperm.slane %v644, 5
      %v2299 = vperm.slane %v644, 6
      %v2300 = vperm.slane %v644, 7
      %v2301 = vperm.slane %v646, 0
      %v2302 = vperm.slane %v646, 1
      %v2303 = vperm.slane %v646, 2
      %v2304 = vperm.slane %v646, 3
      %v2305 = vperm.slane %v646, 4
      %v2306 = vperm.slane %v646, 5
      %v2307 = vperm.slane %v646, 6
      %v2308 = vperm.slane %v646, 7
      %v2309 = vperm.slane %v648, 0
      %v2310 = vperm.slane %v648, 1
      %v2311 = vperm.slane %v648, 2
      %v2312 = vperm.slane %v648, 3
      %v2313 = vperm.slane %v648, 4
      %v2314 = vperm.slane %v648, 5
      %v2315 = vperm.slane %v648, 6
      %v2316 = vperm.slane %v648, 7
      %v2317 = vperm.slane %v650, 0
      %v2318 = vperm.slane %v650, 1
      %v2319 = vperm.slane %v650, 2
      %v2320 = vperm.slane %v650, 3
      %v2321 = vperm.slane %v650, 4
      %v2322 = vperm.slane %v650, 5
      %v2323 = vperm.slane %v650, 6
      %v2324 = vperm.slane %v650, 7
      %v2325 = vperm.slane %v652, 0
      %v2326 = vperm.slane %v652, 1
      %v2327 = vperm.slane %v652, 2
      %v2328 = vperm.slane %v652, 3
      %v2329 = vperm.slane %v652, 4
      %v2330 = vperm.slane %v652, 5
      %v2331 = vperm.slane %v652, 6
      %v2332 = vperm.slane %v652, 7
      %v2333 = vperm.slane %v654, 0
      %v2334 = vperm.slane %v654, 1
      %v2335 = vperm.slane %v654, 2
      %v2336 = vperm.slane %v654, 3
      %v2337 = vperm.slane %v654, 4
      %v2338 = vperm.slane %v654, 5
      %v2339 = vperm.slane %v654, 6
      %v2340 = vperm.slane %v654, 7
      %2341 = vst [vmem:[#allocation1] ss:$9 sm:$0xff] %v2085
      %s2342 = scalar_lea.vmem [#allocation1], 1
      %2343 = vst [vmem:[%s2342] ss:$9 sm:$0xff] %v2086
      %s2344 = scalar_lea.vmem [#allocation1], 2
      %2345 = vst [vmem:[%s2344] ss:$9 sm:$0xff] %v2087
      %s2346 = scalar_lea.vmem [#allocation1], 3
      %2347 = vst [vmem:[%s2346] ss:$9 sm:$0xff] %v2088
      %s2348 = scalar_lea.vmem [#allocation1], 4
      %2349 = vst [vmem:[%s2348] ss:$9 sm:$0xff] %v2089
      %s2350 = scalar_lea.vmem [#allocation1], 5
      %2351 = vst [vmem:[%s2350] ss:$9 sm:$0xff] %v2090
      %s2352 = scalar_lea.vmem [#allocation1], 6
      %2353 = vst [vmem:[%s2352] ss:$9 sm:$0xff] %v2091
      %s2354 = scalar_lea.vmem [#allocation1], 7
      %2355 = vst [vmem:[%s2354] ss:$9 sm:$0xff] %v2092
      %v2356 = vld [vmem:[#allocation1] sm:$0xff]
      %2357 = vst [vmem:[#allocation1] ss:$9 sm:$0xff] %v2093
      %2358 = vst [vmem:[%s2342] ss:$9 sm:$0xff] %v2094
      %2359 = vst [vmem:[%s2344] ss:$9 sm:$0xff] %v2095
      %2360 = vst [vmem:[%s2346] ss:$9 sm:$0xff] %v2096
      %2361 = vst [vmem:[%s2348] ss:$9 sm:$0xff] %v2097
      %2362 = vst [vmem:[%s2350] ss:$9 sm:$0xff] %v2098
      %2363 = vst [vmem:[%s2352] ss:$9 sm:$0xff] %v2099
      %2364 = vst [vmem:[%s2354] ss:$9 sm:$0xff] %v2100
      %v2365 = vld [vmem:[#allocation1] sm:$0xff]
      %2366 = vst [vmem:[#allocation1] ss:$9 sm:$0xff] %v2101
      %2367 = vst [vmem:[%s2342] ss:$9 sm:$0xff] %v2102
      %2368 = vst [vmem:[%s2344] ss:$9 sm:$0xff] %v2103
      %2369 = vst [vmem:[%s2346] ss:$9 sm:$0xff] %v2104
      %2370 = vst [vmem:[%s2348] ss:$9 sm:$0xff] %v2105
      %2371 = vst [vmem:[%s2350] ss:$9 sm:$0xff] %v2106
      %2372 = vst [vmem:[%s2352] ss:$9 sm:$0xff] %v2107
      %2373 = vst [vmem:[%s2354] ss:$9 sm:$0xff] %v2108
      %v2374 = vld [vmem:[#allocation1] sm:$0xff]
      %2375 = vst [vmem:[#allocation1] ss:$9 sm:$0xff] %v2109
      %2376 = vst [vmem:[%s2342] ss:$9 sm:$0xff] %v2110
      %2377 = vst [vmem:[%s2344] ss:$9 sm:$0xff] %v2111
      %2378 = vst [vmem:[%s2346] ss:$9 sm:$0xff] %v2112
      %2379 = vst [vmem:[%s2348] ss:$9 sm:$0xff] %v2113
      %2380 = vst [vmem:[%s2350] ss:$9 sm:$0xff] %v2114
      %2381 = vst [vmem:[%s2352] ss:$9 sm:$0xff] %v2115
      %2382 = vst [vmem:[%s2354] ss:$9 sm:$0xff] %v2116
      %v2383 = vld [vmem:[#allocation1] sm:$0xff]
      %2384 = vst [vmem:[#allocation1] ss:$9 sm:$0xff] %v2117
      %2385 = vst [vmem:[%s2342] ss:$9 sm:$0xff] %v2118
      %2386 = vst [vmem:[%s2344] ss:$9 sm:$0xff] %v2119
      %2387 = vst [vmem:[%s2346] ss:$9 sm:$0xff] %v2120
      %2388 = vst [vmem:[%s2348] ss:$9 sm:$0xff] %v2121
      %2389 = vst [vmem:[%s2350] ss:$9 sm:$0xff] %v2122
      %2390 = vst [vmem:[%s2352] ss:$9 sm:$0xff] %v2123
      %2391 = vst [vmem:[%s2354] ss:$9 sm:$0xff] %v2124
      %v2392 = vld [vmem:[#allocation1] sm:$0xff]
      %2393 = vst [vmem:[#allocation1] ss:$9 sm:$0xff] %v2125
      %2394 = vst [vmem:[%s2342] ss:$9 sm:$0xff] %v2126
      %2395 = vst [vmem:[%s2344] ss:$9 sm:$0xff] %v2127
      %2396 = vst [vmem:[%s2346] ss:$9 sm:$0xff] %v2128
      %2397 = vst [vmem:[%s2348] ss:$9 sm:$0xff] %v2129
      %2398 = vst [vmem:[%s2350] ss:$9 sm:$0xff] %v2130
      %2399 = vst [vmem:[%s2352] ss:$9 sm:$0xff] %v2131
      %2400 = vst [vmem:[%s2354] ss:$9 sm:$0xff] %v2132
      %v2401 = vld [vmem:[#allocation1] sm:$0xff]
      %2402 = vst [vmem:[#allocation1] ss:$9 sm:$0xff] %v2133
      %2403 = vst [vmem:[%s2342] ss:$9 sm:$0xff] %v2134
      %2404 = vst [vmem:[%s2344] ss:$9 sm:$0xff] %v2135
      %2405 = vst [vmem:[%s2346] ss:$9 sm:$0xff] %v2136
      %2406 = vst [vmem:[%s2348] ss:$9 sm:$0xff] %v2137
      %2407 = vst [vmem:[%s2350] ss:$9 sm:$0xff] %v2138
      %2408 = vst [vmem:[%s2352] ss:$9 sm:$0xff] %v2139
      %2409 = vst [vmem:[%s2354] ss:$9 sm:$0xff] %v2140
      %v2410 = vld [vmem:[#allocation1] sm:$0xff]
      %2411 = vst [vmem:[#allocation1] ss:$9 sm:$0xff] %v2141
      %2412 = vst [vmem:[%s2342] ss:$9 sm:$0xff] %v2142
      %2413 = vst [vmem:[%s2344] ss:$9 sm:$0xff] %v2143
      %2414 = vst [vmem:[%s2346] ss:$9 sm:$0xff] %v2144
      %2415 = vst [vmem:[%s2348] ss:$9 sm:$0xff] %v2145
      %2416 = vst [vmem:[%s2350] ss:$9 sm:$0xff] %v2146
      %2417 = vst [vmem:[%s2352] ss:$9 sm:$0xff] %v2147
      %2418 = vst [vmem:[%s2354] ss:$9 sm:$0xff] %v2148
      %v2419 = vld [vmem:[#allocation1] sm:$0xff]
      %2420 = vst [vmem:[#allocation1] ss:$9 sm:$0xff] %v2149
      %2421 = vst [vmem:[%s2342] ss:$9 sm:$0xff] %v2150
      %2422 = vst [vmem:[%s2344] ss:$9 sm:$0xff] %v2151
      %2423 = vst [vmem:[%s2346] ss:$9 sm:$0xff] %v2152
      %2424 = vst [vmem:[%s2348] ss:$9 sm:$0xff] %v2153
      %2425 = vst [vmem:[%s2350] ss:$9 sm:$0xff] %v2154
      %2426 = vst [vmem:[%s2352] ss:$9 sm:$0xff] %v2155
      %2427 = vst [vmem:[%s2354] ss:$9 sm:$0xff] %v2156
      %v2428 = vld [vmem:[#allocation1] sm:$0xff]
      %2429 = vst [vmem:[#allocation1] ss:$9 sm:$0xff] %v2157
      %2430 = vst [vmem:[%s2342] ss:$9 sm:$0xff] %v2158
      %2431 = vst [vmem:[%s2344] ss:$9 sm:$0xff] %v2159
      %2432 = vst [vmem:[%s2346] ss:$9 sm:$0xff] %v2160
      %2433 = vst [vmem:[%s2348] ss:$9 sm:$0xff] %v2161
      %2434 = vst [vmem:[%s2350] ss:$9 sm:$0xff] %v2162
      %2435 = vst [vmem:[%s2352] ss:$9 sm:$0xff] %v2163
      %2436 = vst [vmem:[%s2354] ss:$9 sm:$0xff] %v2164
      %v2437 = vld [vmem:[#allocation1] sm:$0xff]
      %2438 = vst [vmem:[#allocation1] ss:$9 sm:$0xff] %v2165
      %2439 = vst [vmem:[%s2342] ss:$9 sm:$0xff] %v2166
      %2440 = vst [vmem:[%s2344] ss:$9 sm:$0xff] %v2167
      %2441 = vst [vmem:[%s2346] ss:$9 sm:$0xff] %v2168
      %2442 = vst [vmem:[%s2348] ss:$9 sm:$0xff] %v2169
      %2443 = vst [vmem:[%s2350] ss:$9 sm:$0xff] %v2170
      %2444 = vst [vmem:[%s2352] ss:$9 sm:$0xff] %v2171
      %2445 = vst [vmem:[%s2354] ss:$9 sm:$0xff] %v2172
      %v2446 = vld [vmem:[#allocation1] sm:$0xff]
      %2447 = vst [vmem:[#allocation1] ss:$9 sm:$0xff] %v2173
      %2448 = vst [vmem:[%s2342] ss:$9 sm:$0xff] %v2174
      %2449 = vst [vmem:[%s2344] ss:$9 sm:$0xff] %v2175
      %2450 = vst [vmem:[%s2346] ss:$9 sm:$0xff] %v2176
      %2451 = vst [vmem:[%s2348] ss:$9 sm:$0xff] %v2177
      %2452 = vst [vmem:[%s2350] ss:$9 sm:$0xff] %v2178
      %2453 = vst [vmem:[%s2352] ss:$9 sm:$0xff] %v2179
      %2454 = vst [vmem:[%s2354] ss:$9 sm:$0xff] %v2180
      %v2455 = vld [vmem:[#allocation1] sm:$0xff]
      %2456 = vst [vmem:[#allocation1] ss:$9 sm:$0xff] %v2181
      %2457 = vst [vmem:[%s2342] ss:$9 sm:$0xff] %v2182
      %2458 = vst [vmem:[%s2344] ss:$9 sm:$0xff] %v2183
      %2459 = vst [vmem:[%s2346] ss:$9 sm:$0xff] %v2184
      %2460 = vst [vmem:[%s2348] ss:$9 sm:$0xff] %v2185
      %2461 = vst [vmem:[%s2350] ss:$9 sm:$0xff] %v2186
      %2462 = vst [vmem:[%s2352] ss:$9 sm:$0xff] %v2187
      %2463 = vst [vmem:[%s2354] ss:$9 sm:$0xff] %v2188
      %v2464 = vld [vmem:[#allocation1] sm:$0xff]
      %2465 = vst [vmem:[#allocation1] ss:$9 sm:$0xff] %v2189
      %2466 = vst [vmem:[%s2342] ss:$9 sm:$0xff] %v2190
      %2467 = vst [vmem:[%s2344] ss:$9 sm:$0xff] %v2191
      %2468 = vst [vmem:[%s2346] ss:$9 sm:$0xff] %v2192
      %2469 = vst [vmem:[%s2348] ss:$9 sm:$0xff] %v2193
      %2470 = vst [vmem:[%s2350] ss:$9 sm:$0xff] %v2194
      %2471 = vst [vmem:[%s2352] ss:$9 sm:$0xff] %v2195
      %2472 = vst [vmem:[%s2354] ss:$9 sm:$0xff] %v2196
      %v2473 = vld [vmem:[#allocation1] sm:$0xff]
      %2474 = vst [vmem:[#allocation1] ss:$9 sm:$0xff] %v2197
      %2475 = vst [vmem:[%s2342] ss:$9 sm:$0xff] %v2198
      %2476 = vst [vmem:[%s2344] ss:$9 sm:$0xff] %v2199
      %2477 = vst [vmem:[%s2346] ss:$9 sm:$0xff] %v2200
      %2478 = vst [vmem:[%s2348] ss:$9 sm:$0xff] %v2201
      %2479 = vst [vmem:[%s2350] ss:$9 sm:$0xff] %v2202
      %2480 = vst [vmem:[%s2352] ss:$9 sm:$0xff] %v2203
      %2481 = vst [vmem:[%s2354] ss:$9 sm:$0xff] %v2204
      %v2482 = vld [vmem:[#allocation1] sm:$0xff]
      %2483 = vst [vmem:[#allocation1] ss:$9 sm:$0xff] %v2205
      %2484 = vst [vmem:[%s2342] ss:$9 sm:$0xff] %v2206
      %2485 = vst [vmem:[%s2344] ss:$9 sm:$0xff] %v2207
      %2486 = vst [vmem:[%s2346] ss:$9 sm:$0xff] %v2208
      %2487 = vst [vmem:[%s2348] ss:$9 sm:$0xff] %v2209
      %2488 = vst [vmem:[%s2350] ss:$9 sm:$0xff] %v2210
      %2489 = vst [vmem:[%s2352] ss:$9 sm:$0xff] %v2211
      %2490 = vst [vmem:[%s2354] ss:$9 sm:$0xff] %v2212
      %v2491 = vld [vmem:[#allocation1] sm:$0xff]
      %2492 = vst [vmem:[#allocation1] ss:$9 sm:$0xff] %v2213
      %2493 = vst [vmem:[%s2342] ss:$9 sm:$0xff] %v2214
      %2494 = vst [vmem:[%s2344] ss:$9 sm:$0xff] %v2215
      %2495 = vst [vmem:[%s2346] ss:$9 sm:$0xff] %v2216
      %2496 = vst [vmem:[%s2348] ss:$9 sm:$0xff] %v2217
      %2497 = vst [vmem:[%s2350] ss:$9 sm:$0xff] %v2218
      %2498 = vst [vmem:[%s2352] ss:$9 sm:$0xff] %v2219
      %2499 = vst [vmem:[%s2354] ss:$9 sm:$0xff] %v2220
      %v2500 = vld [vmem:[#allocation1] sm:$0xff]
      %2501 = vst [vmem:[#allocation1] ss:$9 sm:$0xff] %v2221
      %2502 = vst [vmem:[%s2342] ss:$9 sm:$0xff] %v2222
      %2503 = vst [vmem:[%s2344] ss:$9 sm:$0xff] %v2223
      %2504 = vst [vmem:[%s2346] ss:$9 sm:$0xff] %v2224
      %2505 = vst [vmem:[%s2348] ss:$9 sm:$0xff] %v2225
      %2506 = vst [vmem:[%s2350] ss:$9 sm:$0xff] %v2226
      %2507 = vst [vmem:[%s2352] ss:$9 sm:$0xff] %v2227
      %2508 = vst [vmem:[%s2354] ss:$9 sm:$0xff] %v2228
      %v2509 = vld [vmem:[#allocation1] sm:$0xff]
      %2510 = vst [vmem:[#allocation1] ss:$9 sm:$0xff] %v2229
      %2511 = vst [vmem:[%s2342] ss:$9 sm:$0xff] %v2230
      %2512 = vst [vmem:[%s2344] ss:$9 sm:$0xff] %v2231
      %2513 = vst [vmem:[%s2346] ss:$9 sm:$0xff] %v2232
      %2514 = vst [vmem:[%s2348] ss:$9 sm:$0xff] %v2233
      %2515 = vst [vmem:[%s2350] ss:$9 sm:$0xff] %v2234
      %2516 = vst [vmem:[%s2352] ss:$9 sm:$0xff] %v2235
      %2517 = vst [vmem:[%s2354] ss:$9 sm:$0xff] %v2236
      %v2518 = vld [vmem:[#allocation1] sm:$0xff]
      %2519 = vst [vmem:[#allocation1] ss:$9 sm:$0xff] %v2237
      %2520 = vst [vmem:[%s2342] ss:$9 sm:$0xff] %v2238
      %2521 = vst [vmem:[%s2344] ss:$9 sm:$0xff] %v2239
      %2522 = vst [vmem:[%s2346] ss:$9 sm:$0xff] %v2240
      %2523 = vst [vmem:[%s2348] ss:$9 sm:$0xff] %v2241
      %2524 = vst [vmem:[%s2350] ss:$9 sm:$0xff] %v2242
      %2525 = vst [vmem:[%s2352] ss:$9 sm:$0xff] %v2243
      %2526 = vst [vmem:[%s2354] ss:$9 sm:$0xff] %v2244
      %v2527 = vld [vmem:[#allocation1] sm:$0xff]
      %2528 = vst [vmem:[#allocation1] ss:$9 sm:$0xff] %v2245
      %2529 = vst [vmem:[%s2342] ss:$9 sm:$0xff] %v2246
      %2530 = vst [vmem:[%s2344] ss:$9 sm:$0xff] %v2247
      %2531 = vst [vmem:[%s2346] ss:$9 sm:$0xff] %v2248
      %2532 = vst [vmem:[%s2348] ss:$9 sm:$0xff] %v2249
      %2533 = vst [vmem:[%s2350] ss:$9 sm:$0xff] %v2250
      %2534 = vst [vmem:[%s2352] ss:$9 sm:$0xff] %v2251
      %2535 = vst [vmem:[%s2354] ss:$9 sm:$0xff] %v2252
      %v2536 = vld [vmem:[#allocation1] sm:$0xff]
      %2537 = vst [vmem:[#allocation1] ss:$9 sm:$0xff] %v2253
      %2538 = vst [vmem:[%s2342] ss:$9 sm:$0xff] %v2254
      %2539 = vst [vmem:[%s2344] ss:$9 sm:$0xff] %v2255
      %2540 = vst [vmem:[%s2346] ss:$9 sm:$0xff] %v2256
      %2541 = vst [vmem:[%s2348] ss:$9 sm:$0xff] %v2257
      %2542 = vst [vmem:[%s2350] ss:$9 sm:$0xff] %v2258
      %2543 = vst [vmem:[%s2352] ss:$9 sm:$0xff] %v2259
      %2544 = vst [vmem:[%s2354] ss:$9 sm:$0xff] %v2260
      %v2545 = vld [vmem:[#allocation1] sm:$0xff]
      %2546 = vst [vmem:[#allocation1] ss:$9 sm:$0xff] %v2261
      %2547 = vst [vmem:[%s2342] ss:$9 sm:$0xff] %v2262
      %2548 = vst [vmem:[%s2344] ss:$9 sm:$0xff] %v2263
      %2549 = vst [vmem:[%s2346] ss:$9 sm:$0xff] %v2264
      %2550 = vst [vmem:[%s2348] ss:$9 sm:$0xff] %v2265
      %2551 = vst [vmem:[%s2350] ss:$9 sm:$0xff] %v2266
      %2552 = vst [vmem:[%s2352] ss:$9 sm:$0xff] %v2267
      %2553 = vst [vmem:[%s2354] ss:$9 sm:$0xff] %v2268
      %v2554 = vld [vmem:[#allocation1] sm:$0xff]
      %2555 = vst [vmem:[#allocation1] ss:$9 sm:$0xff] %v2269
      %2556 = vst [vmem:[%s2342] ss:$9 sm:$0xff] %v2270
      %2557 = vst [vmem:[%s2344] ss:$9 sm:$0xff] %v2271
      %2558 = vst [vmem:[%s2346] ss:$9 sm:$0xff] %v2272
      %2559 = vst [vmem:[%s2348] ss:$9 sm:$0xff] %v2273
      %2560 = vst [vmem:[%s2350] ss:$9 sm:$0xff] %v2274
      %2561 = vst [vmem:[%s2352] ss:$9 sm:$0xff] %v2275
      %2562 = vst [vmem:[%s2354] ss:$9 sm:$0xff] %v2276
      %v2563 = vld [vmem:[#allocation1] sm:$0xff]
      %2564 = vst [vmem:[#allocation1] ss:$9 sm:$0xff] %v2277
      %2565 = vst [vmem:[%s2342] ss:$9 sm:$0xff] %v2278
      %2566 = vst [vmem:[%s2344] ss:$9 sm:$0xff] %v2279
      %2567 = vst [vmem:[%s2346] ss:$9 sm:$0xff] %v2280
      %2568 = vst [vmem:[%s2348] ss:$9 sm:$0xff] %v2281
      %2569 = vst [vmem:[%s2350] ss:$9 sm:$0xff] %v2282
      %2570 = vst [vmem:[%s2352] ss:$9 sm:$0xff] %v2283
      %2571 = vst [vmem:[%s2354] ss:$9 sm:$0xff] %v2284
      %v2572 = vld [vmem:[#allocation1] sm:$0xff]
      %2573 = vst [vmem:[#allocation1] ss:$9 sm:$0xff] %v2285
      %2574 = vst [vmem:[%s2342] ss:$9 sm:$0xff] %v2286
      %2575 = vst [vmem:[%s2344] ss:$9 sm:$0xff] %v2287
      %2576 = vst [vmem:[%s2346] ss:$9 sm:$0xff] %v2288
      %2577 = vst [vmem:[%s2348] ss:$9 sm:$0xff] %v2289
      %2578 = vst [vmem:[%s2350] ss:$9 sm:$0xff] %v2290
      %2579 = vst [vmem:[%s2352] ss:$9 sm:$0xff] %v2291
      %2580 = vst [vmem:[%s2354] ss:$9 sm:$0xff] %v2292
      %v2581 = vld [vmem:[#allocation1] sm:$0xff]
      %2582 = vst [vmem:[#allocation1] ss:$9 sm:$0xff] %v2293
      %2583 = vst [vmem:[%s2342] ss:$9 sm:$0xff] %v2294
      %2584 = vst [vmem:[%s2344] ss:$9 sm:$0xff] %v2295
      %2585 = vst [vmem:[%s2346] ss:$9 sm:$0xff] %v2296
      %2586 = vst [vmem:[%s2348] ss:$9 sm:$0xff] %v2297
      %2587 = vst [vmem:[%s2350] ss:$9 sm:$0xff] %v2298
      %2588 = vst [vmem:[%s2352] ss:$9 sm:$0xff] %v2299
      %2589 = vst [vmem:[%s2354] ss:$9 sm:$0xff] %v2300
      %v2590 = vld [vmem:[#allocation1] sm:$0xff]
      %2591 = vst [vmem:[#allocation1] ss:$9 sm:$0xff] %v2301
      %2592 = vst [vmem:[%s2342] ss:$9 sm:$0xff] %v2302
      %2593 = vst [vmem:[%s2344] ss:$9 sm:$0xff] %v2303
      %2594 = vst [vmem:[%s2346] ss:$9 sm:$0xff] %v2304
      %2595 = vst [vmem:[%s2348] ss:$9 sm:$0xff] %v2305
      %2596 = vst [vmem:[%s2350] ss:$9 sm:$0xff] %v2306
      %2597 = vst [vmem:[%s2352] ss:$9 sm:$0xff] %v2307
      %2598 = vst [vmem:[%s2354] ss:$9 sm:$0xff] %v2308
      %v2599 = vld [vmem:[#allocation1] sm:$0xff]
      %2600 = vst [vmem:[#allocation1] ss:$9 sm:$0xff] %v2309
      %2601 = vst [vmem:[%s2342] ss:$9 sm:$0xff] %v2310
      %2602 = vst [vmem:[%s2344] ss:$9 sm:$0xff] %v2311
      %2603 = vst [vmem:[%s2346] ss:$9 sm:$0xff] %v2312
      %2604 = vst [vmem:[%s2348] ss:$9 sm:$0xff] %v2313
      %2605 = vst [vmem:[%s2350] ss:$9 sm:$0xff] %v2314
      %2606 = vst [vmem:[%s2352] ss:$9 sm:$0xff] %v2315
      %2607 = vst [vmem:[%s2354] ss:$9 sm:$0xff] %v2316
      %v2608 = vld [vmem:[#allocation1] sm:$0xff]
      %2609 = vst [vmem:[#allocation1] ss:$9 sm:$0xff] %v2317
      %2610 = vst [vmem:[%s2342] ss:$9 sm:$0xff] %v2318
      %2611 = vst [vmem:[%s2344] ss:$9 sm:$0xff] %v2319
      %2612 = vst [vmem:[%s2346] ss:$9 sm:$0xff] %v2320
      %2613 = vst [vmem:[%s2348] ss:$9 sm:$0xff] %v2321
      %2614 = vst [vmem:[%s2350] ss:$9 sm:$0xff] %v2322
      %2615 = vst [vmem:[%s2352] ss:$9 sm:$0xff] %v2323
      %2616 = vst [vmem:[%s2354] ss:$9 sm:$0xff] %v2324
      %v2617 = vld [vmem:[#allocation1] sm:$0xff]
      %2618 = vst [vmem:[#allocation1] ss:$9 sm:$0xff] %v2325
      %2619 = vst [vmem:[%s2342] ss:$9 sm:$0xff] %v2326
      %2620 = vst [vmem:[%s2344] ss:$9 sm:$0xff] %v2327
      %2621 = vst [vmem:[%s2346] ss:$9 sm:$0xff] %v2328
      %2622 = vst [vmem:[%s2348] ss:$9 sm:$0xff] %v2329
      %2623 = vst [vmem:[%s2350] ss:$9 sm:$0xff] %v2330
      %2624 = vst [vmem:[%s2352] ss:$9 sm:$0xff] %v2331
      %2625 = vst [vmem:[%s2354] ss:$9 sm:$0xff] %v2332
      %v2626 = vld [vmem:[#allocation1] sm:$0xff]
      %2627 = vst [vmem:[#allocation1] ss:$9 sm:$0xff] %v2333
      %2628 = vst [vmem:[%s2342] ss:$9 sm:$0xff] %v2334
      %2629 = vst [vmem:[%s2344] ss:$9 sm:$0xff] %v2335
      %2630 = vst [vmem:[%s2346] ss:$9 sm:$0xff] %v2336
      %2631 = vst [vmem:[%s2348] ss:$9 sm:$0xff] %v2337
      %2632 = vst [vmem:[%s2350] ss:$9 sm:$0xff] %v2338
      %2633 = vst [vmem:[%s2352] ss:$9 sm:$0xff] %v2339
      %2634 = vst [vmem:[%s2354] ss:$9 sm:$0xff] %v2340
      %v2635 = vld [vmem:[#allocation1] sm:$0xff]
      %2636 = vset.pattern.permute.xlu0 0
      %2637 = vperm.xlu0 %2636, %v2356
      %v2638 = vpop.permute.xlu0 %2637
      %2639 = vset.pattern.permute.xlu0 0
      %2640 = vperm.xlu0 %2639, %v2365
      %v2641 = vpop.permute.xlu0 %2640
      %2642 = vset.pattern.permute.xlu0 0
      %2643 = vperm.xlu0 %2642, %v2374
      %v2644 = vpop.permute.xlu0 %2643
      %2645 = vset.pattern.permute.xlu0 0
      %2646 = vperm.xlu0 %2645, %v2383
      %v2647 = vpop.permute.xlu0 %2646
      %2648 = vset.pattern.permute.xlu0 0
      %2649 = vperm.xlu0 %2648, %v2392
      %v2650 = vpop.permute.xlu0 %2649
      %2651 = vset.pattern.permute.xlu0 0
      %2652 = vperm.xlu0 %2651, %v2401
      %v2653 = vpop.permute.xlu0 %2652
      %2654 = vset.pattern.permute.xlu0 0
      %2655 = vperm.xlu0 %2654, %v2410
      %v2656 = vpop.permute.xlu0 %2655
      %2657 = vset.pattern.permute.xlu0 0
      %2658 = vperm.xlu0 %2657, %v2419
      %v2659 = vpop.permute.xlu0 %2658
      %2660 = vset.pattern.permute.xlu0 0
      %2661 = vperm.xlu0 %2660, %v2428
      %v2662 = vpop.permute.xlu0 %2661
      %2663 = vset.pattern.permute.xlu0 0
      %2664 = vperm.xlu0 %2663, %v2437
      %v2665 = vpop.permute.xlu0 %2664
      %2666 = vset.pattern.permute.xlu0 0
      %2667 = vperm.xlu0 %2666, %v2446
      %v2668 = vpop.permute.xlu0 %2667
      %2669 = vset.pattern.permute.xlu0 0
      %2670 = vperm.xlu0 %2669, %v2455
      %v2671 = vpop.permute.xlu0 %2670
      %2672 = vset.pattern.permute.xlu0 0
      %2673 = vperm.xlu0 %2672, %v2464
      %v2674 = vpop.permute.xlu0 %2673
      %2675 = vset.pattern.permute.xlu0 0
      %2676 = vperm.xlu0 %2675, %v2473
      %v2677 = vpop.permute.xlu0 %2676
      %2678 = vset.pattern.permute.xlu0 0
      %2679 = vperm.xlu0 %2678, %v2482
      %v2680 = vpop.permute.xlu0 %2679
      %2681 = vset.pattern.permute.xlu0 0
      %2682 = vperm.xlu0 %2681, %v2491
      %v2683 = vpop.permute.xlu0 %2682
      %2684 = vset.pattern.permute.xlu0 0
      %2685 = vperm.xlu0 %2684, %v2500
      %v2686 = vpop.permute.xlu0 %2685
      %2687 = vset.pattern.permute.xlu0 0
      %2688 = vperm.xlu0 %2687, %v2509
      %v2689 = vpop.permute.xlu0 %2688
      %2690 = vset.pattern.permute.xlu0 0
      %2691 = vperm.xlu0 %2690, %v2518
      %v2692 = vpop.permute.xlu0 %2691
      %2693 = vset.pattern.permute.xlu0 0
      %2694 = vperm.xlu0 %2693, %v2527
      %v2695 = vpop.permute.xlu0 %2694
      %2696 = vset.pattern.permute.xlu0 0
      %2697 = vperm.xlu0 %2696, %v2536
      %v2698 = vpop.permute.xlu0 %2697
      %2699 = vset.pattern.permute.xlu0 0
      %2700 = vperm.xlu0 %2699, %v2545
      %v2701 = vpop.permute.xlu0 %2700
      %2702 = vset.pattern.permute.xlu0 0
      %2703 = vperm.xlu0 %2702, %v2554
      %v2704 = vpop.permute.xlu0 %2703
      %2705 = vset.pattern.permute.xlu0 0
      %2706 = vperm.xlu0 %2705, %v2563
      %v2707 = vpop.permute.xlu0 %2706
      %2708 = vset.pattern.permute.xlu0 0
      %2709 = vperm.xlu0 %2708, %v2572
      %v2710 = vpop.permute.xlu0 %2709
      %2711 = vset.pattern.permute.xlu0 0
      %2712 = vperm.xlu0 %2711, %v2581
      %v2713 = vpop.permute.xlu0 %2712
      %2714 = vset.pattern.permute.xlu0 0
      %2715 = vperm.xlu0 %2714, %v2590
      %v2716 = vpop.permute.xlu0 %2715
      %2717 = vset.pattern.permute.xlu0 0
      %2718 = vperm.xlu0 %2717, %v2599
      %v2719 = vpop.permute.xlu0 %2718
      %2720 = vset.pattern.permute.xlu0 0
      %2721 = vperm.xlu0 %2720, %v2608
      %v2722 = vpop.permute.xlu0 %2721
      %2723 = vset.pattern.permute.xlu0 0
      %2724 = vperm.xlu0 %2723, %v2617
      %v2725 = vpop.permute.xlu0 %2724
      %2726 = vset.pattern.permute.xlu0 0
      %2727 = vperm.xlu0 %2726, %v2626
      %v2728 = vpop.permute.xlu0 %2727
      %2729 = vset.pattern.permute.xlu0 0
      %2730 = vperm.xlu0 %2729, %v2635
      %v2731 = vpop.permute.xlu0 %2730
      %v2732 = vperm.slane %v2638, %v280
      %v2733 = vadd.s32 %v280, 4294967288
      %v2734 = vperm.slane %v2641, %v2733
      %vm2735 = vcmask 130112
      %v2736 = vsel %vm2735, %v2734, %v2732
      %v2737 = vadd.s32 %v280, 4294967280
      %v2738 = vperm.slane %v2644, %v2737
      %vm2739 = vcmask 195712
      %v2740 = vsel %vm2739, %v2738, %v2736
      %v2741 = vadd.s32 %v280, 4294967272
      %v2742 = vperm.slane %v2647, %v2741
      %vm2743 = vcmask 261312
      %v2744 = vsel %vm2743, %v2742, %v2740
      %v2745 = vadd.s32 %v280, 4294967264
      %v2746 = vperm.slane %v2650, %v2745
      %vm2747 = vcmask 326912
      %v2748 = vsel %vm2747, %v2746, %v2744
      %v2749 = vadd.s32 %v280, 4294967256
      %v2750 = vperm.slane %v2653, %v2749
      %vm2751 = vcmask 392512
      %v2752 = vsel %vm2751, %v2750, %v2748
      %v2753 = vadd.s32 %v280, 4294967248
      %v2754 = vperm.slane %v2656, %v2753
      %vm2755 = vcmask 458112
      %v2756 = vsel %vm2755, %v2754, %v2752
      %v2757 = vadd.s32 %v280, 4294967240
      %v2758 = vperm.slane %v2659, %v2757
      %vm2759 = vcmask 523712
      %v2760 = vsel %vm2759, %v2758, %v2756
      %v2761 = vadd.s32 %v280, 4294967232
      %v2762 = vperm.slane %v2662, %v2761
      %vm2763 = vcmask 589312
      %v2764 = vsel %vm2763, %v2762, %v2760
      %v2765 = vadd.s32 %v280, 4294967224
      %v2766 = vperm.slane %v2665, %v2765
      %vm2767 = vcmask 654912
      %v2768 = vsel %vm2767, %v2766, %v2764
      %v2769 = vadd.s32 %v280, 4294967216
      %v2770 = vperm.slane %v2668, %v2769
      %vm2771 = vcmask 720512
      %v2772 = vsel %vm2771, %v2770, %v2768
      %v2773 = vadd.s32 %v280, 4294967208
      %v2774 = vperm.slane %v2671, %v2773
      %vm2775 = vcmask 786112
      %v2776 = vsel %vm2775, %v2774, %v2772
      %v2777 = vadd.s32 %v280, 4294967200
      %v2778 = vperm.slane %v2674, %v2777
      %vm2779 = vcmask 851712
      %v2780 = vsel %vm2779, %v2778, %v2776
      %v2781 = vadd.s32 %v280, 4294967192
      %v2782 = vperm.slane %v2677, %v2781
      %vm2783 = vcmask 917312
      %v2784 = vsel %vm2783, %v2782, %v2780
      %v2785 = vadd.s32 %v280, 4294967184
      %v2786 = vperm.slane %v2680, %v2785
      %vm2787 = vcmask 982912
      %v2788 = vsel %vm2787, %v2786, %v2784
      %v2789 = vadd.s32 %v280, 4294967176
      %v2790 = vperm.slane %v2683, %v2789
      %vm2791 = vcmask 1048512
      %v2792 = vsel %vm2791, %v2790, %v2788
      %v2793 = vperm.slane %v2686, %v280
      %v2794 = vperm.slane %v2689, %v2733
      %v2795 = vsel %vm2735, %v2794, %v2793
      %v2796 = vperm.slane %v2692, %v2737
      %v2797 = vsel %vm2739, %v2796, %v2795
      %v2798 = vperm.slane %v2695, %v2741
      %v2799 = vsel %vm2743, %v2798, %v2797
      %v2800 = vperm.slane %v2698, %v2745
      %v2801 = vsel %vm2747, %v2800, %v2799
      %v2802 = vperm.slane %v2701, %v2749
      %v2803 = vsel %vm2751, %v2802, %v2801
      %v2804 = vperm.slane %v2704, %v2753
      %v2805 = vsel %vm2755, %v2804, %v2803
      %v2806 = vperm.slane %v2707, %v2757
      %v2807 = vsel %vm2759, %v2806, %v2805
      %v2808 = vperm.slane %v2710, %v2761
      %v2809 = vsel %vm2763, %v2808, %v2807
      %v2810 = vperm.slane %v2713, %v2765
      %v2811 = vsel %vm2767, %v2810, %v2809
      %v2812 = vperm.slane %v2716, %v2769
      %v2813 = vsel %vm2771, %v2812, %v2811
      %v2814 = vperm.slane %v2719, %v2773
      %v2815 = vsel %vm2775, %v2814, %v2813
      %v2816 = vperm.slane %v2722, %v2777
      %v2817 = vsel %vm2779, %v2816, %v2815
      %v2818 = vperm.slane %v2725, %v2781
      %v2819 = vsel %vm2783, %v2818, %v2817
      %v2820 = vperm.slane %v2728, %v2785
      %v2821 = vsel %vm2787, %v2820, %v2819
      %v2822 = vperm.slane %v2731, %v2789
      %v2823 = vsel %vm2791, %v2822, %v2821
      %v2824 = vrot.slane %v2823, 7
      %vm2825 = vcmask 1040384
      %v2826 = vsel %vm2825, %v2792, %v2824
      %v2827 = vlaneseq
      %vm2828 = vcmp.ge.s32.totalorder %v2827, 0
      %vm2829 = vcmp.lt.s32.totalorder %v2827, 256
      %vm2830 = vmand %vm2828, %vm2829
      %2831 = vst.msk [vmem:[%s243] sm:$0x3] %vm2830, %v2826
      %v2832 = vsub.f32 %v1927, %v247
      %v2833 = vsub.f32 %v1931, %v248
      %v2834 = vsub.f32 %v1935, %v249
      %v2835 = vsub.f32 %v1939, %v250
      %v2836 = vsub.f32 %v1943, %v251
      %v2837 = vsub.f32 %v1947, %v252
      %v2838 = vsub.f32 %v1951, %v253
      %v2839 = vsub.f32 %v1955, %v254
      %v2840 = vsub.f32 %v1959, %v255
      %v2841 = vsub.f32 %v1963, %v256
      %v2842 = vsub.f32 %v1967, %v257
      %v2843 = vsub.f32 %v1971, %v258
      %v2844 = vsub.f32 %v1975, %v259
      %v2845 = vsub.f32 %v1979, %v260
      %v2846 = vsub.f32 %v1983, %v261
      %v2847 = vsub.f32 %v1987, %v262
      %v2848 = vsub.f32 %v1991, %v263
      %v2849 = vsub.f32 %v1995, %v264
      %v2850 = vsub.f32 %v1999, %v265
      %v2851 = vsub.f32 %v2003, %v266
      %v2852 = vsub.f32 %v2007, %v267
      %v2853 = vsub.f32 %v2011, %v268
      %v2854 = vsub.f32 %v2015, %v269
      %v2855 = vsub.f32 %v2019, %v270
      %v2856 = vsub.f32 %v2023, %v271
      %v2857 = vsub.f32 %v2027, %v272
      %v2858 = vsub.f32 %v2031, %v273
      %v2859 = vsub.f32 %v2035, %v274
      %v2860 = vsub.f32 %v2039, %v275
      %v2861 = vsub.f32 %v2043, %v276
      %v2862 = vsub.f32 %v2047, %v277
      %v2863 = vsub.f32 %v2051, %v278
      %v2864 = vlaneseq
      %v2865 = vshrl.u32 %v2864, 7
      %v2866 = vadd.s32 %v2865, 8
      %v2867 = vadd.s32 %v2865, 16
      %v2868 = vadd.s32 %v2865, 24
      %v2869 = vadd.s32 %v2865, 32
      %v2870 = vadd.s32 %v2865, 40
      %v2871 = vadd.s32 %v2865, 48
      %v2872 = vadd.s32 %v2865, 56
      %v2873 = vadd.s32 %v2865, 64
      %v2874 = vadd.s32 %v2865, 72
      %v2875 = vadd.s32 %v2865, 80
      %v2876 = vadd.s32 %v2865, 88
      %v2877 = vadd.s32 %v2865, 96
      %v2878 = vadd.s32 %v2865, 104
      %v2879 = vadd.s32 %v2865, 112
      %v2880 = vadd.s32 %v2865, 120
      %v2881 = vadd.s32 %v2865, 128
      %v2882 = vadd.s32 %v2865, 136
      %v2883 = vadd.s32 %v2865, 144
      %v2884 = vadd.s32 %v2865, 152
      %v2885 = vadd.s32 %v2865, 160
      %v2886 = vadd.s32 %v2865, 168
      %v2887 = vadd.s32 %v2865, 176
      %v2888 = vadd.s32 %v2865, 184
      %v2889 = vadd.s32 %v2865, 192
      %v2890 = vadd.s32 %v2865, 200
      %v2891 = vadd.s32 %v2865, 208
      %v2892 = vadd.s32 %v2865, 216
      %v2893 = vadd.s32 %v2865, 224
      %v2894 = vadd.s32 %v2865, 232
      %v2895 = vadd.s32 %v2865, 240
      %v2896 = vadd.s32 %v2865, 248
      %s2897 = smul.u32 %s17, 256
      %v2898 = vstv %s2897
      %v2899 = vadd.s32 %v2865, %v2898
      %v2900 = vadd.s32 %v2866, %v2898
      %v2901 = vadd.s32 %v2867, %v2898
      %v2902 = vadd.s32 %v2868, %v2898
      %v2903 = vadd.s32 %v2869, %v2898
      %v2904 = vadd.s32 %v2870, %v2898
      %v2905 = vadd.s32 %v2871, %v2898
      %v2906 = vadd.s32 %v2872, %v2898
      %v2907 = vadd.s32 %v2873, %v2898
      %v2908 = vadd.s32 %v2874, %v2898
      %v2909 = vadd.s32 %v2875, %v2898
      %v2910 = vadd.s32 %v2876, %v2898
      %v2911 = vadd.s32 %v2877, %v2898
      %v2912 = vadd.s32 %v2878, %v2898
      %v2913 = vadd.s32 %v2879, %v2898
      %v2914 = vadd.s32 %v2880, %v2898
      %v2915 = vadd.s32 %v2881, %v2898
      %v2916 = vadd.s32 %v2882, %v2898
      %v2917 = vadd.s32 %v2883, %v2898
      %v2918 = vadd.s32 %v2884, %v2898
      %v2919 = vadd.s32 %v2885, %v2898
      %v2920 = vadd.s32 %v2886, %v2898
      %v2921 = vadd.s32 %v2887, %v2898
      %v2922 = vadd.s32 %v2888, %v2898
      %v2923 = vadd.s32 %v2889, %v2898
      %v2924 = vadd.s32 %v2890, %v2898
      %v2925 = vadd.s32 %v2891, %v2898
      %v2926 = vadd.s32 %v2892, %v2898
      %v2927 = vadd.s32 %v2893, %v2898
      %v2928 = vadd.s32 %v2894, %v2898
      %v2929 = vadd.s32 %v2895, %v2898
      %v2930 = vadd.s32 %v2896, %v2898
      %vm2931 = vcmp.lt.s32.totalorder %v2899, 400
      %vm2932 = vcmp.lt.s32.totalorder %v2900, 400
      %vm2933 = vcmp.lt.s32.totalorder %v2901, 400
      %vm2934 = vcmp.lt.s32.totalorder %v2902, 400
      %vm2935 = vcmp.lt.s32.totalorder %v2903, 400
      %vm2936 = vcmp.lt.s32.totalorder %v2904, 400
      %vm2937 = vcmp.lt.s32.totalorder %v2905, 400
      %vm2938 = vcmp.lt.s32.totalorder %v2906, 400
      %vm2939 = vcmp.lt.s32.totalorder %v2907, 400
      %vm2940 = vcmp.lt.s32.totalorder %v2908, 400
      %vm2941 = vcmp.lt.s32.totalorder %v2909, 400
      %vm2942 = vcmp.lt.s32.totalorder %v2910, 400
      %vm2943 = vcmp.lt.s32.totalorder %v2911, 400
      %vm2944 = vcmp.lt.s32.totalorder %v2912, 400
      %vm2945 = vcmp.lt.s32.totalorder %v2913, 400
      %vm2946 = vcmp.lt.s32.totalorder %v2914, 400
      %vm2947 = vcmp.lt.s32.totalorder %v2915, 400
      %vm2948 = vcmp.lt.s32.totalorder %v2916, 400
      %vm2949 = vcmp.lt.s32.totalorder %v2917, 400
      %vm2950 = vcmp.lt.s32.totalorder %v2918, 400
      %vm2951 = vcmp.lt.s32.totalorder %v2919, 400
      %vm2952 = vcmp.lt.s32.totalorder %v2920, 400
      %vm2953 = vcmp.lt.s32.totalorder %v2921, 400
      %vm2954 = vcmp.lt.s32.totalorder %v2922, 400
      %vm2955 = vcmp.lt.s32.totalorder %v2923, 400
      %vm2956 = vcmp.lt.s32.totalorder %v2924, 400
      %vm2957 = vcmp.lt.s32.totalorder %v2925, 400
      %vm2958 = vcmp.lt.s32.totalorder %v2926, 400
      %vm2959 = vcmp.lt.s32.totalorder %v2927, 400
      %vm2960 = vcmp.lt.s32.totalorder %v2928, 400
      %vm2961 = vcmp.lt.s32.totalorder %v2929, 400
      %vm2962 = vcmp.lt.s32.totalorder %v2930, 400
      %v2963 = vsel %vm2931, %v2832, 0.0
      %v2964 = vsel %vm2932, %v2833, 0.0
      %v2965 = vsel %vm2933, %v2834, 0.0
      %v2966 = vsel %vm2934, %v2835, 0.0
      %v2967 = vsel %vm2935, %v2836, 0.0
      %v2968 = vsel %vm2936, %v2837, 0.0
      %v2969 = vsel %vm2937, %v2838, 0.0
      %v2970 = vsel %vm2938, %v2839, 0.0
      %v2971 = vsel %vm2939, %v2840, 0.0
      %v2972 = vsel %vm2940, %v2841, 0.0
      %v2973 = vsel %vm2941, %v2842, 0.0
      %v2974 = vsel %vm2942, %v2843, 0.0
      %v2975 = vsel %vm2943, %v2844, 0.0
      %v2976 = vsel %vm2944, %v2845, 0.0
      %v2977 = vsel %vm2945, %v2846, 0.0
      %v2978 = vsel %vm2946, %v2847, 0.0
      %v2979 = vsel %vm2947, %v2848, 0.0
      %v2980 = vsel %vm2948, %v2849, 0.0
      %v2981 = vsel %vm2949, %v2850, 0.0
      %v2982 = vsel %vm2950, %v2851, 0.0
      %v2983 = vsel %vm2951, %v2852, 0.0
      %v2984 = vsel %vm2952, %v2853, 0.0
      %v2985 = vsel %vm2953, %v2854, 0.0
      %v2986 = vsel %vm2954, %v2855, 0.0
      %v2987 = vsel %vm2955, %v2856, 0.0
      %v2988 = vsel %vm2956, %v2857, 0.0
      %v2989 = vsel %vm2957, %v2858, 0.0
      %v2990 = vsel %vm2958, %v2859, 0.0
      %v2991 = vsel %vm2959, %v2860, 0.0
      %v2992 = vsel %vm2960, %v2861, 0.0
      %v2993 = vsel %vm2961, %v2862, 0.0
      %v2994 = vsel %vm2962, %v2863, 0.0
      %v2995 = vmul.f32 %v2963, %v2963
      %v2996 = vmul.f32 %v2964, %v2964
      %v2997 = vmul.f32 %v2965, %v2965
      %v2998 = vmul.f32 %v2966, %v2966
      %v2999 = vmul.f32 %v2967, %v2967
      %v3000 = vmul.f32 %v2968, %v2968
      %v3001 = vmul.f32 %v2969, %v2969
      %v3002 = vmul.f32 %v2970, %v2970
      %v3003 = vmul.f32 %v2971, %v2971
      %v3004 = vmul.f32 %v2972, %v2972
      %v3005 = vmul.f32 %v2973, %v2973
      %v3006 = vmul.f32 %v2974, %v2974
      %v3007 = vmul.f32 %v2975, %v2975
      %v3008 = vmul.f32 %v2976, %v2976
      %v3009 = vmul.f32 %v2977, %v2977
      %v3010 = vmul.f32 %v2978, %v2978
      %v3011 = vmul.f32 %v2979, %v2979
      %v3012 = vmul.f32 %v2980, %v2980
      %v3013 = vmul.f32 %v2981, %v2981
      %v3014 = vmul.f32 %v2982, %v2982
      %v3015 = vmul.f32 %v2983, %v2983
      %v3016 = vmul.f32 %v2984, %v2984
      %v3017 = vmul.f32 %v2985, %v2985
      %v3018 = vmul.f32 %v2986, %v2986
      %v3019 = vmul.f32 %v2987, %v2987
      %v3020 = vmul.f32 %v2988, %v2988
      %v3021 = vmul.f32 %v2989, %v2989
      %v3022 = vmul.f32 %v2990, %v2990
      %v3023 = vmul.f32 %v2991, %v2991
      %v3024 = vmul.f32 %v2992, %v2992
      %v3025 = vmul.f32 %v2993, %v2993
      %v3026 = vmul.f32 %v2994, %v2994
      %v3027 = vsel %vm297, %v2995, 0.0
      %v3028 = vsel %vm297, %v2996, 0.0
      %v3029 = vadd.f32 %v3027, %v3028
      %v3030 = vsel %vm297, %v2997, 0.0
      %v3031 = vadd.f32 %v3029, %v3030
      %v3032 = vsel %vm297, %v2998, 0.0
      %v3033 = vadd.f32 %v3031, %v3032
      %v3034 = vsel %vm297, %v2999, 0.0
      %v3035 = vadd.f32 %v3033, %v3034
      %v3036 = vsel %vm297, %v3000, 0.0
      %v3037 = vadd.f32 %v3035, %v3036
      %v3038 = vsel %vm297, %v3001, 0.0
      %v3039 = vadd.f32 %v3037, %v3038
      %v3040 = vsel %vm297, %v3002, 0.0
      %v3041 = vadd.f32 %v3039, %v3040
      %v3042 = vsel %vm297, %v3003, 0.0
      %v3043 = vadd.f32 %v3041, %v3042
      %v3044 = vsel %vm297, %v3004, 0.0
      %v3045 = vadd.f32 %v3043, %v3044
      %v3046 = vsel %vm297, %v3005, 0.0
      %v3047 = vadd.f32 %v3045, %v3046
      %v3048 = vsel %vm297, %v3006, 0.0
      %v3049 = vadd.f32 %v3047, %v3048
      %v3050 = vsel %vm297, %v3007, 0.0
      %v3051 = vadd.f32 %v3049, %v3050
      %v3052 = vsel %vm297, %v3008, 0.0
      %v3053 = vadd.f32 %v3051, %v3052
      %v3054 = vsel %vm297, %v3009, 0.0
      %v3055 = vadd.f32 %v3053, %v3054
      %v3056 = vsel %vm297, %v3010, 0.0
      %v3057 = vadd.f32 %v3055, %v3056
      %v3058 = vsel %vm297, %v3011, 0.0
      %v3059 = vadd.f32 %v3057, %v3058
      %v3060 = vsel %vm297, %v3012, 0.0
      %v3061 = vadd.f32 %v3059, %v3060
      %v3062 = vsel %vm297, %v3013, 0.0
      %v3063 = vadd.f32 %v3061, %v3062
      %v3064 = vsel %vm297, %v3014, 0.0
      %v3065 = vadd.f32 %v3063, %v3064
      %v3066 = vsel %vm297, %v3015, 0.0
      %v3067 = vadd.f32 %v3065, %v3066
      %v3068 = vsel %vm297, %v3016, 0.0
      %v3069 = vadd.f32 %v3067, %v3068
      %v3070 = vsel %vm297, %v3017, 0.0
      %v3071 = vadd.f32 %v3069, %v3070
      %v3072 = vsel %vm297, %v3018, 0.0
      %v3073 = vadd.f32 %v3071, %v3072
      %v3074 = vsel %vm297, %v3019, 0.0
      %v3075 = vadd.f32 %v3073, %v3074
      %v3076 = vsel %vm297, %v3020, 0.0
      %v3077 = vadd.f32 %v3075, %v3076
      %v3078 = vsel %vm297, %v3021, 0.0
      %v3079 = vadd.f32 %v3077, %v3078
      %v3080 = vsel %vm297, %v3022, 0.0
      %v3081 = vadd.f32 %v3079, %v3080
      %v3082 = vsel %vm297, %v3023, 0.0
      %v3083 = vadd.f32 %v3081, %v3082
      %v3084 = vsel %vm297, %v3024, 0.0
      %v3085 = vadd.f32 %v3083, %v3084
      %v3086 = vsel %vm297, %v3025, 0.0
      %v3087 = vadd.f32 %v3085, %v3086
      %v3088 = vsel %vm297, %v3026, 0.0
      %v3089 = vadd.f32 %v3087, %v3088
      %3090 = vadd.xlane.f32.xlu0 %v3089
      %v3091 = vpop.xlane.xlu0 %3090
      %v3092 = vrot.slane %v3091, 4
      %v3093 = vadd.f32 %v3091, %v3092
      %v3094 = vrot.slane %v3093, 2
      %v3095 = vadd.f32 %v3093, %v3094
      %v3096 = vrot.slane %v3095, 1
      %v3097 = vadd.f32 %v3095, %v3096
      %s3098 = vtos %v3097
      %v3099 = vstv %s3098
      %vm3100 = vcmask 0
      %3101 = vst.msk [vmem:[%s246] sm:$0x1] %vm3100, %v3099
      %s3102 = smul.u32 32, %s17
      %p3103 = scmp.lt.s32.totalorder %s3102, 63
      %s3104 = scalar_select %p3103, %s3102, 63
      %s3105 = smul.addr %s3104, 8
      %s3106 = scalar_lea.vmem %s3, %s3105
      %p3107 = scmp.lt.s32.totalorder %s17, 1
      %s3108 = scalar_select %p3107, %s17, 1
      %s3109 = smul.addr %s3108, 2
      %s3110 = scalar_lea.vmem %s4, %s3109
      %p3111 = scmp.lt.s32.totalorder %s17, 1
      %s3112 = scalar_select %p3111, %s17, 1
      %s3113 = scalar_lea.vmem %s5, %s3112
      // Predicated region
      $region33: #{vq_forward.1} parent=31 // pred_check
        %p3114 = pneg %p103
      $region34: #{vq_forward.1} parent=31 // pred_check_branch
        %3116 = sbr.rel (%p3114) target = $region36
      $region35: #{vq_forward.1} parent=31 // pred_region
        %s3117 = smul.u32 32, %s17
      $region36: #{vq_forward.1} parent=31 // pred_fallthru
        _
      // Predicated region
      $region37: #{vq_forward.1} parent=31 // pred_check
        %p3118 = pneg %p129
      $region38: #{vq_forward.1} parent=31 // pred_check_branch
        %3120 = sbr.rel (%p3118) target = $region40
      $region39: #{vq_forward.1} parent=31 // pred_region
        _
      $region40: #{vq_forward.1} parent=31 // pred_fallthru
        _
      // Predicated region
      $region41: #{vq_forward.1} parent=31 // pred_check
        %p3121 = pneg %p155
      $region42: #{vq_forward.1} parent=31 // pred_check_branch
        %3123 = sbr.rel (%p3121) target = $region44
      $region43: #{vq_forward.1} parent=31 // pred_region
        _
      $region44: #{vq_forward.1} parent=31 // pred_fallthru
        _
    $region32: #{vq_forward.1} parent=5 // pred_fallthru
      _
    %p3124 = scmp.le.s32.totalorder 2, %s12
    // Predicated region
    $region45: #{vq_forward.1} parent=5 // pred_check
      %p3125 = pneg %p3124
    $region46: #{vq_forward.1} parent=5 // pred_check_branch
      %3127 = sbr.rel (%p3125) target = $region48
    $region47: #{vq_forward.1} parent=5 // pred_region
      %s3128 = ssub.s32 %s12, 2
      // Predicated region
      $region49: #{vq_forward.1} parent=47 // pred_check
        %p3129 = pneg %p109
      $region50: #{vq_forward.1} parent=47 // pred_check_branch
        %3131 = sbr.rel (%p3129) target = $region52
      $region51: #{vq_forward.1} parent=47 // pred_region
        %s3132 = smul.u32 32, %s18
        %p3133 = scmp.lt.s32.totalorder %s3132, 63
        %s3134 = scalar_select %p3133, %s3132, 63
        %s3135 = smul.addr %s3134, 8
        %s3136 = scalar_lea.vmem %s3, %s3135
      $region52: #{vq_forward.1} parent=47 // pred_fallthru
        _
      // Predicated region
      $region53: #{vq_forward.1} parent=47 // pred_check
        %p3137 = pneg %p135
      $region54: #{vq_forward.1} parent=47 // pred_check_branch
        %3139 = sbr.rel (%p3137) target = $region56
      $region55: #{vq_forward.1} parent=47 // pred_region
        %p3140 = scmp.lt.s32.totalorder %s18, 1
        %s3141 = scalar_select %p3140, %s18, 1
        %s3142 = smul.addr %s3141, 2
        %s3143 = scalar_lea.vmem %s4, %s3142
      $region56: #{vq_forward.1} parent=47 // pred_fallthru
        _
      // Predicated region
      $region57: #{vq_forward.1} parent=47 // pred_check
        %p3144 = pneg %p161
      $region58: #{vq_forward.1} parent=47 // pred_check_branch
        %3146 = sbr.rel (%p3144) target = $region60
      $region59: #{vq_forward.1} parent=47 // pred_region
        %p3147 = scmp.lt.s32.totalorder %s18, 1
        %s3148 = scalar_select %p3147, %s18, 1
        %s3149 = scalar_lea.vmem %s5, %s3148
      $region60: #{vq_forward.1} parent=47 // pred_fallthru
        _
    $region48: #{vq_forward.1} parent=5 // pred_fallthru
      _
  $region6: #{vq_forward.1} parent=0 // loop_footer
    %s16 = sadd.s32 1, %s12
  $region7: #{vq_forward.1} parent=0 // loop_footer_branch
    %11 = sbr.rel target = $region3
  $region8: #{vq_forward.1} parent=0 // loop_exit
    _

</llo_original>
